<compile_context>
chip_gen: v7x
topology: tpu7x:2x2x1
jax: 0.10.0
libtpu: 0.0.40
codegen_flags: <defaults>
</compile_context>

<pallas_src>
import jax
import jax.numpy as jnp
from jax.experimental import pallas as pl
from jax.experimental.pallas import tpu as pltpu

INPUT_SIZE = 784        # fixed by x.view(-1, 784) in the torch module
NUM_CLASS = 10          # fixed by onehot(c, 10) in the torch module
CLASS_PAD = 128         # one-hot padded to one full lane group
LATENT_DIM = 16
HID1, HID2 = 256, 512


def _round_up(x, m):
    return (x + m - 1) // m * m


def cvae_kernel(x_ref, oh_ref, eps_ref,
                w1x_ref, w1c_ref, b1_ref,
                w2_ref, b2_ref,
                wms_ref, bms_ref,
                wd1z_ref, wd1c_ref, bd1_ref,
                wd2_ref, bd2_ref,
                recon_ref, mu_ref, logvar_ref):
    oh = oh_ref[...]                               # [TB, 128] bf16 one-hot(c)
    x = x_ref[...].astype(jnp.bfloat16)            # [TB, 784] cast in-kernel (VPU has slack)

    # ---- encoder backbone: Linear(784+10, 256) + LeakyReLU(0.01) ----
    # onehot(c) @ W1c done on the MXU against the VMEM-resident class table.
    h1 = (jnp.dot(x, w1x_ref[...], preferred_element_type=jnp.float32)
          + jnp.dot(oh, w1c_ref[...], preferred_element_type=jnp.float32)
          + b1_ref[...])
    h1 = jnp.maximum(h1, 0.01 * h1)                # LeakyReLU, 1 VALU op

    # ---- Linear(256, 512) + ReLU ----
    h2 = jnp.dot(h1.astype(jnp.bfloat16), w2_ref[...],
                 preferred_element_type=jnp.float32) + b2_ref[...]
    h2 = jnp.maximum(h2, 0.0)

    # ---- fused mu/logvar heads: one [512, 32] matmul, static lane slices ----
    ml = jnp.dot(h2.astype(jnp.bfloat16), wms_ref[...],
                 preferred_element_type=jnp.float32) + bms_ref[...]
    mu = ml[:, :LATENT_DIM]
    logvar = ml[:, LATENT_DIM:]

    # ---- reparametrize: z = eps * exp(0.5 * logvar) + mu ----
    z = eps_ref[...] * jnp.exp(0.5 * logvar) + mu

    # ---- decoder: Linear(16+10, 512) + ReLU (class part via onehot @ Wd1c) ----
    d1 = (jnp.dot(z.astype(jnp.bfloat16), wd1z_ref[...],
                  preferred_element_type=jnp.float32)
          + jnp.dot(oh, wd1c_ref[...], preferred_element_type=jnp.float32)
          + bd1_ref[...])
    d1 = jnp.maximum(d1, 0.0)

    # ---- Linear(512, 784) + Sigmoid ----
    d2 = jnp.dot(d1.astype(jnp.bfloat16), wd2_ref[...],
                 preferred_element_type=jnp.float32) + bd2_ref[...]
    # exact sigmoid via a single EUP tanh; result stays in [0, 1]
    recon_ref[...] = (0.5 + 0.5 * jnp.tanh(0.5 * d2)).astype(recon_ref.dtype)
    mu_ref[...] = mu
    logvar_ref[...] = logvar


def _linear_params(key, fan_in, fan_out):
    """PyTorch nn.Linear default init: U(-1/sqrt(fan_in), 1/sqrt(fan_in))."""
    kw, kb = jax.random.split(key)
    bound = 1.0 / jnp.sqrt(jnp.asarray(fan_in, jnp.float32))
    w = jax.random.uniform(kw, (fan_in, fan_out), jnp.float32, -bound, bound)
    b = jax.random.uniform(kb, (1, fan_out), jnp.float32, -bound, bound)
    return w, b


def init_params(key):
    keys = jax.random.split(key, 6)
    w1, b1 = _linear_params(keys[0], INPUT_SIZE + NUM_CLASS, HID1)
    w2, b2 = _linear_params(keys[1], HID1, HID2)
    wm, bm = _linear_params(keys[2], HID2, LATENT_DIM)
    ws, bs = _linear_params(keys[3], HID2, LATENT_DIM)
    wd1, bd1 = _linear_params(keys[4], LATENT_DIM + NUM_CLASS, HID2)
    wd2, bd2 = _linear_params(keys[5], HID2, INPUT_SIZE)
    return dict(
        w1x=w1[:INPUT_SIZE], w1c=w1[INPUT_SIZE:], b1=b1,
        w2=w2, b2=b2,
        wm=wm, bm=bm,
        ws=ws, bs=bs,
        wd1z=wd1[:LATENT_DIM], wd1c=wd1[LATENT_DIM:], bd1=bd1,
        wd2=wd2, bd2=bd2,
    )


def cvae_forward(x, c, eps, params, *, tb=512):
    """Forward pass: returns (reconstruction[bf16], mu[f32], logvar[f32]).

    Numerics: bf16 weights / bf16 matmul inputs with f32 accumulation; matches the
    f32 PyTorch reference to ~1e-2 relative tolerance.
    """
    B = x.shape[0]
    x_flat = x.reshape(B, INPUT_SIZE).astype(jnp.float32)     # x.view(-1, 784)

    # one-hot(c) built directly at 128 lanes (classes 0..9 live in the first 10 cols)
    oh = jax.nn.one_hot(c, CLASS_PAD, dtype=jnp.bfloat16)     # [B, 128]

    # Batch tiling: 8-aligned, and always >= 2 grid steps so "parallel" can shard
    # the batch across v7x's two TensorCores (harmless on single-TC v5e/v6e).
    TB = min(tb, max(8, _round_up(B, 16) // 2))
    B_pad = max(_round_up(B, TB), 2 * TB)
    pad_b = B_pad - B

    eps_p = eps.astype(jnp.float32)
    if pad_b:
        x_flat = jnp.pad(x_flat, ((0, pad_b), (0, 0)))
        oh = jnp.pad(oh, ((0, pad_b), (0, 0)))
        eps_p = jnp.pad(eps_p, ((0, pad_b), (0, 0)))

    # bf16 weights for the MXU; biases stay f32. Class tables padded to 128 rows.
    w1x = params['w1x'].astype(jnp.bfloat16)                                   # [784, 256]
    w1c = jnp.pad(params['w1c'],
                  ((0, CLASS_PAD - NUM_CLASS), (0, 0))).astype(jnp.bfloat16)   # [128, 256]
    b1 = params['b1']
    w2 = params['w2'].astype(jnp.bfloat16)                                     # [256, 512]
    b2 = params['b2']
    wms = jnp.concatenate([params['wm'], params['ws']], axis=1).astype(jnp.bfloat16)  # [512, 32]
    bms = jnp.concatenate([params['bm'], params['bs']], axis=1)                       # [1, 32]
    wd1z = params['wd1z'].astype(jnp.bfloat16)                                 # [16, 512]
    wd1c = jnp.pad(params['wd1c'],
                   ((0, CLASS_PAD - NUM_CLASS), (0, 0))).astype(jnp.bfloat16)  # [128, 512]
    bd1 = params['bd1']
    wd2 = params['wd2'].astype(jnp.bfloat16)                                   # [512, 784]
    bd2 = params['bd2']                                                        # [1, 784]

    def bspec(n):                       # batch-tiled activation
        return pl.BlockSpec((TB, n), lambda i: (i, 0))

    def cspec(shape):                   # VMEM-resident constant (never re-fetched)
        return pl.BlockSpec(shape, lambda i: (0, 0))

    recon_p, mu_p, logvar_p = pl.pallas_call(
        cvae_kernel,
        out_shape=(jax.ShapeDtypeStruct((B_pad, INPUT_SIZE), jnp.bfloat16),
                   jax.ShapeDtypeStruct((B_pad, LATENT_DIM), jnp.float32),
                   jax.ShapeDtypeStruct((B_pad, LATENT_DIM), jnp.float32)),
        grid=(B_pad // TB,),
        in_specs=[
            bspec(INPUT_SIZE),               # x (f32, cast to bf16 in-kernel)
            bspec(CLASS_PAD),                # one-hot(c), bf16
            bspec(LATENT_DIM),               # eps
            cspec((INPUT_SIZE, HID1)),       # w1x
            cspec((CLASS_PAD, HID1)),        # w1c (class table, encoder)
            cspec((1, HID1)),                # b1
            cspec((HID1, HID2)),             # w2
            cspec((1, HID2)),                # b2
            cspec((HID2, 2 * LATENT_DIM)),   # fused mu/logvar weight
            cspec((1, 2 * LATENT_DIM)),      # fused mu/logvar bias
            cspec((LATENT_DIM, HID2)),       # wd1z
            cspec((CLASS_PAD, HID2)),        # wd1c (class table, decoder)
            cspec((1, HID2)),                # bd1
            cspec((HID2, INPUT_SIZE)),       # wd2
            cspec((1, INPUT_SIZE)),          # bd2
        ],
        out_specs=(bspec(INPUT_SIZE), bspec(LATENT_DIM), bspec(LATENT_DIM)),
        compiler_params=pltpu.CompilerParams(
            dimension_semantics=("parallel",),
            vmem_limit_bytes=48 << 20),
    )(x_flat, oh, eps_p, w1x, w1c, b1, w2, b2, wms, bms,
      wd1z, wd1c, bd1, wd2, bd2)

    # row slice is a no-op whenever B is already a multiple of the batch tile
    return recon_p[:B], mu_p[:B], logvar_p[:B]


if __name__ == "__main__":
    key = jax.random.PRNGKey(0)
    k_param, k_x, k_c, k_eps = jax.random.split(key, 4)

    B = 8
    params = init_params(k_param)

    # example inputs: images in [0, 1], integer class labels, gaussian noise
    x = jax.random.uniform(k_x, (B, 1, 28, 28), jnp.float32, 0.0, 1.0)
    c = jax.random.randint(k_c, (B,), 0, NUM_CLASS, dtype=jnp.int32)
    eps = jax.random.normal(k_eps, (B, LATENT_DIM), jnp.float32)  # torch.randn_like(std)

    forward = jax.jit(cvae_forward)
    recon, mu, logvar = forward(x, c, eps, params)
    jax.block_until_ready((recon, mu, logvar))

    assert recon.shape == (B, INPUT_SIZE) and recon.dtype == jnp.bfloat16
    assert mu.shape == (B, LATENT_DIM)
    assert logvar.shape == (B, LATENT_DIM)
    recon_f32 = recon.astype(jnp.float32)
    # tanh-based sigmoid is exact: output is guaranteed to lie in [0, 1]
    assert bool(jnp.all((recon_f32 >= 0.0) & (recon_f32 <= 1.0)))
    assert bool(jnp.all(jnp.isfinite(recon_f32)))
    assert bool(jnp.all(jnp.isfinite(mu))) and bool(jnp.all(jnp.isfinite(logvar)))

    print("KERNEL_OK")
</pallas_src>

<mosaic_0001>
module attributes {stable_mosaic.version = 11 : i64} {
  func.func @cvae_kernel(%arg0: i32, %arg1: memref<8x784xf32, #tpu.memory_space<vmem>>, %arg2: memref<8x128xbf16, #tpu.memory_space<vmem>>, %arg3: memref<8x16xf32, #tpu.memory_space<vmem>>, %arg4: memref<784x256xbf16, #tpu.memory_space<vmem>>, %arg5: memref<128x256xbf16, #tpu.memory_space<vmem>>, %arg6: memref<1x256xf32, #tpu.memory_space<vmem>>, %arg7: memref<256x512xbf16, #tpu.memory_space<vmem>>, %arg8: memref<1x512xf32, #tpu.memory_space<vmem>>, %arg9: memref<512x32xbf16, #tpu.memory_space<vmem>>, %arg10: memref<1x32xf32, #tpu.memory_space<vmem>>, %arg11: memref<16x512xbf16, #tpu.memory_space<vmem>>, %arg12: memref<128x512xbf16, #tpu.memory_space<vmem>>, %arg13: memref<1x512xf32, #tpu.memory_space<vmem>>, %arg14: memref<512x784xbf16, #tpu.memory_space<vmem>>, %arg15: memref<1x784xf32, #tpu.memory_space<vmem>>, %arg16: memref<8x784xbf16, #tpu.memory_space<vmem>>, %arg17: memref<8x16xf32, #tpu.memory_space<vmem>>, %arg18: memref<8x16xf32, #tpu.memory_space<vmem>>) attributes {dimension_semantics = [#tpu.dimension_semantics<parallel>], iteration_bounds = array<i64: 2>, scalar_prefetch = 0 : i64, scratch_operands = 0 : i64, tpu.core_type = #tpu.core_type<tc>, window_params = [{transform_indices = @transform_0, window_bounds = array<i64: 8, 784>}, {transform_indices = @transform_1, window_bounds = array<i64: 8, 128>}, {transform_indices = @transform_2, window_bounds = array<i64: 8, 16>}, {pipeline_mode = #tpu.pipeline_mode<synchronous>, transform_indices = @transform_3, window_bounds = array<i64: 784, 256>}, {pipeline_mode = #tpu.pipeline_mode<synchronous>, transform_indices = @transform_4, window_bounds = array<i64: 128, 256>}, {pipeline_mode = #tpu.pipeline_mode<synchronous>, transform_indices = @transform_5, window_bounds = array<i64: 1, 256>}, {pipeline_mode = #tpu.pipeline_mode<synchronous>, transform_indices = @transform_6, window_bounds = array<i64: 256, 512>}, {pipeline_mode = #tpu.pipeline_mode<synchronous>, transform_indices = @transform_7, window_bounds = array<i64: 1, 512>}, {pipeline_mode = #tpu.pipeline_mode<synchronous>, transform_indices = @transform_8, window_bounds = array<i64: 512, 32>}, {pipeline_mode = #tpu.pipeline_mode<synchronous>, transform_indices = @transform_9, window_bounds = array<i64: 1, 32>}, {pipeline_mode = #tpu.pipeline_mode<synchronous>, transform_indices = @transform_10, window_bounds = array<i64: 16, 512>}, {pipeline_mode = #tpu.pipeline_mode<synchronous>, transform_indices = @transform_11, window_bounds = array<i64: 128, 512>}, {pipeline_mode = #tpu.pipeline_mode<synchronous>, transform_indices = @transform_12, window_bounds = array<i64: 1, 512>}, {pipeline_mode = #tpu.pipeline_mode<synchronous>, transform_indices = @transform_13, window_bounds = array<i64: 512, 784>}, {pipeline_mode = #tpu.pipeline_mode<synchronous>, transform_indices = @transform_14, window_bounds = array<i64: 1, 784>}, {transform_indices = @transform_15, window_bounds = array<i64: 8, 784>}, {transform_indices = @transform_16, window_bounds = array<i64: 8, 16>}, {transform_indices = @transform_17, window_bounds = array<i64: 8, 16>}]} {
    %c0 = arith.constant 0 : index
    %c0_0 = arith.constant 0 : index
    %0 = vector.load %arg2[%c0, %c0_0] : memref<8x128xbf16, #tpu.memory_space<vmem>>, vector<8x128xbf16>
    %c0_1 = arith.constant 0 : index
    %c0_2 = arith.constant 0 : index
    %1 = vector.load %arg1[%c0_1, %c0_2] : memref<8x784xf32, #tpu.memory_space<vmem>>, vector<8x784xf32>
    %2 = arith.truncf %1 : vector<8x784xf32> to vector<8x784xbf16>
    %c0_3 = arith.constant 0 : index
    %c0_4 = arith.constant 0 : index
    %3 = vector.load %arg4[%c0_3, %c0_4] : memref<784x256xbf16, #tpu.memory_space<vmem>>, vector<784x256xbf16>
    %cst = arith.constant dense<0.000000e+00> : vector<8x256xf32>
    %4 = tpu.matmul %2, %3, %cst {dimension_numbers = #tpu.dot_dimension_numbers<[1], [0], [0], [1], [0, 0, 1, 1], [], []>} : vector<8x784xbf16>, vector<784x256xbf16>, vector<8x256xf32> -> vector<8x256xf32>
    %c0_5 = arith.constant 0 : index
    %c0_6 = arith.constant 0 : index
    %5 = vector.load %arg5[%c0_5, %c0_6] : memref<128x256xbf16, #tpu.memory_space<vmem>>, vector<128x256xbf16>
    %cst_7 = arith.constant dense<0.000000e+00> : vector<8x256xf32>
    %6 = tpu.matmul %0, %5, %cst_7 {dimension_numbers = #tpu.dot_dimension_numbers<[1], [0], [0], [1], [0, 0, 1, 1], [], []>} : vector<8x128xbf16>, vector<128x256xbf16>, vector<8x256xf32> -> vector<8x256xf32>
    %7 = arith.addf %4, %6 : vector<8x256xf32>
    %c0_8 = arith.constant 0 : index
    %c0_9 = arith.constant 0 : index
    %8 = vector.load %arg6[%c0_8, %c0_9] : memref<1x256xf32, #tpu.memory_space<vmem>>, vector<1x256xf32>
    %9 = vector.broadcast %8 : vector<1x256xf32> to vector<8x256xf32>
    %10 = arith.addf %7, %9 : vector<8x256xf32>
    %cst_10 = arith.constant 0.00999999977 : f32
    %11 = vector.broadcast %cst_10 : f32 to vector<8x256xf32>
    %12 = arith.mulf %11, %10 : vector<8x256xf32>
    %13 = arith.maximumf %10, %12 : vector<8x256xf32>
    %14 = arith.truncf %13 : vector<8x256xf32> to vector<8x256xbf16>
    %c0_11 = arith.constant 0 : index
    %c0_12 = arith.constant 0 : index
    %15 = vector.load %arg7[%c0_11, %c0_12] : memref<256x512xbf16, #tpu.memory_space<vmem>>, vector<256x512xbf16>
    %cst_13 = arith.constant dense<0.000000e+00> : vector<8x512xf32>
    %16 = tpu.matmul %14, %15, %cst_13 {dimension_numbers = #tpu.dot_dimension_numbers<[1], [0], [0], [1], [0, 0, 1, 1], [], []>} : vector<8x256xbf16>, vector<256x512xbf16>, vector<8x512xf32> -> vector<8x512xf32>
    %c0_14 = arith.constant 0 : index
    %c0_15 = arith.constant 0 : index
    %17 = vector.load %arg8[%c0_14, %c0_15] : memref<1x512xf32, #tpu.memory_space<vmem>>, vector<1x512xf32>
    %18 = vector.broadcast %17 : vector<1x512xf32> to vector<8x512xf32>
    %19 = arith.addf %16, %18 : vector<8x512xf32>
    %cst_16 = arith.constant 0.000000e+00 : f32
    %20 = vector.broadcast %cst_16 : f32 to vector<8x512xf32>
    %21 = arith.maximumf %19, %20 : vector<8x512xf32>
    %22 = arith.truncf %21 : vector<8x512xf32> to vector<8x512xbf16>
    %c0_17 = arith.constant 0 : index
    %c0_18 = arith.constant 0 : index
    %23 = vector.load %arg9[%c0_17, %c0_18] : memref<512x32xbf16, #tpu.memory_space<vmem>>, vector<512x32xbf16>
    %cst_19 = arith.constant dense<0.000000e+00> : vector<8x32xf32>
    %24 = tpu.matmul %22, %23, %cst_19 {dimension_numbers = #tpu.dot_dimension_numbers<[1], [0], [0], [1], [0, 0, 1, 1], [], []>} : vector<8x512xbf16>, vector<512x32xbf16>, vector<8x32xf32> -> vector<8x32xf32>
    %c0_20 = arith.constant 0 : index
    %c0_21 = arith.constant 0 : index
    %25 = vector.load %arg10[%c0_20, %c0_21] : memref<1x32xf32, #tpu.memory_space<vmem>>, vector<1x32xf32>
    %26 = vector.broadcast %25 : vector<1x32xf32> to vector<8x32xf32>
    %27 = arith.addf %24, %26 : vector<8x32xf32>
    %28 = vector.extract_strided_slice %27 {offsets = [0, 0], sizes = [8, 16], strides = [1, 1]} : vector<8x32xf32> to vector<8x16xf32>
    %29 = vector.extract_strided_slice %27 {offsets = [0, 16], sizes = [8, 16], strides = [1, 1]} : vector<8x32xf32> to vector<8x16xf32>
    %c0_22 = arith.constant 0 : index
    %c0_23 = arith.constant 0 : index
    %30 = vector.load %arg3[%c0_22, %c0_23] : memref<8x16xf32, #tpu.memory_space<vmem>>, vector<8x16xf32>
    %cst_24 = arith.constant 5.000000e-01 : f32
    %31 = vector.broadcast %cst_24 : f32 to vector<8x16xf32>
    %32 = arith.mulf %31, %29 : vector<8x16xf32>
    %33 = math.exp %32 : vector<8x16xf32>
    %34 = arith.mulf %30, %33 : vector<8x16xf32>
    %35 = arith.addf %34, %28 : vector<8x16xf32>
    %36 = arith.truncf %35 : vector<8x16xf32> to vector<8x16xbf16>
    %c0_25 = arith.constant 0 : index
    %c0_26 = arith.constant 0 : index
    %37 = vector.load %arg11[%c0_25, %c0_26] : memref<16x512xbf16, #tpu.memory_space<vmem>>, vector<16x512xbf16>
    %cst_27 = arith.constant dense<0.000000e+00> : vector<8x512xf32>
    %38 = tpu.matmul %36, %37, %cst_27 {dimension_numbers = #tpu.dot_dimension_numbers<[1], [0], [0], [1], [0, 0, 1, 1], [], []>} : vector<8x16xbf16>, vector<16x512xbf16>, vector<8x512xf32> -> vector<8x512xf32>
    %c0_28 = arith.constant 0 : index
    %c0_29 = arith.constant 0 : index
    %39 = vector.load %arg12[%c0_28, %c0_29] : memref<128x512xbf16, #tpu.memory_space<vmem>>, vector<128x512xbf16>
    %cst_30 = arith.constant dense<0.000000e+00> : vector<8x512xf32>
    %40 = tpu.matmul %0, %39, %cst_30 {dimension_numbers = #tpu.dot_dimension_numbers<[1], [0], [0], [1], [0, 0, 1, 1], [], []>} : vector<8x128xbf16>, vector<128x512xbf16>, vector<8x512xf32> -> vector<8x512xf32>
    %41 = arith.addf %38, %40 : vector<8x512xf32>
    %c0_31 = arith.constant 0 : index
    %c0_32 = arith.constant 0 : index
    %42 = vector.load %arg13[%c0_31, %c0_32] : memref<1x512xf32, #tpu.memory_space<vmem>>, vector<1x512xf32>
    %43 = vector.broadcast %42 : vector<1x512xf32> to vector<8x512xf32>
    %44 = arith.addf %41, %43 : vector<8x512xf32>
    %cst_33 = arith.constant 0.000000e+00 : f32
    %45 = vector.broadcast %cst_33 : f32 to vector<8x512xf32>
    %46 = arith.maximumf %44, %45 : vector<8x512xf32>
    %47 = arith.truncf %46 : vector<8x512xf32> to vector<8x512xbf16>
    %c0_34 = arith.constant 0 : index
    %c0_35 = arith.constant 0 : index
    %48 = vector.load %arg14[%c0_34, %c0_35] : memref<512x784xbf16, #tpu.memory_space<vmem>>, vector<512x784xbf16>
    %cst_36 = arith.constant dense<0.000000e+00> : vector<8x784xf32>
    %49 = tpu.matmul %47, %48, %cst_36 {dimension_numbers = #tpu.dot_dimension_numbers<[1], [0], [0], [1], [0, 0, 1, 1], [], []>} : vector<8x512xbf16>, vector<512x784xbf16>, vector<8x784xf32> -> vector<8x784xf32>
    %c0_37 = arith.constant 0 : index
    %c0_38 = arith.constant 0 : index
    %50 = vector.load %arg15[%c0_37, %c0_38] : memref<1x784xf32, #tpu.memory_space<vmem>>, vector<1x784xf32>
    %51 = vector.broadcast %50 : vector<1x784xf32> to vector<8x784xf32>
    %52 = arith.addf %49, %51 : vector<8x784xf32>
    %cst_39 = arith.constant 5.000000e-01 : f32
    %53 = vector.broadcast %cst_39 : f32 to vector<8x784xf32>
    %54 = arith.mulf %53, %52 : vector<8x784xf32>
    %55 = math.tanh %54 : vector<8x784xf32>
    %cst_40 = arith.constant 5.000000e-01 : f32
    %56 = vector.broadcast %cst_40 : f32 to vector<8x784xf32>
    %57 = arith.mulf %56, %55 : vector<8x784xf32>
    %cst_41 = arith.constant 5.000000e-01 : f32
    %58 = vector.broadcast %cst_41 : f32 to vector<8x784xf32>
    %59 = arith.addf %58, %57 : vector<8x784xf32>
    %60 = arith.truncf %59 : vector<8x784xf32> to vector<8x784xbf16>
    %c0_42 = arith.constant 0 : index
    %c0_43 = arith.constant 0 : index
    %61 = vector.load %arg16[%c0_42, %c0_43] : memref<8x784xbf16, #tpu.memory_space<vmem>>, vector<8x784xbf16>
    tpu.vector_store %arg16[%c0_42, %c0_43], %60 {strides = array<i32>} : memref<8x784xbf16, #tpu.memory_space<vmem>>, vector<8x784xbf16>,
    %c0_44 = arith.constant 0 : index
    %c0_45 = arith.constant 0 : index
    %62 = vector.load %arg17[%c0_44, %c0_45] : memref<8x16xf32, #tpu.memory_space<vmem>>, vector<8x16xf32>
    tpu.vector_store %arg17[%c0_44, %c0_45], %28 {strides = array<i32>} : memref<8x16xf32, #tpu.memory_space<vmem>>, vector<8x16xf32>,
    %c0_46 = arith.constant 0 : index
    %c0_47 = arith.constant 0 : index
    %63 = vector.load %arg18[%c0_46, %c0_47] : memref<8x16xf32, #tpu.memory_space<vmem>>, vector<8x16xf32>
    tpu.vector_store %arg18[%c0_46, %c0_47], %29 {strides = array<i32>} : memref<8x16xf32, #tpu.memory_space<vmem>>, vector<8x16xf32>,
    return
  }
  func.func @transform_0(%arg0: i32) -> (i32, i32) {
    %c0_i32 = arith.constant 0 : i32
    %c0_i32_0 = arith.constant 0 : i32
    return %arg0, %c0_i32 : i32, i32
  }
  func.func @transform_1(%arg0: i32) -> (i32, i32) {
    %c0_i32 = arith.constant 0 : i32
    %c0_i32_0 = arith.constant 0 : i32
    return %arg0, %c0_i32 : i32, i32
  }
  func.func @transform_2(%arg0: i32) -> (i32, i32) {
    %c0_i32 = arith.constant 0 : i32
    %c0_i32_0 = arith.constant 0 : i32
    return %arg0, %c0_i32 : i32, i32
  }
  func.func @transform_3(%arg0: i32) -> (i32, i32) {
    %c0_i32 = arith.constant 0 : i32
    %c0_i32_0 = arith.constant 0 : i32
    %c0_i32_1 = arith.constant 0 : i32
    return %c0_i32, %c0_i32_0 : i32, i32
  }
  func.func @transform_4(%arg0: i32) -> (i32, i32) {
    %c0_i32 = arith.constant 0 : i32
    %c0_i32_0 = arith.constant 0 : i32
    %c0_i32_1 = arith.constant 0 : i32
    return %c0_i32, %c0_i32_0 : i32, i32
  }
  func.func @transform_5(%arg0: i32) -> (i32, i32) {
    %c0_i32 = arith.constant 0 : i32
    %c0_i32_0 = arith.constant 0 : i32
    %c0_i32_1 = arith.constant 0 : i32
    return %c0_i32, %c0_i32_0 : i32, i32
  }
  func.func @transform_6(%arg0: i32) -> (i32, i32) {
    %c0_i32 = arith.constant 0 : i32
    %c0_i32_0 = arith.constant 0 : i32
    %c0_i32_1 = arith.constant 0 : i32
    return %c0_i32, %c0_i32_0 : i32, i32
  }
  func.func @transform_7(%arg0: i32) -> (i32, i32) {
    %c0_i32 = arith.constant 0 : i32
    %c0_i32_0 = arith.constant 0 : i32
    %c0_i32_1 = arith.constant 0 : i32
    return %c0_i32, %c0_i32_0 : i32, i32
  }
  func.func @transform_8(%arg0: i32) -> (i32, i32) {
    %c0_i32 = arith.constant 0 : i32
    %c0_i32_0 = arith.constant 0 : i32
    %c0_i32_1 = arith.constant 0 : i32
    return %c0_i32, %c0_i32_0 : i32, i32
  }
  func.func @transform_9(%arg0: i32) -> (i32, i32) {
    %c0_i32 = arith.constant 0 : i32
    %c0_i32_0 = arith.constant 0 : i32
    %c0_i32_1 = arith.constant 0 : i32
    return %c0_i32, %c0_i32_0 : i32, i32
  }
  func.func @transform_10(%arg0: i32) -> (i32, i32) {
    %c0_i32 = arith.constant 0 : i32
    %c0_i32_0 = arith.constant 0 : i32
    %c0_i32_1 = arith.constant 0 : i32
    return %c0_i32, %c0_i32_0 : i32, i32
  }
  func.func @transform_11(%arg0: i32) -> (i32, i32) {
    %c0_i32 = arith.constant 0 : i32
    %c0_i32_0 = arith.constant 0 : i32
    %c0_i32_1 = arith.constant 0 : i32
    return %c0_i32, %c0_i32_0 : i32, i32
  }
  func.func @transform_12(%arg0: i32) -> (i32, i32) {
    %c0_i32 = arith.constant 0 : i32
    %c0_i32_0 = arith.constant 0 : i32
    %c0_i32_1 = arith.constant 0 : i32
    return %c0_i32, %c0_i32_0 : i32, i32
  }
  func.func @transform_13(%arg0: i32) -> (i32, i32) {
    %c0_i32 = arith.constant 0 : i32
    %c0_i32_0 = arith.constant 0 : i32
    %c0_i32_1 = arith.constant 0 : i32
    return %c0_i32, %c0_i32_0 : i32, i32
  }
  func.func @transform_14(%arg0: i32) -> (i32, i32) {
    %c0_i32 = arith.constant 0 : i32
    %c0_i32_0 = arith.constant 0 : i32
    %c0_i32_1 = arith.constant 0 : i32
    return %c0_i32, %c0_i32_0 : i32, i32
  }
  func.func @transform_15(%arg0: i32) -> (i32, i32) {
    %c0_i32 = arith.constant 0 : i32
    %c0_i32_0 = arith.constant 0 : i32
    return %arg0, %c0_i32 : i32, i32
  }
  func.func @transform_16(%arg0: i32) -> (i32, i32) {
    %c0_i32 = arith.constant 0 : i32
    %c0_i32_0 = arith.constant 0 : i32
    return %arg0, %c0_i32 : i32, i32
  }
  func.func @transform_17(%arg0: i32) -> (i32, i32) {
    %c0_i32 = arith.constant 0 : i32
    %c0_i32_0 = arith.constant 0 : i32
    return %arg0, %c0_i32 : i32, i32
  }
}

</mosaic_0001>

<llo_original>
// kernel: cvae_forward.1
$region0: #{cvae_forward.1}
  #allocation0 [shape = 'u32[]', space=smem, size = 0x4, offset = 0x4, fixed_abs, tag = 'smem constant byte address 0x4 - core index']
  #allocation1 [shape = 'u32[144,128]{1,0:T(1,128)}', space=vmem, size = 0x12000, scoped, tag = 'internal scratch']
  %s0 = inlined_call_operand.vmem [shape: f32[16,784], index: 0, kind: input, shape index: {}]
  %s1 = inlined_call_operand.vmem [shape: bf16[16,128], index: 1, kind: input, shape index: {}]
  %s2 = inlined_call_operand.vmem [shape: f32[16,16], index: 2, kind: input, shape index: {}]
  %s3 = inlined_call_operand.vmem [shape: bf16[784,256], index: 3, kind: input, shape index: {}]
  %s4 = inlined_call_operand.vmem [shape: bf16[128,256], index: 4, kind: input, shape index: {}]
  %s5 = inlined_call_operand.vmem [shape: f32[1,256], index: 5, kind: input, shape index: {}]
  %s6 = inlined_call_operand.vmem [shape: bf16[256,512], index: 6, kind: input, shape index: {}]
  %s7 = inlined_call_operand.vmem [shape: f32[1,512], index: 7, kind: input, shape index: {}]
  %s8 = inlined_call_operand.vmem [shape: bf16[512,32], index: 8, kind: input, shape index: {}]
  %s9 = inlined_call_operand.vmem [shape: f32[1,32], index: 9, kind: input, shape index: {}]
  %s10 = inlined_call_operand.vmem [shape: bf16[16,512], index: 10, kind: input, shape index: {}]
  %s11 = inlined_call_operand.vmem [shape: bf16[128,512], index: 11, kind: input, shape index: {}]
  %s12 = inlined_call_operand.vmem [shape: f32[1,512], index: 12, kind: input, shape index: {}]
  %s13 = inlined_call_operand.vmem [shape: bf16[512,784], index: 13, kind: input, shape index: {}]
  %s14 = inlined_call_operand.vmem [shape: f32[1,784], index: 14, kind: input, shape index: {}]
  %s15 = inlined_call_operand.vmem [shape: bf16[16,784], index: 15, kind: output, shape index: {0}]
  %s16 = inlined_call_operand.vmem [shape: f32[16,16], index: 16, kind: output, shape index: {1}]
  %s17 = inlined_call_operand.vmem [shape: f32[16,16], index: 17, kind: output, shape index: {2}]
  %18 = xla_tuple %s15, %s16, %s17
  %s19 = sld [smem:[#allocation0]]
  $region109: #{cvae_forward.1} parent=0
    _
  %s21 = ssub.s32 1, %s19
  %s22 = scalar_select 0, %s21, %s19
  loop: start=0, step=1, limit=4
  $region2: #{cvae_forward.1} parent=0 // loop_pre_header
    _
  $region3: #{cvae_forward.1} parent=0 // loop_header
    %s24 = sphi 0, %s28
    %p25 = scmp.ge.s32.totalorder %s24, 4
    %s34 = sphi 0, %s36
    %s37 = sphi 0, %s34
    %s38 = sphi 0, %s37
    %s54 = sphi 0, %s38
    %s60 = sphi 0, %s62
    %s63 = sphi 0, %s60
    %s64 = sphi 0, %s63
    %s80 = sphi 0, %s64
    %s86 = sphi 0, %s88
    %s89 = sphi 0, %s86
    %s90 = sphi 0, %s89
    %s106 = sphi 0, %s90
    %s110 = sphi 0, %s110
    %s112 = sphi 0, %s110
    %s113 = sphi 0, %s112
    %s127 = sphi 0, %s113
    %s131 = sphi 0, %s131
    %s133 = sphi 0, %s131
    %s134 = sphi 0, %s133
    %s148 = sphi 0, %s134
    %s152 = sphi 0, %s152
    %s154 = sphi 0, %s152
    %s155 = sphi 0, %s154
    %s169 = sphi 0, %s155
    %s173 = sphi 0, %s173
    %s175 = sphi 0, %s173
    %s176 = sphi 0, %s175
    %s190 = sphi 0, %s176
    %s194 = sphi 0, %s194
    %s196 = sphi 0, %s194
    %s197 = sphi 0, %s196
    %s211 = sphi 0, %s197
    %s215 = sphi 0, %s215
    %s217 = sphi 0, %s215
    %s218 = sphi 0, %s217
    %s232 = sphi 0, %s218
    %s236 = sphi 0, %s236
    %s238 = sphi 0, %s236
    %s239 = sphi 0, %s238
    %s253 = sphi 0, %s239
    %s257 = sphi 0, %s257
    %s259 = sphi 0, %s257
    %s260 = sphi 0, %s259
    %s274 = sphi 0, %s260
    %s278 = sphi 0, %s278
    %s280 = sphi 0, %s278
    %s281 = sphi 0, %s280
    %s295 = sphi 0, %s281
    %s299 = sphi 0, %s299
    %s301 = sphi 0, %s299
    %s302 = sphi 0, %s301
    %s316 = sphi 0, %s302
    %s320 = sphi 0, %s320
    %s322 = sphi 0, %s320
    %s323 = sphi 0, %s322
    %s337 = sphi 0, %s323
    %s341 = sphi 0, %s341
    %s343 = sphi 0, %s341
    %s344 = sphi 0, %s343
    %s358 = sphi 0, %s344
    %s364 = sphi 0, %s366
    %s367 = sphi 0, %s364
    %s368 = sphi 0, %s367
    %s384 = sphi 0, %s368
    %s390 = sphi 0, %s392
    %s393 = sphi 0, %s390
    %s394 = sphi 0, %s393
    %s410 = sphi 0, %s394
    %s416 = sphi 0, %s418
    %s419 = sphi 0, %s416
    %s420 = sphi 0, %s419
    %s436 = sphi 0, %s420
  $region4: #{cvae_forward.1} parent=0 // loop_header_branch
    %27 = sbr.rel (%p25) target = $region8
  $region5: #{cvae_forward.1} parent=0 // loop_body
    %s29 = ssub.s32 %s24, 1
    %s30 = ssub.s32 %s24, 2
    %s31 = sadd.s32 %s24, 1
    %s32 = ssub.s32 %s24, %s31
    %p33 = scmp.eq.s32.totalorder %s32, 0
    %s35 = sadd.s32 %s34, 1
    %s36 = scalar_select %p33, %s34, %s35
    %p39 = pneg %p33
    %p40 = scmp.eq.s32.totalorder %s24, 1
    %p41 = por %p39, %p40
    %p42 = scmp.ne.s32.totalorder %s34, %s37
    %p43 = scmp.eq.s32.totalorder %s24, 0
    %p44 = por %p42, %p43
    %p45 = scmp.ne.s32.totalorder %s34, %s37
    %p46 = scmp.eq.s32.totalorder %s29, 1
    %p47 = por %p45, %p46
    %p48 = scmp.ne.s32.totalorder %s37, %s38
    %p49 = scmp.eq.s32.totalorder %s29, 0
    %p50 = por %p48, %p49
    %p51 = scmp.ne.s32.totalorder %s37, %s38
    %p52 = scmp.eq.s32.totalorder %s30, 1
    %p53 = por %p51, %p52
    %p55 = scmp.ne.s32.totalorder %s38, %s54
    %p56 = scmp.eq.s32.totalorder %s30, 0
    %p57 = por %p55, %p56
    %s58 = ssub.s32 %s24, %s31
    %p59 = scmp.eq.s32.totalorder %s58, 0
    %s61 = sadd.s32 %s60, 1
    %s62 = scalar_select %p59, %s60, %s61
    %p65 = pneg %p59
    %p66 = scmp.eq.s32.totalorder %s24, 1
    %p67 = por %p65, %p66
    %p68 = scmp.ne.s32.totalorder %s60, %s63
    %p69 = scmp.eq.s32.totalorder %s24, 0
    %p70 = por %p68, %p69
    %p71 = scmp.ne.s32.totalorder %s60, %s63
    %p72 = scmp.eq.s32.totalorder %s29, 1
    %p73 = por %p71, %p72
    %p74 = scmp.ne.s32.totalorder %s63, %s64
    %p75 = scmp.eq.s32.totalorder %s29, 0
    %p76 = por %p74, %p75
    %p77 = scmp.ne.s32.totalorder %s63, %s64
    %p78 = scmp.eq.s32.totalorder %s30, 1
    %p79 = por %p77, %p78
    %p81 = scmp.ne.s32.totalorder %s64, %s80
    %p82 = scmp.eq.s32.totalorder %s30, 0
    %p83 = por %p81, %p82
    %s84 = ssub.s32 %s24, %s31
    %p85 = scmp.eq.s32.totalorder %s84, 0
    %s87 = sadd.s32 %s86, 1
    %s88 = scalar_select %p85, %s86, %s87
    %p91 = pneg %p85
    %p92 = scmp.eq.s32.totalorder %s24, 1
    %p93 = por %p91, %p92
    %p94 = scmp.ne.s32.totalorder %s86, %s89
    %p95 = scmp.eq.s32.totalorder %s24, 0
    %p96 = por %p94, %p95
    %p97 = scmp.ne.s32.totalorder %s86, %s89
    %p98 = scmp.eq.s32.totalorder %s29, 1
    %p99 = por %p97, %p98
    %p100 = scmp.ne.s32.totalorder %s89, %s90
    %p101 = scmp.eq.s32.totalorder %s29, 0
    %p102 = por %p100, %p101
    %p103 = scmp.ne.s32.totalorder %s89, %s90
    %p104 = scmp.eq.s32.totalorder %s30, 1
    %p105 = por %p103, %p104
    %p107 = scmp.ne.s32.totalorder %s90, %s106
    %p108 = scmp.eq.s32.totalorder %s30, 0
    %p109 = por %p107, %p108
    %s111 = sadd.s32 %s110, 1
    %p114 = scmp.eq.s32.totalorder %s24, 1
    %p115 = scmp.ne.s32.totalorder %s110, %s112
    %p116 = scmp.eq.s32.totalorder %s24, 0
    %p117 = por %p115, %p116
    %p118 = scmp.ne.s32.totalorder %s110, %s112
    %p119 = scmp.eq.s32.totalorder %s29, 1
    %p120 = por %p118, %p119
    %p121 = scmp.ne.s32.totalorder %s112, %s113
    %p122 = scmp.eq.s32.totalorder %s29, 0
    %p123 = por %p121, %p122
    %p124 = scmp.ne.s32.totalorder %s112, %s113
    %p125 = scmp.eq.s32.totalorder %s30, 1
    %p126 = por %p124, %p125
    %p128 = scmp.ne.s32.totalorder %s113, %s127
    %p129 = scmp.eq.s32.totalorder %s30, 0
    %p130 = por %p128, %p129
    %s132 = sadd.s32 %s131, 1
    %p135 = scmp.eq.s32.totalorder %s24, 1
    %p136 = scmp.ne.s32.totalorder %s131, %s133
    %p137 = scmp.eq.s32.totalorder %s24, 0
    %p138 = por %p136, %p137
    %p139 = scmp.ne.s32.totalorder %s131, %s133
    %p140 = scmp.eq.s32.totalorder %s29, 1
    %p141 = por %p139, %p140
    %p142 = scmp.ne.s32.totalorder %s133, %s134
    %p143 = scmp.eq.s32.totalorder %s29, 0
    %p144 = por %p142, %p143
    %p145 = scmp.ne.s32.totalorder %s133, %s134
    %p146 = scmp.eq.s32.totalorder %s30, 1
    %p147 = por %p145, %p146
    %p149 = scmp.ne.s32.totalorder %s134, %s148
    %p150 = scmp.eq.s32.totalorder %s30, 0
    %p151 = por %p149, %p150
    %s153 = sadd.s32 %s152, 1
    %p156 = scmp.eq.s32.totalorder %s24, 1
    %p157 = scmp.ne.s32.totalorder %s152, %s154
    %p158 = scmp.eq.s32.totalorder %s24, 0
    %p159 = por %p157, %p158
    %p160 = scmp.ne.s32.totalorder %s152, %s154
    %p161 = scmp.eq.s32.totalorder %s29, 1
    %p162 = por %p160, %p161
    %p163 = scmp.ne.s32.totalorder %s154, %s155
    %p164 = scmp.eq.s32.totalorder %s29, 0
    %p165 = por %p163, %p164
    %p166 = scmp.ne.s32.totalorder %s154, %s155
    %p167 = scmp.eq.s32.totalorder %s30, 1
    %p168 = por %p166, %p167
    %p170 = scmp.ne.s32.totalorder %s155, %s169
    %p171 = scmp.eq.s32.totalorder %s30, 0
    %p172 = por %p170, %p171
    %s174 = sadd.s32 %s173, 1
    %p177 = scmp.eq.s32.totalorder %s24, 1
    %p178 = scmp.ne.s32.totalorder %s173, %s175
    %p179 = scmp.eq.s32.totalorder %s24, 0
    %p180 = por %p178, %p179
    %p181 = scmp.ne.s32.totalorder %s173, %s175
    %p182 = scmp.eq.s32.totalorder %s29, 1
    %p183 = por %p181, %p182
    %p184 = scmp.ne.s32.totalorder %s175, %s176
    %p185 = scmp.eq.s32.totalorder %s29, 0
    %p186 = por %p184, %p185
    %p187 = scmp.ne.s32.totalorder %s175, %s176
    %p188 = scmp.eq.s32.totalorder %s30, 1
    %p189 = por %p187, %p188
    %p191 = scmp.ne.s32.totalorder %s176, %s190
    %p192 = scmp.eq.s32.totalorder %s30, 0
    %p193 = por %p191, %p192
    %s195 = sadd.s32 %s194, 1
    %p198 = scmp.eq.s32.totalorder %s24, 1
    %p199 = scmp.ne.s32.totalorder %s194, %s196
    %p200 = scmp.eq.s32.totalorder %s24, 0
    %p201 = por %p199, %p200
    %p202 = scmp.ne.s32.totalorder %s194, %s196
    %p203 = scmp.eq.s32.totalorder %s29, 1
    %p204 = por %p202, %p203
    %p205 = scmp.ne.s32.totalorder %s196, %s197
    %p206 = scmp.eq.s32.totalorder %s29, 0
    %p207 = por %p205, %p206
    %p208 = scmp.ne.s32.totalorder %s196, %s197
    %p209 = scmp.eq.s32.totalorder %s30, 1
    %p210 = por %p208, %p209
    %p212 = scmp.ne.s32.totalorder %s197, %s211
    %p213 = scmp.eq.s32.totalorder %s30, 0
    %p214 = por %p212, %p213
    %s216 = sadd.s32 %s215, 1
    %p219 = scmp.eq.s32.totalorder %s24, 1
    %p220 = scmp.ne.s32.totalorder %s215, %s217
    %p221 = scmp.eq.s32.totalorder %s24, 0
    %p222 = por %p220, %p221
    %p223 = scmp.ne.s32.totalorder %s215, %s217
    %p224 = scmp.eq.s32.totalorder %s29, 1
    %p225 = por %p223, %p224
    %p226 = scmp.ne.s32.totalorder %s217, %s218
    %p227 = scmp.eq.s32.totalorder %s29, 0
    %p228 = por %p226, %p227
    %p229 = scmp.ne.s32.totalorder %s217, %s218
    %p230 = scmp.eq.s32.totalorder %s30, 1
    %p231 = por %p229, %p230
    %p233 = scmp.ne.s32.totalorder %s218, %s232
    %p234 = scmp.eq.s32.totalorder %s30, 0
    %p235 = por %p233, %p234
    %s237 = sadd.s32 %s236, 1
    %p240 = scmp.eq.s32.totalorder %s24, 1
    %p241 = scmp.ne.s32.totalorder %s236, %s238
    %p242 = scmp.eq.s32.totalorder %s24, 0
    %p243 = por %p241, %p242
    %p244 = scmp.ne.s32.totalorder %s236, %s238
    %p245 = scmp.eq.s32.totalorder %s29, 1
    %p246 = por %p244, %p245
    %p247 = scmp.ne.s32.totalorder %s238, %s239
    %p248 = scmp.eq.s32.totalorder %s29, 0
    %p249 = por %p247, %p248
    %p250 = scmp.ne.s32.totalorder %s238, %s239
    %p251 = scmp.eq.s32.totalorder %s30, 1
    %p252 = por %p250, %p251
    %p254 = scmp.ne.s32.totalorder %s239, %s253
    %p255 = scmp.eq.s32.totalorder %s30, 0
    %p256 = por %p254, %p255
    %s258 = sadd.s32 %s257, 1
    %p261 = scmp.eq.s32.totalorder %s24, 1
    %p262 = scmp.ne.s32.totalorder %s257, %s259
    %p263 = scmp.eq.s32.totalorder %s24, 0
    %p264 = por %p262, %p263
    %p265 = scmp.ne.s32.totalorder %s257, %s259
    %p266 = scmp.eq.s32.totalorder %s29, 1
    %p267 = por %p265, %p266
    %p268 = scmp.ne.s32.totalorder %s259, %s260
    %p269 = scmp.eq.s32.totalorder %s29, 0
    %p270 = por %p268, %p269
    %p271 = scmp.ne.s32.totalorder %s259, %s260
    %p272 = scmp.eq.s32.totalorder %s30, 1
    %p273 = por %p271, %p272
    %p275 = scmp.ne.s32.totalorder %s260, %s274
    %p276 = scmp.eq.s32.totalorder %s30, 0
    %p277 = por %p275, %p276
    %s279 = sadd.s32 %s278, 1
    %p282 = scmp.eq.s32.totalorder %s24, 1
    %p283 = scmp.ne.s32.totalorder %s278, %s280
    %p284 = scmp.eq.s32.totalorder %s24, 0
    %p285 = por %p283, %p284
    %p286 = scmp.ne.s32.totalorder %s278, %s280
    %p287 = scmp.eq.s32.totalorder %s29, 1
    %p288 = por %p286, %p287
    %p289 = scmp.ne.s32.totalorder %s280, %s281
    %p290 = scmp.eq.s32.totalorder %s29, 0
    %p291 = por %p289, %p290
    %p292 = scmp.ne.s32.totalorder %s280, %s281
    %p293 = scmp.eq.s32.totalorder %s30, 1
    %p294 = por %p292, %p293
    %p296 = scmp.ne.s32.totalorder %s281, %s295
    %p297 = scmp.eq.s32.totalorder %s30, 0
    %p298 = por %p296, %p297
    %s300 = sadd.s32 %s299, 1
    %p303 = scmp.eq.s32.totalorder %s24, 1
    %p304 = scmp.ne.s32.totalorder %s299, %s301
    %p305 = scmp.eq.s32.totalorder %s24, 0
    %p306 = por %p304, %p305
    %p307 = scmp.ne.s32.totalorder %s299, %s301
    %p308 = scmp.eq.s32.totalorder %s29, 1
    %p309 = por %p307, %p308
    %p310 = scmp.ne.s32.totalorder %s301, %s302
    %p311 = scmp.eq.s32.totalorder %s29, 0
    %p312 = por %p310, %p311
    %p313 = scmp.ne.s32.totalorder %s301, %s302
    %p314 = scmp.eq.s32.totalorder %s30, 1
    %p315 = por %p313, %p314
    %p317 = scmp.ne.s32.totalorder %s302, %s316
    %p318 = scmp.eq.s32.totalorder %s30, 0
    %p319 = por %p317, %p318
    %s321 = sadd.s32 %s320, 1
    %p324 = scmp.eq.s32.totalorder %s24, 1
    %p325 = scmp.ne.s32.totalorder %s320, %s322
    %p326 = scmp.eq.s32.totalorder %s24, 0
    %p327 = por %p325, %p326
    %p328 = scmp.ne.s32.totalorder %s320, %s322
    %p329 = scmp.eq.s32.totalorder %s29, 1
    %p330 = por %p328, %p329
    %p331 = scmp.ne.s32.totalorder %s322, %s323
    %p332 = scmp.eq.s32.totalorder %s29, 0
    %p333 = por %p331, %p332
    %p334 = scmp.ne.s32.totalorder %s322, %s323
    %p335 = scmp.eq.s32.totalorder %s30, 1
    %p336 = por %p334, %p335
    %p338 = scmp.ne.s32.totalorder %s323, %s337
    %p339 = scmp.eq.s32.totalorder %s30, 0
    %p340 = por %p338, %p339
    %s342 = sadd.s32 %s341, 1
    %p345 = scmp.eq.s32.totalorder %s24, 1
    %p346 = scmp.ne.s32.totalorder %s341, %s343
    %p347 = scmp.eq.s32.totalorder %s24, 0
    %p348 = por %p346, %p347
    %p349 = scmp.ne.s32.totalorder %s341, %s343
    %p350 = scmp.eq.s32.totalorder %s29, 1
    %p351 = por %p349, %p350
    %p352 = scmp.ne.s32.totalorder %s343, %s344
    %p353 = scmp.eq.s32.totalorder %s29, 0
    %p354 = por %p352, %p353
    %p355 = scmp.ne.s32.totalorder %s343, %s344
    %p356 = scmp.eq.s32.totalorder %s30, 1
    %p357 = por %p355, %p356
    %p359 = scmp.ne.s32.totalorder %s344, %s358
    %p360 = scmp.eq.s32.totalorder %s30, 0
    %p361 = por %p359, %p360
    %s362 = ssub.s32 %s24, %s31
    %p363 = scmp.eq.s32.totalorder %s362, 0
    %s365 = sadd.s32 %s364, 1
    %s366 = scalar_select %p363, %s364, %s365
    %p369 = pneg %p363
    %p370 = scmp.eq.s32.totalorder %s24, 1
    %p371 = por %p369, %p370
    %p372 = scmp.ne.s32.totalorder %s364, %s367
    %p373 = scmp.eq.s32.totalorder %s24, 0
    %p374 = por %p372, %p373
    %p375 = scmp.ne.s32.totalorder %s364, %s367
    %p376 = scmp.eq.s32.totalorder %s29, 1
    %p377 = por %p375, %p376
    %p378 = scmp.ne.s32.totalorder %s367, %s368
    %p379 = scmp.eq.s32.totalorder %s29, 0
    %p380 = por %p378, %p379
    %p381 = scmp.ne.s32.totalorder %s367, %s368
    %p382 = scmp.eq.s32.totalorder %s30, 1
    %p383 = por %p381, %p382
    %p385 = scmp.ne.s32.totalorder %s368, %s384
    %p386 = scmp.eq.s32.totalorder %s30, 0
    %p387 = por %p385, %p386
    %s388 = ssub.s32 %s24, %s31
    %p389 = scmp.eq.s32.totalorder %s388, 0
    %s391 = sadd.s32 %s390, 1
    %s392 = scalar_select %p389, %s390, %s391
    %p395 = pneg %p389
    %p396 = scmp.eq.s32.totalorder %s24, 1
    %p397 = por %p395, %p396
    %p398 = scmp.ne.s32.totalorder %s390, %s393
    %p399 = scmp.eq.s32.totalorder %s24, 0
    %p400 = por %p398, %p399
    %p401 = scmp.ne.s32.totalorder %s390, %s393
    %p402 = scmp.eq.s32.totalorder %s29, 1
    %p403 = por %p401, %p402
    %p404 = scmp.ne.s32.totalorder %s393, %s394
    %p405 = scmp.eq.s32.totalorder %s29, 0
    %p406 = por %p404, %p405
    %p407 = scmp.ne.s32.totalorder %s393, %s394
    %p408 = scmp.eq.s32.totalorder %s30, 1
    %p409 = por %p407, %p408
    %p411 = scmp.ne.s32.totalorder %s394, %s410
    %p412 = scmp.eq.s32.totalorder %s30, 0
    %p413 = por %p411, %p412
    %s414 = ssub.s32 %s24, %s31
    %p415 = scmp.eq.s32.totalorder %s414, 0
    %s417 = sadd.s32 %s416, 1
    %s418 = scalar_select %p415, %s416, %s417
    %p421 = pneg %p415
    %p422 = scmp.eq.s32.totalorder %s24, 1
    %p423 = por %p421, %p422
    %p424 = scmp.ne.s32.totalorder %s416, %s419
    %p425 = scmp.eq.s32.totalorder %s24, 0
    %p426 = por %p424, %p425
    %p427 = scmp.ne.s32.totalorder %s416, %s419
    %p428 = scmp.eq.s32.totalorder %s29, 1
    %p429 = por %p427, %p428
    %p430 = scmp.ne.s32.totalorder %s419, %s420
    %p431 = scmp.eq.s32.totalorder %s29, 0
    %p432 = por %p430, %p431
    %p433 = scmp.ne.s32.totalorder %s419, %s420
    %p434 = scmp.eq.s32.totalorder %s30, 1
    %p435 = por %p433, %p434
    %p437 = scmp.ne.s32.totalorder %s420, %s436
    %p438 = scmp.eq.s32.totalorder %s30, 0
    %p439 = por %p437, %p438
    %p440 = scmp.le.s32.totalorder 1, %s24
    %p441 = scmp.lt.s32.totalorder %s24, 3
    %p442 = pnand %p440, %p441
    %p443 = pneg %p442
    // Predicated region
    $region9: #{cvae_forward.1} parent=5 // pred_check
      _
    $region10: #{cvae_forward.1} parent=5 // pred_check_branch
      %445 = sbr.rel (%p442) target = $region12
    $region11: #{cvae_forward.1} parent=5 // pred_region
      %s446 = ssub.s32 %s24, 1
      // Predicated region
      $region13: #{cvae_forward.1} parent=11 // pred_check
        %p447 = pneg %p123
      $region14: #{cvae_forward.1} parent=11 // pred_check_branch
        %449 = sbr.rel (%p447) target = $region16
      $region15: #{cvae_forward.1} parent=11 // pred_region
        _
      $region16: #{cvae_forward.1} parent=11 // pred_fallthru
        _
      // Predicated region
      $region17: #{cvae_forward.1} parent=11 // pred_check
        %p450 = pneg %p144
      $region18: #{cvae_forward.1} parent=11 // pred_check_branch
        %452 = sbr.rel (%p450) target = $region20
      $region19: #{cvae_forward.1} parent=11 // pred_region
        _
      $region20: #{cvae_forward.1} parent=11 // pred_fallthru
        _
      // Predicated region
      $region21: #{cvae_forward.1} parent=11 // pred_check
        %p453 = pneg %p165
      $region22: #{cvae_forward.1} parent=11 // pred_check_branch
        %455 = sbr.rel (%p453) target = $region24
      $region23: #{cvae_forward.1} parent=11 // pred_region
        _
      $region24: #{cvae_forward.1} parent=11 // pred_fallthru
        _
      // Predicated region
      $region25: #{cvae_forward.1} parent=11 // pred_check
        %p456 = pneg %p186
      $region26: #{cvae_forward.1} parent=11 // pred_check_branch
        %458 = sbr.rel (%p456) target = $region28
      $region27: #{cvae_forward.1} parent=11 // pred_region
        _
      $region28: #{cvae_forward.1} parent=11 // pred_fallthru
        _
      // Predicated region
      $region29: #{cvae_forward.1} parent=11 // pred_check
        %p459 = pneg %p207
      $region30: #{cvae_forward.1} parent=11 // pred_check_branch
        %461 = sbr.rel (%p459) target = $region32
      $region31: #{cvae_forward.1} parent=11 // pred_region
        _
      $region32: #{cvae_forward.1} parent=11 // pred_fallthru
        _
      // Predicated region
      $region33: #{cvae_forward.1} parent=11 // pred_check
        %p462 = pneg %p228
      $region34: #{cvae_forward.1} parent=11 // pred_check_branch
        %464 = sbr.rel (%p462) target = $region36
      $region35: #{cvae_forward.1} parent=11 // pred_region
        _
      $region36: #{cvae_forward.1} parent=11 // pred_fallthru
        _
      // Predicated region
      $region37: #{cvae_forward.1} parent=11 // pred_check
        %p465 = pneg %p249
      $region38: #{cvae_forward.1} parent=11 // pred_check_branch
        %467 = sbr.rel (%p465) target = $region40
      $region39: #{cvae_forward.1} parent=11 // pred_region
        _
      $region40: #{cvae_forward.1} parent=11 // pred_fallthru
        _
      // Predicated region
      $region41: #{cvae_forward.1} parent=11 // pred_check
        %p468 = pneg %p270
      $region42: #{cvae_forward.1} parent=11 // pred_check_branch
        %470 = sbr.rel (%p468) target = $region44
      $region43: #{cvae_forward.1} parent=11 // pred_region
        _
      $region44: #{cvae_forward.1} parent=11 // pred_fallthru
        _
      // Predicated region
      $region45: #{cvae_forward.1} parent=11 // pred_check
        %p471 = pneg %p291
      $region46: #{cvae_forward.1} parent=11 // pred_check_branch
        %473 = sbr.rel (%p471) target = $region48
      $region47: #{cvae_forward.1} parent=11 // pred_region
        _
      $region48: #{cvae_forward.1} parent=11 // pred_fallthru
        _
      // Predicated region
      $region49: #{cvae_forward.1} parent=11 // pred_check
        %p474 = pneg %p312
      $region50: #{cvae_forward.1} parent=11 // pred_check_branch
        %476 = sbr.rel (%p474) target = $region52
      $region51: #{cvae_forward.1} parent=11 // pred_region
        _
      $region52: #{cvae_forward.1} parent=11 // pred_fallthru
        _
      // Predicated region
      $region53: #{cvae_forward.1} parent=11 // pred_check
        %p477 = pneg %p333
      $region54: #{cvae_forward.1} parent=11 // pred_check_branch
        %479 = sbr.rel (%p477) target = $region56
      $region55: #{cvae_forward.1} parent=11 // pred_region
        _
      $region56: #{cvae_forward.1} parent=11 // pred_fallthru
        _
      // Predicated region
      $region57: #{cvae_forward.1} parent=11 // pred_check
        %p480 = pneg %p354
      $region58: #{cvae_forward.1} parent=11 // pred_check_branch
        %482 = sbr.rel (%p480) target = $region60
      $region59: #{cvae_forward.1} parent=11 // pred_region
        _
      $region60: #{cvae_forward.1} parent=11 // pred_fallthru
        _
    $region12: #{cvae_forward.1} parent=5 // pred_fallthru
      _
    %p483 = scmp.lt.s32.totalorder %s24, 2
    // Predicated region
    $region61: #{cvae_forward.1} parent=5 // pred_check
      %p484 = pneg %p483
    $region62: #{cvae_forward.1} parent=5 // pred_check_branch
      %486 = sbr.rel (%p484) target = $region64
    $region63: #{cvae_forward.1} parent=5 // pred_region
      // Predicated region
      $region65: #{cvae_forward.1} parent=63 // pred_check
        %p487 = pneg %p44
      $region66: #{cvae_forward.1} parent=63 // pred_check_branch
        %489 = sbr.rel (%p487) target = $region68
      $region67: #{cvae_forward.1} parent=63 // pred_region
        %p490 = scmp.lt.s32.totalorder %s24, 1
        %s491 = scalar_select %p490, %s24, 1
        %s492 = smul.addr %s491, 7
        %s493 = smul.addr %s492, 8
        %s494 = scalar_lea.vmem %s0, %s493
      $region68: #{cvae_forward.1} parent=63 // pred_fallthru
        _
      // Predicated region
      $region69: #{cvae_forward.1} parent=63 // pred_check
        %p495 = pneg %p70
      $region70: #{cvae_forward.1} parent=63 // pred_check_branch
        %497 = sbr.rel (%p495) target = $region72
      $region71: #{cvae_forward.1} parent=63 // pred_region
        %p498 = scmp.lt.s32.totalorder %s24, 1
        %s499 = scalar_select %p498, %s24, 1
        %s500 = smul.addr %s499, 4
        %s501 = scalar_lea.vmem %s1, %s500
      $region72: #{cvae_forward.1} parent=63 // pred_fallthru
        _
      // Predicated region
      $region73: #{cvae_forward.1} parent=63 // pred_check
        %p502 = pneg %p96
      $region74: #{cvae_forward.1} parent=63 // pred_check_branch
        %504 = sbr.rel (%p502) target = $region76
      $region75: #{cvae_forward.1} parent=63 // pred_region
        %p505 = scmp.lt.s32.totalorder %s24, 1
        %s506 = scalar_select %p505, %s24, 1
        %s507 = smul.addr %s506, 8
        %s508 = scalar_lea.vmem %s2, %s507
      $region76: #{cvae_forward.1} parent=63 // pred_fallthru
        _
    $region64: #{cvae_forward.1} parent=5 // pred_fallthru
      _
    %p509 = scmp.le.s32.totalorder 1, %s24
    %p510 = scmp.lt.s32.totalorder %s24, 3
    %p511 = pnand %p509, %p510
    %p512 = pneg %p511
    // Predicated region
    $region77: #{cvae_forward.1} parent=5 // pred_check
      _
    $region78: #{cvae_forward.1} parent=5 // pred_check_branch
      %514 = sbr.rel (%p511) target = $region80
    $region79: #{cvae_forward.1} parent=5 // pred_region
      %s515 = ssub.s32 %s24, 1
      %p516 = scmp.lt.s32.totalorder %s29, 1
      %s517 = scalar_select %p516, %s29, 1
      %s518 = smul.addr %s517, 7
      %s519 = smul.addr %s518, 8
      %s520 = scalar_lea.vmem %s0, %s519
      %p521 = pneg %p50
      %p522 = pneg %p47
      %p523 = scmp.lt.s32.totalorder %s29, 1
      %s524 = scalar_select %p523, %s29, 1
      %s525 = smul.addr %s524, 4
      %s526 = scalar_lea.vmem %s1, %s525
      %p527 = pneg %p76
      %p528 = pneg %p73
      %p529 = scmp.lt.s32.totalorder %s29, 1
      %s530 = scalar_select %p529, %s29, 1
      %s531 = smul.addr %s530, 8
      %s532 = scalar_lea.vmem %s2, %s531
      %p533 = pneg %p102
      %p534 = pneg %p99
      %p535 = pneg %p123
      %p536 = pneg %p120
      %p537 = pneg %p144
      %p538 = pneg %p141
      %p539 = pneg %p165
      %p540 = pneg %p162
      %p541 = pneg %p186
      %p542 = pneg %p183
      %p543 = pneg %p207
      %p544 = pneg %p204
      %p545 = pneg %p228
      %p546 = pneg %p225
      %p547 = pneg %p249
      %p548 = pneg %p246
      %p549 = pneg %p270
      %p550 = pneg %p267
      %p551 = pneg %p291
      %p552 = pneg %p288
      %p553 = pneg %p312
      %p554 = pneg %p309
      %p555 = pneg %p333
      %p556 = pneg %p330
      %p557 = pneg %p354
      %p558 = pneg %p351
      %p559 = pneg %p380
      %p560 = pneg %p377
      %p561 = scmp.lt.s32.totalorder %s29, 1
      %s562 = scalar_select %p561, %s29, 1
      %s563 = smul.addr %s562, 7
      %s564 = smul.addr %s563, 4
      %s565 = scalar_lea.vmem %s15, %s564
      %p566 = pneg %p406
      %p567 = pneg %p403
      %p568 = scmp.lt.s32.totalorder %s29, 1
      %s569 = scalar_select %p568, %s29, 1
      %s570 = smul.addr %s569, 8
      %s571 = scalar_lea.vmem %s16, %s570
      %p572 = pneg %p432
      %p573 = pneg %p429
      %p574 = scmp.lt.s32.totalorder %s29, 1
      %s575 = scalar_select %p574, %s29, 1
      %s576 = smul.addr %s575, 8
      %s577 = scalar_lea.vmem %s17, %s576
      %p578 = scmp.lt.s32.totalorder %s29, 1
      %s579 = scalar_select %p578, %s29, 1
      %s580 = smul.addr %s579, 7
      %s581 = smul.addr %s580, 8
      %s582 = scalar_lea.vmem %s0, %s581
      %p583 = scmp.lt.s32.totalorder %s29, 1
      %s584 = scalar_select %p583, %s29, 1
      %s585 = smul.addr %s584, 4
      %s586 = scalar_lea.vmem %s1, %s585
      %p587 = scmp.lt.s32.totalorder %s29, 1
      %s588 = scalar_select %p587, %s29, 1
      %s589 = smul.addr %s588, 8
      %s590 = scalar_lea.vmem %s2, %s589
      %p591 = scmp.lt.s32.totalorder %s29, 1
      %s592 = scalar_select %p591, %s29, 1
      %s593 = smul.addr %s592, 7
      %s594 = smul.addr %s593, 4
      %s595 = scalar_lea.vmem %s15, %s594
      %p596 = scmp.lt.s32.totalorder %s29, 1
      %s597 = scalar_select %p596, %s29, 1
      %s598 = smul.addr %s597, 8
      %s599 = scalar_lea.vmem %s16, %s598
      %p600 = scmp.lt.s32.totalorder %s29, 1
      %s601 = scalar_select %p600, %s29, 1
      %s602 = smul.addr %s601, 8
      %s603 = scalar_lea.vmem %s17, %s602
      %v605 = vld [vmem:[%s586] sm:$0xf]
      %v606 = vld [vmem:[%s582] sm:$0xff]
      %v607 = vld [vmem:[%s582 + $0x8] sm:$0xff]
      %v608 = vld [vmem:[%s582 + $0x10] sm:$0xff]
      %v609 = vld [vmem:[%s582 + $0x18] sm:$0xff]
      %v610 = vld [vmem:[%s582 + $0x20] sm:$0xff]
      %v611 = vld [vmem:[%s582 + $0x28] sm:$0xff]
      %v612 = vld [vmem:[%s582 + $0x30] sm:$0xff]
      %v613 = vpack.c.bf16 %v606, %v606
      %v614 = vpack.c.bf16 %v607, %v607
      %v615 = vpack.c.bf16 %v608, %v608
      %v616 = vpack.c.bf16 %v609, %v609
      %v617 = vpack.c.bf16 %v610, %v610
      %v618 = vpack.c.bf16 %v611, %v611
      %v619 = vpack.c.bf16 %v612, %v612
      %v620 = vld [vmem:[%s3] sm:$0xff]
      %v621 = vld [vmem:[%s3 + $0x8] sm:$0xff]
      %v622 = vld [vmem:[%s3 + $0x10] sm:$0xff]
      %v623 = vld [vmem:[%s3 + $0x18] sm:$0xff]
      %v624 = vld [vmem:[%s3 + $0x20] sm:$0xff]
      %v625 = vld [vmem:[%s3 + $0x28] sm:$0xff]
      %v626 = vld [vmem:[%s3 + $0x30] sm:$0xff]
      %v627 = vld [vmem:[%s3 + $0x38] sm:$0xff]
      %v628 = vld [vmem:[%s3 + $0x40] sm:$0xff]
      %v629 = vld [vmem:[%s3 + $0x48] sm:$0xff]
      %v630 = vld [vmem:[%s3 + $0x50] sm:$0xff]
      %v631 = vld [vmem:[%s3 + $0x58] sm:$0xff]
      %v632 = vld [vmem:[%s3 + $0x60] sm:$0xff]
      %v633 = vld [vmem:[%s3 + $0x68] sm:$0xff]
      %v634 = vld [vmem:[%s3 + $0x70] sm:$0xff]
      %v635 = vld [vmem:[%s3 + $0x78] sm:$0xff]
      %v636 = vld [vmem:[%s3 + $0x80] sm:$0xff]
      %v637 = vld [vmem:[%s3 + $0x88] sm:$0xff]
      %v638 = vld [vmem:[%s3 + $0x90] sm:$0xff]
      %v639 = vld [vmem:[%s3 + $0x98] sm:$0xff]
      %v640 = vld [vmem:[%s3 + $0xa0] sm:$0xff]
      %v641 = vld [vmem:[%s3 + $0xa8] sm:$0xff]
      %v642 = vld [vmem:[%s3 + $0xb0] sm:$0xff]
      %v643 = vld [vmem:[%s3 + $0xb8] sm:$0xff]
      %v644 = vld [vmem:[%s3 + $0xc0] sm:$0xff]
      %v645 = vld [vmem:[%s3 + $0xc8] sm:$0xff]
      %v646 = vld [vmem:[%s3 + $0xd0] sm:$0xff]
      %v647 = vld [vmem:[%s3 + $0xd8] sm:$0xff]
      %v648 = vld [vmem:[%s3 + $0xe0] sm:$0xff]
      %v649 = vld [vmem:[%s3 + $0xe8] sm:$0xff]
      %v650 = vld [vmem:[%s3 + $0xf0] sm:$0xff]
      %v651 = vld [vmem:[%s3 + $0xf8] sm:$0xff]
      %v652 = vld [vmem:[%s3 + $0x100] sm:$0xff]
      %v653 = vld [vmem:[%s3 + $0x108] sm:$0xff]
      %v654 = vld [vmem:[%s3 + $0x110] sm:$0xff]
      %v655 = vld [vmem:[%s3 + $0x118] sm:$0xff]
      %v656 = vld [vmem:[%s3 + $0x120] sm:$0xff]
      %v657 = vld [vmem:[%s3 + $0x128] sm:$0xff]
      %v658 = vld [vmem:[%s3 + $0x130] sm:$0xff]
      %v659 = vld [vmem:[%s3 + $0x138] sm:$0xff]
      %v660 = vld [vmem:[%s3 + $0x140] sm:$0xff]
      %v661 = vld [vmem:[%s3 + $0x148] sm:$0xff]
      %v662 = vld [vmem:[%s3 + $0x150] sm:$0xff]
      %v663 = vld [vmem:[%s3 + $0x158] sm:$0xff]
      %v664 = vld [vmem:[%s3 + $0x160] sm:$0xff]
      %v665 = vld [vmem:[%s3 + $0x168] sm:$0xff]
      %v666 = vld [vmem:[%s3 + $0x170] sm:$0xff]
      %v667 = vld [vmem:[%s3 + $0x178] sm:$0xff]
      %v668 = vld [vmem:[%s3 + $0x180] sm:$0xff]
      %v669 = vld [vmem:[%s3 + $0x188] sm:$0xff]
      %v670 = vld [vmem:[%s3 + $0x190] sm:$0xff]
      %v671 = vld [vmem:[%s3 + $0x198] sm:$0xff]
      %v672 = vld [vmem:[%s3 + $0x1a0] sm:$0xff]
      %v673 = vld [vmem:[%s3 + $0x1a8] sm:$0xff]
      %v674 = vld [vmem:[%s3 + $0x1b0] sm:$0xff]
      %v675 = vld [vmem:[%s3 + $0x1b8] sm:$0xff]
      %v676 = vld [vmem:[%s3 + $0x1c0] sm:$0xff]
      %v677 = vld [vmem:[%s3 + $0x1c8] sm:$0xff]
      %v678 = vld [vmem:[%s3 + $0x1d0] sm:$0xff]
      %v679 = vld [vmem:[%s3 + $0x1d8] sm:$0xff]
      %v680 = vld [vmem:[%s3 + $0x1e0] sm:$0xff]
      %v681 = vld [vmem:[%s3 + $0x1e8] sm:$0xff]
      %v682 = vld [vmem:[%s3 + $0x1f0] sm:$0xff]
      %v683 = vld [vmem:[%s3 + $0x1f8] sm:$0xff]
      %v684 = vld [vmem:[%s3 + $0x200] sm:$0xff]
      %v685 = vld [vmem:[%s3 + $0x208] sm:$0xff]
      %v686 = vld [vmem:[%s3 + $0x210] sm:$0xff]
      %v687 = vld [vmem:[%s3 + $0x218] sm:$0xff]
      %v688 = vld [vmem:[%s3 + $0x220] sm:$0xff]
      %v689 = vld [vmem:[%s3 + $0x228] sm:$0xff]
      %v690 = vld [vmem:[%s3 + $0x230] sm:$0xff]
      %v691 = vld [vmem:[%s3 + $0x238] sm:$0xff]
      %v692 = vld [vmem:[%s3 + $0x240] sm:$0xff]
      %v693 = vld [vmem:[%s3 + $0x248] sm:$0xff]
      %v694 = vld [vmem:[%s3 + $0x250] sm:$0xff]
      %v695 = vld [vmem:[%s3 + $0x258] sm:$0xff]
      %v696 = vld [vmem:[%s3 + $0x260] sm:$0xff]
      %v697 = vld [vmem:[%s3 + $0x268] sm:$0xff]
      %v698 = vld [vmem:[%s3 + $0x270] sm:$0xff]
      %v699 = vld [vmem:[%s3 + $0x278] sm:$0xff]
      %v700 = vld [vmem:[%s3 + $0x280] sm:$0xff]
      %v701 = vld [vmem:[%s3 + $0x288] sm:$0xff]
      %v702 = vld [vmem:[%s3 + $0x290] sm:$0xff]
      %v703 = vld [vmem:[%s3 + $0x298] sm:$0xff]
      %v704 = vld [vmem:[%s3 + $0x2a0] sm:$0xff]
      %v705 = vld [vmem:[%s3 + $0x2a8] sm:$0xff]
      %v706 = vld [vmem:[%s3 + $0x2b0] sm:$0xff]
      %v707 = vld [vmem:[%s3 + $0x2b8] sm:$0xff]
      %v708 = vld [vmem:[%s3 + $0x2c0] sm:$0xff]
      %v709 = vld [vmem:[%s3 + $0x2c8] sm:$0xff]
      %v710 = vld [vmem:[%s3 + $0x2d0] sm:$0xff]
      %v711 = vld [vmem:[%s3 + $0x2d8] sm:$0xff]
      %v712 = vld [vmem:[%s3 + $0x2e0] sm:$0xff]
      %v713 = vld [vmem:[%s3 + $0x2e8] sm:$0xff]
      %v714 = vld [vmem:[%s3 + $0x2f0] sm:$0xff]
      %v715 = vld [vmem:[%s3 + $0x2f8] sm:$0xff]
      %v716 = vld [vmem:[%s3 + $0x300] sm:$0xff]
      %v717 = vld [vmem:[%s3 + $0x308] sm:$0xff]
      %v718 = vld [vmem:[%s4] sm:$0xff]
      %v719 = vld [vmem:[%s4 + $0x8] sm:$0xff]
      %v720 = vld [vmem:[%s4 + $0x10] sm:$0xff]
      %v721 = vld [vmem:[%s4 + $0x18] sm:$0xff]
      %v722 = vld [vmem:[%s4 + $0x20] sm:$0xff]
      %v723 = vld [vmem:[%s4 + $0x28] sm:$0xff]
      %v724 = vld [vmem:[%s4 + $0x30] sm:$0xff]
      %v725 = vld [vmem:[%s4 + $0x38] sm:$0xff]
      %v726 = vld [vmem:[%s4 + $0x40] sm:$0xff]
      %v727 = vld [vmem:[%s4 + $0x48] sm:$0xff]
      %v728 = vld [vmem:[%s4 + $0x50] sm:$0xff]
      %v729 = vld [vmem:[%s4 + $0x58] sm:$0xff]
      %v730 = vld [vmem:[%s4 + $0x60] sm:$0xff]
      %v731 = vld [vmem:[%s4 + $0x68] sm:$0xff]
      %v732 = vld [vmem:[%s4 + $0x70] sm:$0xff]
      %v733 = vld [vmem:[%s4 + $0x78] sm:$0xff]
      %v750 = vunpack.c.l.b16 %v718
      %v751 = vunpack.c.h.b16 %v718
      %v752 = vunpack.c.l.b16 %v719
      %v753 = vunpack.c.h.b16 %v719
      %v754 = vunpack.c.l.b16 %v720
      %v755 = vunpack.c.h.b16 %v720
      %v756 = vunpack.c.l.b16 %v721
      %v757 = vunpack.c.h.b16 %v721
      %v758 = vunpack.c.l.b16 %v722
      %v759 = vunpack.c.h.b16 %v722
      %v760 = vunpack.c.l.b16 %v723
      %v761 = vunpack.c.h.b16 %v723
      %v762 = vunpack.c.l.b16 %v724
      %v763 = vunpack.c.h.b16 %v724
      %v764 = vunpack.c.l.b16 %v725
      %v765 = vunpack.c.h.b16 %v725
      %v766 = vunpack.c.l.b16 %v726
      %v767 = vunpack.c.h.b16 %v726
      %v768 = vunpack.c.l.b16 %v727
      %v769 = vunpack.c.h.b16 %v727
      %v770 = vunpack.c.l.b16 %v728
      %v771 = vunpack.c.h.b16 %v728
      %v772 = vunpack.c.l.b16 %v729
      %v773 = vunpack.c.h.b16 %v729
      %v774 = vunpack.c.l.b16 %v730
      %v775 = vunpack.c.h.b16 %v730
      %v776 = vunpack.c.l.b16 %v731
      %v777 = vunpack.c.h.b16 %v731
      %v778 = vunpack.c.l.b16 %v732
      %v779 = vunpack.c.h.b16 %v732
      %v780 = vunpack.c.l.b16 %v733
      %v781 = vunpack.c.h.b16 %v733
      %v782 = vpack.c.b16 %v752, %v750
      %v783 = vpack.c.b16 %v753, %v751
      %v784 = vpack.c.b16 %v756, %v754
      %v785 = vpack.c.b16 %v757, %v755
      %v786 = vpack.c.b16 %v760, %v758
      %v787 = vpack.c.b16 %v761, %v759
      %v788 = vpack.c.b16 %v764, %v762
      %v789 = vpack.c.b16 %v765, %v763
      %v790 = vpack.c.b16 %v768, %v766
      %v791 = vpack.c.b16 %v769, %v767
      %v792 = vpack.c.b16 %v772, %v770
      %v793 = vpack.c.b16 %v773, %v771
      %v794 = vpack.c.b16 %v776, %v774
      %v795 = vpack.c.b16 %v777, %v775
      %v796 = vpack.c.b16 %v780, %v778
      %v797 = vpack.c.b16 %v781, %v779
      %814 = vmatprep.subr.bf16.mxu0 %v783
      %815 = vmatpush1.bf16.msra.mxu0 %v782
      %816 = vmatprep.subr.bf16.mxu0 %v785
      %817 = vmatpush1.bf16.msra.mxu0 %v784
      %818 = vmatprep.subr.bf16.mxu0 %v787
      %819 = vmatpush1.bf16.msra.mxu0 %v786
      %820 = vmatprep.subr.bf16.mxu0 %v789
      %821 = vmatpush1.bf16.msra.mxu0 %v788
      %822 = vmatprep.subr.bf16.mxu0 %v791
      %823 = vmatpush1.bf16.msra.mxu0 %v790
      %824 = vmatprep.subr.bf16.mxu0 %v793
      %825 = vmatpush1.bf16.msra.mxu0 %v792
      %826 = vmatprep.subr.bf16.mxu0 %v795
      %827 = vmatpush1.bf16.msra.mxu0 %v794
      %828 = vmatprep.subr.bf16.mxu0 %v797
      %829 = vmatpush1.bf16.msra.mxu0 %v796
      %830 = vmatprep.subr.bf16.mxu0 0
      %831 = vmatpush1.bf16.msra.mxu0 0
      %832 = vmatprep.subr.bf16.mxu0 0
      %833 = vmatpush1.bf16.msra.mxu0 0
      %834 = vmatprep.subr.bf16.mxu0 0
      %835 = vmatpush1.bf16.msra.mxu0 0
      %836 = vmatprep.subr.bf16.mxu0 0
      %837 = vmatpush1.bf16.msra.mxu0 0
      %838 = vmatprep.subr.bf16.mxu0 0
      %839 = vmatpush1.bf16.msra.mxu0 0
      %840 = vmatprep.subr.bf16.mxu0 0
      %841 = vmatpush1.bf16.msra.mxu0 0
      %842 = vmatprep.subr.bf16.mxu0 0
      %843 = vmatpush1.bf16.msra.mxu0 0
      %844 = vmatprep.subr.bf16.mxu0 0
      %845 = vmatpush1.bf16.msra.mxu0 0
      %846 = vmatprep.mubr.bf16.mxu0 0
      %847 = vmatmul.mubr.bf16.gmra.mrb[0].mxu0 %v605
      %v848 = vpop.f32.mrb[0].mxu0
      %v849 = vadd.f32 0.0, %v848
      %v850 = vpop.f32.mrb[0].mxu0
      %v851 = vadd.f32 0.0, %v850
      %v852 = vpop.f32.mrb[0].mxu0
      %v853 = vpop.f32.mrb[0].mxu0
      %854 = vdwg.mxu0
      %v953 = vunpack.c.l.b16 %v620
      %v954 = vunpack.c.h.b16 %v620
      %v955 = vunpack.c.l.b16 %v621
      %v956 = vunpack.c.h.b16 %v621
      %v957 = vunpack.c.l.b16 %v622
      %v958 = vunpack.c.h.b16 %v622
      %v959 = vunpack.c.l.b16 %v623
      %v960 = vunpack.c.h.b16 %v623
      %v961 = vunpack.c.l.b16 %v624
      %v962 = vunpack.c.h.b16 %v624
      %v963 = vunpack.c.l.b16 %v625
      %v964 = vunpack.c.h.b16 %v625
      %v965 = vunpack.c.l.b16 %v626
      %v966 = vunpack.c.h.b16 %v626
      %v967 = vunpack.c.l.b16 %v627
      %v968 = vunpack.c.h.b16 %v627
      %v969 = vunpack.c.l.b16 %v628
      %v970 = vunpack.c.h.b16 %v628
      %v971 = vunpack.c.l.b16 %v629
      %v972 = vunpack.c.h.b16 %v629
      %v973 = vunpack.c.l.b16 %v630
      %v974 = vunpack.c.h.b16 %v630
      %v975 = vunpack.c.l.b16 %v631
      %v976 = vunpack.c.h.b16 %v631
      %v977 = vunpack.c.l.b16 %v632
      %v978 = vunpack.c.h.b16 %v632
      %v979 = vunpack.c.l.b16 %v633
      %v980 = vunpack.c.h.b16 %v633
      %v981 = vunpack.c.l.b16 %v634
      %v982 = vunpack.c.h.b16 %v634
      %v983 = vunpack.c.l.b16 %v635
      %v984 = vunpack.c.h.b16 %v635
      %v985 = vunpack.c.l.b16 %v636
      %v986 = vunpack.c.h.b16 %v636
      %v987 = vunpack.c.l.b16 %v637
      %v988 = vunpack.c.h.b16 %v637
      %v989 = vunpack.c.l.b16 %v638
      %v990 = vunpack.c.h.b16 %v638
      %v991 = vunpack.c.l.b16 %v639
      %v992 = vunpack.c.h.b16 %v639
      %v993 = vunpack.c.l.b16 %v640
      %v994 = vunpack.c.h.b16 %v640
      %v995 = vunpack.c.l.b16 %v641
      %v996 = vunpack.c.h.b16 %v641
      %v997 = vunpack.c.l.b16 %v642
      %v998 = vunpack.c.h.b16 %v642
      %v999 = vunpack.c.l.b16 %v643
      %v1000 = vunpack.c.h.b16 %v643
      %v1001 = vunpack.c.l.b16 %v644
      %v1002 = vunpack.c.h.b16 %v644
      %v1003 = vunpack.c.l.b16 %v645
      %v1004 = vunpack.c.h.b16 %v645
      %v1005 = vunpack.c.l.b16 %v646
      %v1006 = vunpack.c.h.b16 %v646
      %v1007 = vunpack.c.l.b16 %v647
      %v1008 = vunpack.c.h.b16 %v647
      %v1009 = vunpack.c.l.b16 %v648
      %v1010 = vunpack.c.h.b16 %v648
      %v1011 = vunpack.c.l.b16 %v649
      %v1012 = vunpack.c.h.b16 %v649
      %v1013 = vunpack.c.l.b16 %v650
      %v1014 = vunpack.c.h.b16 %v650
      %v1015 = vunpack.c.l.b16 %v651
      %v1016 = vunpack.c.h.b16 %v651
      %v1017 = vunpack.c.l.b16 %v652
      %v1018 = vunpack.c.h.b16 %v652
      %v1019 = vunpack.c.l.b16 %v653
      %v1020 = vunpack.c.h.b16 %v653
      %v1021 = vunpack.c.l.b16 %v654
      %v1022 = vunpack.c.h.b16 %v654
      %v1023 = vunpack.c.l.b16 %v655
      %v1024 = vunpack.c.h.b16 %v655
      %v1025 = vunpack.c.l.b16 %v656
      %v1026 = vunpack.c.h.b16 %v656
      %v1027 = vunpack.c.l.b16 %v657
      %v1028 = vunpack.c.h.b16 %v657
      %v1029 = vunpack.c.l.b16 %v658
      %v1030 = vunpack.c.h.b16 %v658
      %v1031 = vunpack.c.l.b16 %v659
      %v1032 = vunpack.c.h.b16 %v659
      %v1033 = vunpack.c.l.b16 %v660
      %v1034 = vunpack.c.h.b16 %v660
      %v1035 = vunpack.c.l.b16 %v661
      %v1036 = vunpack.c.h.b16 %v661
      %v1037 = vunpack.c.l.b16 %v662
      %v1038 = vunpack.c.h.b16 %v662
      %v1039 = vunpack.c.l.b16 %v663
      %v1040 = vunpack.c.h.b16 %v663
      %v1041 = vunpack.c.l.b16 %v664
      %v1042 = vunpack.c.h.b16 %v664
      %v1043 = vunpack.c.l.b16 %v665
      %v1044 = vunpack.c.h.b16 %v665
      %v1045 = vunpack.c.l.b16 %v666
      %v1046 = vunpack.c.h.b16 %v666
      %v1047 = vunpack.c.l.b16 %v667
      %v1048 = vunpack.c.h.b16 %v667
      %v1049 = vunpack.c.l.b16 %v668
      %v1050 = vunpack.c.h.b16 %v668
      %v1051 = vunpack.c.l.b16 %v669
      %v1052 = vunpack.c.h.b16 %v669
      %v1053 = vunpack.c.l.b16 %v670
      %v1054 = vunpack.c.h.b16 %v670
      %v1055 = vunpack.c.l.b16 %v671
      %v1056 = vunpack.c.h.b16 %v671
      %v1057 = vunpack.c.l.b16 %v672
      %v1058 = vunpack.c.h.b16 %v672
      %v1059 = vunpack.c.l.b16 %v673
      %v1060 = vunpack.c.h.b16 %v673
      %v1061 = vunpack.c.l.b16 %v674
      %v1062 = vunpack.c.h.b16 %v674
      %v1063 = vunpack.c.l.b16 %v675
      %v1064 = vunpack.c.h.b16 %v675
      %v1065 = vunpack.c.l.b16 %v676
      %v1066 = vunpack.c.h.b16 %v676
      %v1067 = vunpack.c.l.b16 %v677
      %v1068 = vunpack.c.h.b16 %v677
      %v1069 = vunpack.c.l.b16 %v678
      %v1070 = vunpack.c.h.b16 %v678
      %v1071 = vunpack.c.l.b16 %v679
      %v1072 = vunpack.c.h.b16 %v679
      %v1073 = vunpack.c.l.b16 %v680
      %v1074 = vunpack.c.h.b16 %v680
      %v1075 = vunpack.c.l.b16 %v681
      %v1076 = vunpack.c.h.b16 %v681
      %v1077 = vunpack.c.l.b16 %v682
      %v1078 = vunpack.c.h.b16 %v682
      %v1079 = vunpack.c.l.b16 %v683
      %v1080 = vunpack.c.h.b16 %v683
      %v1081 = vunpack.c.l.b16 %v684
      %v1082 = vunpack.c.h.b16 %v684
      %v1083 = vunpack.c.l.b16 %v685
      %v1084 = vunpack.c.h.b16 %v685
      %v1085 = vunpack.c.l.b16 %v686
      %v1086 = vunpack.c.h.b16 %v686
      %v1087 = vunpack.c.l.b16 %v687
      %v1088 = vunpack.c.h.b16 %v687
      %v1089 = vunpack.c.l.b16 %v688
      %v1090 = vunpack.c.h.b16 %v688
      %v1091 = vunpack.c.l.b16 %v689
      %v1092 = vunpack.c.h.b16 %v689
      %v1093 = vunpack.c.l.b16 %v690
      %v1094 = vunpack.c.h.b16 %v690
      %v1095 = vunpack.c.l.b16 %v691
      %v1096 = vunpack.c.h.b16 %v691
      %v1097 = vunpack.c.l.b16 %v692
      %v1098 = vunpack.c.h.b16 %v692
      %v1099 = vunpack.c.l.b16 %v693
      %v1100 = vunpack.c.h.b16 %v693
      %v1101 = vunpack.c.l.b16 %v694
      %v1102 = vunpack.c.h.b16 %v694
      %v1103 = vunpack.c.l.b16 %v695
      %v1104 = vunpack.c.h.b16 %v695
      %v1105 = vunpack.c.l.b16 %v696
      %v1106 = vunpack.c.h.b16 %v696
      %v1107 = vunpack.c.l.b16 %v697
      %v1108 = vunpack.c.h.b16 %v697
      %v1109 = vunpack.c.l.b16 %v698
      %v1110 = vunpack.c.h.b16 %v698
      %v1111 = vunpack.c.l.b16 %v699
      %v1112 = vunpack.c.h.b16 %v699
      %v1113 = vunpack.c.l.b16 %v700
      %v1114 = vunpack.c.h.b16 %v700
      %v1115 = vunpack.c.l.b16 %v701
      %v1116 = vunpack.c.h.b16 %v701
      %v1117 = vunpack.c.l.b16 %v702
      %v1118 = vunpack.c.h.b16 %v702
      %v1119 = vunpack.c.l.b16 %v703
      %v1120 = vunpack.c.h.b16 %v703
      %v1121 = vunpack.c.l.b16 %v704
      %v1122 = vunpack.c.h.b16 %v704
      %v1123 = vunpack.c.l.b16 %v705
      %v1124 = vunpack.c.h.b16 %v705
      %v1125 = vunpack.c.l.b16 %v706
      %v1126 = vunpack.c.h.b16 %v706
      %v1127 = vunpack.c.l.b16 %v707
      %v1128 = vunpack.c.h.b16 %v707
      %v1129 = vunpack.c.l.b16 %v708
      %v1130 = vunpack.c.h.b16 %v708
      %v1131 = vunpack.c.l.b16 %v709
      %v1132 = vunpack.c.h.b16 %v709
      %v1133 = vunpack.c.l.b16 %v710
      %v1134 = vunpack.c.h.b16 %v710
      %v1135 = vunpack.c.l.b16 %v711
      %v1136 = vunpack.c.h.b16 %v711
      %v1137 = vunpack.c.l.b16 %v712
      %v1138 = vunpack.c.h.b16 %v712
      %v1139 = vunpack.c.l.b16 %v713
      %v1140 = vunpack.c.h.b16 %v713
      %v1141 = vunpack.c.l.b16 %v714
      %v1142 = vunpack.c.h.b16 %v714
      %v1143 = vunpack.c.l.b16 %v715
      %v1144 = vunpack.c.h.b16 %v715
      %v1145 = vunpack.c.l.b16 %v716
      %v1146 = vunpack.c.h.b16 %v716
      %v1147 = vunpack.c.l.b16 %v717
      %v1148 = vunpack.c.h.b16 %v717
      %v1149 = vpack.c.b16 %v955, %v953
      %v1150 = vpack.c.b16 %v956, %v954
      %v1151 = vpack.c.b16 %v959, %v957
      %v1152 = vpack.c.b16 %v960, %v958
      %v1153 = vpack.c.b16 %v963, %v961
      %v1154 = vpack.c.b16 %v964, %v962
      %v1155 = vpack.c.b16 %v967, %v965
      %v1156 = vpack.c.b16 %v968, %v966
      %v1157 = vpack.c.b16 %v971, %v969
      %v1158 = vpack.c.b16 %v972, %v970
      %v1159 = vpack.c.b16 %v975, %v973
      %v1160 = vpack.c.b16 %v976, %v974
      %v1161 = vpack.c.b16 %v979, %v977
      %v1162 = vpack.c.b16 %v980, %v978
      %v1163 = vpack.c.b16 %v983, %v981
      %v1164 = vpack.c.b16 %v984, %v982
      %v1165 = vpack.c.b16 %v987, %v985
      %v1166 = vpack.c.b16 %v988, %v986
      %v1167 = vpack.c.b16 %v991, %v989
      %v1168 = vpack.c.b16 %v992, %v990
      %v1169 = vpack.c.b16 %v995, %v993
      %v1170 = vpack.c.b16 %v996, %v994
      %v1171 = vpack.c.b16 %v999, %v997
      %v1172 = vpack.c.b16 %v1000, %v998
      %v1173 = vpack.c.b16 %v1003, %v1001
      %v1174 = vpack.c.b16 %v1004, %v1002
      %v1175 = vpack.c.b16 %v1007, %v1005
      %v1176 = vpack.c.b16 %v1008, %v1006
      %v1177 = vpack.c.b16 %v1011, %v1009
      %v1178 = vpack.c.b16 %v1012, %v1010
      %v1179 = vpack.c.b16 %v1015, %v1013
      %v1180 = vpack.c.b16 %v1016, %v1014
      %v1181 = vpack.c.b16 %v1019, %v1017
      %v1182 = vpack.c.b16 %v1020, %v1018
      %v1183 = vpack.c.b16 %v1023, %v1021
      %v1184 = vpack.c.b16 %v1024, %v1022
      %v1185 = vpack.c.b16 %v1027, %v1025
      %v1186 = vpack.c.b16 %v1028, %v1026
      %v1187 = vpack.c.b16 %v1031, %v1029
      %v1188 = vpack.c.b16 %v1032, %v1030
      %v1189 = vpack.c.b16 %v1035, %v1033
      %v1190 = vpack.c.b16 %v1036, %v1034
      %v1191 = vpack.c.b16 %v1039, %v1037
      %v1192 = vpack.c.b16 %v1040, %v1038
      %v1193 = vpack.c.b16 %v1043, %v1041
      %v1194 = vpack.c.b16 %v1044, %v1042
      %v1195 = vpack.c.b16 %v1047, %v1045
      %v1196 = vpack.c.b16 %v1048, %v1046
      %v1197 = vpack.c.b16 %v1051, %v1049
      %v1198 = vpack.c.b16 %v1052, %v1050
      %v1199 = vpack.c.b16 %v1055, %v1053
      %v1200 = vpack.c.b16 %v1056, %v1054
      %v1201 = vpack.c.b16 %v1059, %v1057
      %v1202 = vpack.c.b16 %v1060, %v1058
      %v1203 = vpack.c.b16 %v1063, %v1061
      %v1204 = vpack.c.b16 %v1064, %v1062
      %v1205 = vpack.c.b16 %v1067, %v1065
      %v1206 = vpack.c.b16 %v1068, %v1066
      %v1207 = vpack.c.b16 %v1071, %v1069
      %v1208 = vpack.c.b16 %v1072, %v1070
      %v1209 = vpack.c.b16 %v1075, %v1073
      %v1210 = vpack.c.b16 %v1076, %v1074
      %v1211 = vpack.c.b16 %v1079, %v1077
      %v1212 = vpack.c.b16 %v1080, %v1078
      %v1213 = vpack.c.b16 %v1083, %v1081
      %v1214 = vpack.c.b16 %v1084, %v1082
      %v1215 = vpack.c.b16 %v1087, %v1085
      %v1216 = vpack.c.b16 %v1088, %v1086
      %v1217 = vpack.c.b16 %v1091, %v1089
      %v1218 = vpack.c.b16 %v1092, %v1090
      %v1219 = vpack.c.b16 %v1095, %v1093
      %v1220 = vpack.c.b16 %v1096, %v1094
      %v1221 = vpack.c.b16 %v1099, %v1097
      %v1222 = vpack.c.b16 %v1100, %v1098
      %v1223 = vpack.c.b16 %v1103, %v1101
      %v1224 = vpack.c.b16 %v1104, %v1102
      %v1225 = vpack.c.b16 %v1107, %v1105
      %v1226 = vpack.c.b16 %v1108, %v1106
      %v1227 = vpack.c.b16 %v1111, %v1109
      %v1228 = vpack.c.b16 %v1112, %v1110
      %v1229 = vpack.c.b16 %v1115, %v1113
      %v1230 = vpack.c.b16 %v1116, %v1114
      %v1231 = vpack.c.b16 %v1119, %v1117
      %v1232 = vpack.c.b16 %v1120, %v1118
      %v1233 = vpack.c.b16 %v1123, %v1121
      %v1234 = vpack.c.b16 %v1124, %v1122
      %v1235 = vpack.c.b16 %v1127, %v1125
      %v1236 = vpack.c.b16 %v1128, %v1126
      %v1237 = vpack.c.b16 %v1131, %v1129
      %v1238 = vpack.c.b16 %v1132, %v1130
      %v1239 = vpack.c.b16 %v1135, %v1133
      %v1240 = vpack.c.b16 %v1136, %v1134
      %v1241 = vpack.c.b16 %v1139, %v1137
      %v1242 = vpack.c.b16 %v1140, %v1138
      %v1243 = vpack.c.b16 %v1143, %v1141
      %v1244 = vpack.c.b16 %v1144, %v1142
      %v1245 = vpack.c.b16 %v1147, %v1145
      %v1246 = vpack.c.b16 %v1148, %v1146
      %vm1345 = vcmask 130048
      %v1347 = vsel %vm1345, %v619, 0
      %1349 = vmatprep.subr.bf16.mxu0 %v1150
      %1350 = vmatpush1.bf16.msra.mxu0 %v1149
      %1351 = vmatprep.subr.bf16.mxu0 %v1152
      %1352 = vmatpush1.bf16.msra.mxu0 %v1151
      %1353 = vmatprep.subr.bf16.mxu0 %v1154
      %1354 = vmatpush1.bf16.msra.mxu0 %v1153
      %1355 = vmatprep.subr.bf16.mxu0 %v1156
      %1356 = vmatpush1.bf16.msra.mxu0 %v1155
      %1357 = vmatprep.subr.bf16.mxu0 %v1158
      %1358 = vmatpush1.bf16.msra.mxu0 %v1157
      %1359 = vmatprep.subr.bf16.mxu0 %v1160
      %1360 = vmatpush1.bf16.msra.mxu0 %v1159
      %1361 = vmatprep.subr.bf16.mxu0 %v1162
      %1362 = vmatpush1.bf16.msra.mxu0 %v1161
      %1363 = vmatprep.subr.bf16.mxu0 %v1164
      %1364 = vmatpush1.bf16.msra.mxu0 %v1163
      %1365 = vmatprep.subr.bf16.mxu0 %v1166
      %1366 = vmatpush1.bf16.msra.mxu0 %v1165
      %1367 = vmatprep.subr.bf16.mxu0 %v1168
      %1368 = vmatpush1.bf16.msra.mxu0 %v1167
      %1369 = vmatprep.subr.bf16.mxu0 %v1170
      %1370 = vmatpush1.bf16.msra.mxu0 %v1169
      %1371 = vmatprep.subr.bf16.mxu0 %v1172
      %1372 = vmatpush1.bf16.msra.mxu0 %v1171
      %1373 = vmatprep.subr.bf16.mxu0 %v1174
      %1374 = vmatpush1.bf16.msra.mxu0 %v1173
      %1375 = vmatprep.subr.bf16.mxu0 %v1176
      %1376 = vmatpush1.bf16.msra.mxu0 %v1175
      %1377 = vmatprep.subr.bf16.mxu0 %v1178
      %1378 = vmatpush1.bf16.msra.mxu0 %v1177
      %1379 = vmatprep.subr.bf16.mxu0 %v1180
      %1380 = vmatpush1.bf16.msra.mxu0 %v1179
      %1381 = vmatprep.mubr.bf16.mxu0 %v614
      %1382 = vmatmul.mubr.bf16.gmra.mrb[0].mxu0 %v613
      %v1383 = vpop.f32.mrb[0].mxu0
      %v1384 = vadd.f32 %v849, %v1383
      %v1385 = vpop.f32.mrb[0].mxu0
      %v1386 = vadd.f32 %v851, %v1385
      %v1387 = vpop.f32.mrb[0].mxu0
      %v1388 = vpop.f32.mrb[0].mxu0
      %1389 = vdwg.mxu0
      %1390 = vmatprep.subr.bf16.mxu0 %v1182
      %1391 = vmatpush1.bf16.msra.mxu0 %v1181
      %1392 = vmatprep.subr.bf16.mxu0 %v1184
      %1393 = vmatpush1.bf16.msra.mxu0 %v1183
      %1394 = vmatprep.subr.bf16.mxu0 %v1186
      %1395 = vmatpush1.bf16.msra.mxu0 %v1185
      %1396 = vmatprep.subr.bf16.mxu0 %v1188
      %1397 = vmatpush1.bf16.msra.mxu0 %v1187
      %1398 = vmatprep.subr.bf16.mxu0 %v1190
      %1399 = vmatpush1.bf16.msra.mxu0 %v1189
      %1400 = vmatprep.subr.bf16.mxu0 %v1192
      %1401 = vmatpush1.bf16.msra.mxu0 %v1191
      %1402 = vmatprep.subr.bf16.mxu0 %v1194
      %1403 = vmatpush1.bf16.msra.mxu0 %v1193
      %1404 = vmatprep.subr.bf16.mxu0 %v1196
      %1405 = vmatpush1.bf16.msra.mxu0 %v1195
      %1406 = vmatprep.subr.bf16.mxu0 %v1198
      %1407 = vmatpush1.bf16.msra.mxu0 %v1197
      %1408 = vmatprep.subr.bf16.mxu0 %v1200
      %1409 = vmatpush1.bf16.msra.mxu0 %v1199
      %1410 = vmatprep.subr.bf16.mxu0 %v1202
      %1411 = vmatpush1.bf16.msra.mxu0 %v1201
      %1412 = vmatprep.subr.bf16.mxu0 %v1204
      %1413 = vmatpush1.bf16.msra.mxu0 %v1203
      %1414 = vmatprep.subr.bf16.mxu0 %v1206
      %1415 = vmatpush1.bf16.msra.mxu0 %v1205
      %1416 = vmatprep.subr.bf16.mxu0 %v1208
      %1417 = vmatpush1.bf16.msra.mxu0 %v1207
      %1418 = vmatprep.subr.bf16.mxu0 %v1210
      %1419 = vmatpush1.bf16.msra.mxu0 %v1209
      %1420 = vmatprep.subr.bf16.mxu0 %v1212
      %1421 = vmatpush1.bf16.msra.mxu0 %v1211
      %1422 = vmatprep.mubr.bf16.mxu0 %v616
      %1423 = vmatmul.mubr.bf16.gmra.mrb[0].mxu0 %v615
      %v1424 = vpop.f32.mrb[0].mxu0
      %v1425 = vadd.f32 %v1384, %v1424
      %v1426 = vpop.f32.mrb[0].mxu0
      %v1427 = vadd.f32 %v1386, %v1426
      %v1428 = vpop.f32.mrb[0].mxu0
      %v1429 = vpop.f32.mrb[0].mxu0
      %1430 = vdwg.mxu0
      %1431 = vmatprep.subr.bf16.mxu0 %v1214
      %1432 = vmatpush1.bf16.msra.mxu0 %v1213
      %1433 = vmatprep.subr.bf16.mxu0 %v1216
      %1434 = vmatpush1.bf16.msra.mxu0 %v1215
      %1435 = vmatprep.subr.bf16.mxu0 %v1218
      %1436 = vmatpush1.bf16.msra.mxu0 %v1217
      %1437 = vmatprep.subr.bf16.mxu0 %v1220
      %1438 = vmatpush1.bf16.msra.mxu0 %v1219
      %1439 = vmatprep.subr.bf16.mxu0 %v1222
      %1440 = vmatpush1.bf16.msra.mxu0 %v1221
      %1441 = vmatprep.subr.bf16.mxu0 %v1224
      %1442 = vmatpush1.bf16.msra.mxu0 %v1223
      %1443 = vmatprep.subr.bf16.mxu0 %v1226
      %1444 = vmatpush1.bf16.msra.mxu0 %v1225
      %1445 = vmatprep.subr.bf16.mxu0 %v1228
      %1446 = vmatpush1.bf16.msra.mxu0 %v1227
      %1447 = vmatprep.subr.bf16.mxu0 %v1230
      %1448 = vmatpush1.bf16.msra.mxu0 %v1229
      %1449 = vmatprep.subr.bf16.mxu0 %v1232
      %1450 = vmatpush1.bf16.msra.mxu0 %v1231
      %1451 = vmatprep.subr.bf16.mxu0 %v1234
      %1452 = vmatpush1.bf16.msra.mxu0 %v1233
      %1453 = vmatprep.subr.bf16.mxu0 %v1236
      %1454 = vmatpush1.bf16.msra.mxu0 %v1235
      %1455 = vmatprep.subr.bf16.mxu0 %v1238
      %1456 = vmatpush1.bf16.msra.mxu0 %v1237
      %1457 = vmatprep.subr.bf16.mxu0 %v1240
      %1458 = vmatpush1.bf16.msra.mxu0 %v1239
      %1459 = vmatprep.subr.bf16.mxu0 %v1242
      %1460 = vmatpush1.bf16.msra.mxu0 %v1241
      %1461 = vmatprep.subr.bf16.mxu0 %v1244
      %1462 = vmatpush1.bf16.msra.mxu0 %v1243
      %1463 = vmatprep.mubr.bf16.mxu0 %v618
      %1464 = vmatmul.mubr.bf16.gmra.mrb[0].mxu0 %v617
      %v1465 = vpop.f32.mrb[0].mxu0
      %v1466 = vadd.f32 %v1425, %v1465
      %v1467 = vpop.f32.mrb[0].mxu0
      %v1468 = vadd.f32 %v1427, %v1467
      %v1469 = vpop.f32.mrb[0].mxu0
      %v1470 = vpop.f32.mrb[0].mxu0
      %1471 = vdwg.mxu0
      %1472 = vmatprep.subr.bf16.mxu0 %v1246
      %1473 = vmatpush1.bf16.msra.mxu0 %v1245
      %1474 = vmatprep.subr.bf16.mxu0 0
      %1475 = vmatpush1.bf16.msra.mxu0 0
      %1476 = vmatprep.subr.bf16.mxu0 0
      %1477 = vmatpush1.bf16.msra.mxu0 0
      %1478 = vmatprep.subr.bf16.mxu0 0
      %1479 = vmatpush1.bf16.msra.mxu0 0
      %1480 = vmatprep.subr.bf16.mxu0 0
      %1481 = vmatpush1.bf16.msra.mxu0 0
      %1482 = vmatprep.subr.bf16.mxu0 0
      %1483 = vmatpush1.bf16.msra.mxu0 0
      %1484 = vmatprep.subr.bf16.mxu0 0
      %1485 = vmatpush1.bf16.msra.mxu0 0
      %1486 = vmatprep.subr.bf16.mxu0 0
      %1487 = vmatpush1.bf16.msra.mxu0 0
      %1488 = vmatprep.subr.bf16.mxu0 0
      %1489 = vmatpush1.bf16.msra.mxu0 0
      %1490 = vmatprep.subr.bf16.mxu0 0
      %1491 = vmatpush1.bf16.msra.mxu0 0
      %1492 = vmatprep.subr.bf16.mxu0 0
      %1493 = vmatpush1.bf16.msra.mxu0 0
      %1494 = vmatprep.subr.bf16.mxu0 0
      %1495 = vmatpush1.bf16.msra.mxu0 0
      %1496 = vmatprep.subr.bf16.mxu0 0
      %1497 = vmatpush1.bf16.msra.mxu0 0
      %1498 = vmatprep.subr.bf16.mxu0 0
      %1499 = vmatpush1.bf16.msra.mxu0 0
      %1500 = vmatprep.subr.bf16.mxu0 0
      %1501 = vmatpush1.bf16.msra.mxu0 0
      %1502 = vmatprep.subr.bf16.mxu0 0
      %1503 = vmatpush1.bf16.msra.mxu0 0
      %1504 = vmatprep.mubr.bf16.mxu0 0
      %1505 = vmatmul.mubr.bf16.gmra.mrb[0].mxu0 %v1347
      %v1506 = vpop.f32.mrb[0].mxu0
      %v1507 = vadd.f32 %v1466, %v1506
      %v1508 = vpop.f32.mrb[0].mxu0
      %v1509 = vadd.f32 %v1468, %v1508
      %v1510 = vpop.f32.mrb[0].mxu0
      %v1511 = vpop.f32.mrb[0].mxu0
      %1512 = vdwg.mxu0
      %v1513 = vld [vmem:[%s5] sm:$0x3]
      %v1515 = vlaneseq
      %v1516 = vshrl.u32 %v1515, 7
      %v1517 = vsub.s32 0, %v1516
      %v1518 = vrot.slane %v1513, %v1517
      %v1519 = vlaneseq
      %v1520 = vshrl.u32 %v1519, 7
      %v1521 = vsub.s32 1, %v1520
      %v1522 = vrot.slane %v1513, %v1521
      %v1525 = vadd.f32 %v1507, %v1518
      %v1526 = vadd.f32 %v1509, %v1522
      %v1527 = vmul.f32 %v1525, 0.01
      %v1528 = vmul.f32 %v1526, 0.01
      %v1529 = vmax.f32 %v1525, %v1527
      %v1530 = vmax.f32 %v1526, %v1528
      %v1531 = vpack.c.bf16 %v1529, %v1529
      %v1532 = vpack.c.bf16 %v1530, %v1530
      %v1533 = vld [vmem:[%s6] sm:$0xff]
      %v1534 = vld [vmem:[%s6 + $0x8] sm:$0xff]
      %v1535 = vld [vmem:[%s6 + $0x10] sm:$0xff]
      %v1536 = vld [vmem:[%s6 + $0x18] sm:$0xff]
      %v1537 = vld [vmem:[%s6 + $0x20] sm:$0xff]
      %v1538 = vld [vmem:[%s6 + $0x28] sm:$0xff]
      %v1539 = vld [vmem:[%s6 + $0x30] sm:$0xff]
      %v1540 = vld [vmem:[%s6 + $0x38] sm:$0xff]
      %v1541 = vld [vmem:[%s6 + $0x40] sm:$0xff]
      %v1542 = vld [vmem:[%s6 + $0x48] sm:$0xff]
      %v1543 = vld [vmem:[%s6 + $0x50] sm:$0xff]
      %v1544 = vld [vmem:[%s6 + $0x58] sm:$0xff]
      %v1545 = vld [vmem:[%s6 + $0x60] sm:$0xff]
      %v1546 = vld [vmem:[%s6 + $0x68] sm:$0xff]
      %v1547 = vld [vmem:[%s6 + $0x70] sm:$0xff]
      %v1548 = vld [vmem:[%s6 + $0x78] sm:$0xff]
      %v1549 = vld [vmem:[%s6 + $0x80] sm:$0xff]
      %v1550 = vld [vmem:[%s6 + $0x88] sm:$0xff]
      %v1551 = vld [vmem:[%s6 + $0x90] sm:$0xff]
      %v1552 = vld [vmem:[%s6 + $0x98] sm:$0xff]
      %v1553 = vld [vmem:[%s6 + $0xa0] sm:$0xff]
      %v1554 = vld [vmem:[%s6 + $0xa8] sm:$0xff]
      %v1555 = vld [vmem:[%s6 + $0xb0] sm:$0xff]
      %v1556 = vld [vmem:[%s6 + $0xb8] sm:$0xff]
      %v1557 = vld [vmem:[%s6 + $0xc0] sm:$0xff]
      %v1558 = vld [vmem:[%s6 + $0xc8] sm:$0xff]
      %v1559 = vld [vmem:[%s6 + $0xd0] sm:$0xff]
      %v1560 = vld [vmem:[%s6 + $0xd8] sm:$0xff]
      %v1561 = vld [vmem:[%s6 + $0xe0] sm:$0xff]
      %v1562 = vld [vmem:[%s6 + $0xe8] sm:$0xff]
      %v1563 = vld [vmem:[%s6 + $0xf0] sm:$0xff]
      %v1564 = vld [vmem:[%s6 + $0xf8] sm:$0xff]
      %v1565 = vld [vmem:[%s6 + $0x100] sm:$0xff]
      %v1566 = vld [vmem:[%s6 + $0x108] sm:$0xff]
      %v1567 = vld [vmem:[%s6 + $0x110] sm:$0xff]
      %v1568 = vld [vmem:[%s6 + $0x118] sm:$0xff]
      %v1569 = vld [vmem:[%s6 + $0x120] sm:$0xff]
      %v1570 = vld [vmem:[%s6 + $0x128] sm:$0xff]
      %v1571 = vld [vmem:[%s6 + $0x130] sm:$0xff]
      %v1572 = vld [vmem:[%s6 + $0x138] sm:$0xff]
      %v1573 = vld [vmem:[%s6 + $0x140] sm:$0xff]
      %v1574 = vld [vmem:[%s6 + $0x148] sm:$0xff]
      %v1575 = vld [vmem:[%s6 + $0x150] sm:$0xff]
      %v1576 = vld [vmem:[%s6 + $0x158] sm:$0xff]
      %v1577 = vld [vmem:[%s6 + $0x160] sm:$0xff]
      %v1578 = vld [vmem:[%s6 + $0x168] sm:$0xff]
      %v1579 = vld [vmem:[%s6 + $0x170] sm:$0xff]
      %v1580 = vld [vmem:[%s6 + $0x178] sm:$0xff]
      %v1581 = vld [vmem:[%s6 + $0x180] sm:$0xff]
      %v1582 = vld [vmem:[%s6 + $0x188] sm:$0xff]
      %v1583 = vld [vmem:[%s6 + $0x190] sm:$0xff]
      %v1584 = vld [vmem:[%s6 + $0x198] sm:$0xff]
      %v1585 = vld [vmem:[%s6 + $0x1a0] sm:$0xff]
      %v1586 = vld [vmem:[%s6 + $0x1a8] sm:$0xff]
      %v1587 = vld [vmem:[%s6 + $0x1b0] sm:$0xff]
      %v1588 = vld [vmem:[%s6 + $0x1b8] sm:$0xff]
      %v1589 = vld [vmem:[%s6 + $0x1c0] sm:$0xff]
      %v1590 = vld [vmem:[%s6 + $0x1c8] sm:$0xff]
      %v1591 = vld [vmem:[%s6 + $0x1d0] sm:$0xff]
      %v1592 = vld [vmem:[%s6 + $0x1d8] sm:$0xff]
      %v1593 = vld [vmem:[%s6 + $0x1e0] sm:$0xff]
      %v1594 = vld [vmem:[%s6 + $0x1e8] sm:$0xff]
      %v1595 = vld [vmem:[%s6 + $0x1f0] sm:$0xff]
      %v1596 = vld [vmem:[%s6 + $0x1f8] sm:$0xff]
      %v1597 = vld [vmem:[%s7] sm:$0xf]
      %v1599 = vlaneseq
      %v1600 = vshrl.u32 %v1599, 7
      %v1601 = vsub.s32 0, %v1600
      %v1602 = vrot.slane %v1597, %v1601
      %v1603 = vlaneseq
      %v1604 = vshrl.u32 %v1603, 7
      %v1605 = vsub.s32 1, %v1604
      %v1606 = vrot.slane %v1597, %v1605
      %v1607 = vlaneseq
      %v1608 = vshrl.u32 %v1607, 7
      %v1609 = vsub.s32 2, %v1608
      %v1610 = vrot.slane %v1597, %v1609
      %v1611 = vlaneseq
      %v1612 = vshrl.u32 %v1611, 7
      %v1613 = vsub.s32 3, %v1612
      %v1614 = vrot.slane %v1597, %v1613
      %v1683 = vunpack.c.l.b16 %v1533
      %v1684 = vunpack.c.h.b16 %v1533
      %v1685 = vunpack.c.l.b16 %v1534
      %v1686 = vunpack.c.h.b16 %v1534
      %v1687 = vunpack.c.l.b16 %v1535
      %v1688 = vunpack.c.h.b16 %v1535
      %v1689 = vunpack.c.l.b16 %v1536
      %v1690 = vunpack.c.h.b16 %v1536
      %v1691 = vunpack.c.l.b16 %v1537
      %v1692 = vunpack.c.h.b16 %v1537
      %v1693 = vunpack.c.l.b16 %v1538
      %v1694 = vunpack.c.h.b16 %v1538
      %v1695 = vunpack.c.l.b16 %v1539
      %v1696 = vunpack.c.h.b16 %v1539
      %v1697 = vunpack.c.l.b16 %v1540
      %v1698 = vunpack.c.h.b16 %v1540
      %v1699 = vunpack.c.l.b16 %v1541
      %v1700 = vunpack.c.h.b16 %v1541
      %v1701 = vunpack.c.l.b16 %v1542
      %v1702 = vunpack.c.h.b16 %v1542
      %v1703 = vunpack.c.l.b16 %v1543
      %v1704 = vunpack.c.h.b16 %v1543
      %v1705 = vunpack.c.l.b16 %v1544
      %v1706 = vunpack.c.h.b16 %v1544
      %v1707 = vunpack.c.l.b16 %v1545
      %v1708 = vunpack.c.h.b16 %v1545
      %v1709 = vunpack.c.l.b16 %v1546
      %v1710 = vunpack.c.h.b16 %v1546
      %v1711 = vunpack.c.l.b16 %v1547
      %v1712 = vunpack.c.h.b16 %v1547
      %v1713 = vunpack.c.l.b16 %v1548
      %v1714 = vunpack.c.h.b16 %v1548
      %v1715 = vunpack.c.l.b16 %v1549
      %v1716 = vunpack.c.h.b16 %v1549
      %v1717 = vunpack.c.l.b16 %v1550
      %v1718 = vunpack.c.h.b16 %v1550
      %v1719 = vunpack.c.l.b16 %v1551
      %v1720 = vunpack.c.h.b16 %v1551
      %v1721 = vunpack.c.l.b16 %v1552
      %v1722 = vunpack.c.h.b16 %v1552
      %v1723 = vunpack.c.l.b16 %v1553
      %v1724 = vunpack.c.h.b16 %v1553
      %v1725 = vunpack.c.l.b16 %v1554
      %v1726 = vunpack.c.h.b16 %v1554
      %v1727 = vunpack.c.l.b16 %v1555
      %v1728 = vunpack.c.h.b16 %v1555
      %v1729 = vunpack.c.l.b16 %v1556
      %v1730 = vunpack.c.h.b16 %v1556
      %v1731 = vunpack.c.l.b16 %v1557
      %v1732 = vunpack.c.h.b16 %v1557
      %v1733 = vunpack.c.l.b16 %v1558
      %v1734 = vunpack.c.h.b16 %v1558
      %v1735 = vunpack.c.l.b16 %v1559
      %v1736 = vunpack.c.h.b16 %v1559
      %v1737 = vunpack.c.l.b16 %v1560
      %v1738 = vunpack.c.h.b16 %v1560
      %v1739 = vunpack.c.l.b16 %v1561
      %v1740 = vunpack.c.h.b16 %v1561
      %v1741 = vunpack.c.l.b16 %v1562
      %v1742 = vunpack.c.h.b16 %v1562
      %v1743 = vunpack.c.l.b16 %v1563
      %v1744 = vunpack.c.h.b16 %v1563
      %v1745 = vunpack.c.l.b16 %v1564
      %v1746 = vunpack.c.h.b16 %v1564
      %v1747 = vunpack.c.l.b16 %v1565
      %v1748 = vunpack.c.h.b16 %v1565
      %v1749 = vunpack.c.l.b16 %v1566
      %v1750 = vunpack.c.h.b16 %v1566
      %v1751 = vunpack.c.l.b16 %v1567
      %v1752 = vunpack.c.h.b16 %v1567
      %v1753 = vunpack.c.l.b16 %v1568
      %v1754 = vunpack.c.h.b16 %v1568
      %v1755 = vunpack.c.l.b16 %v1569
      %v1756 = vunpack.c.h.b16 %v1569
      %v1757 = vunpack.c.l.b16 %v1570
      %v1758 = vunpack.c.h.b16 %v1570
      %v1759 = vunpack.c.l.b16 %v1571
      %v1760 = vunpack.c.h.b16 %v1571
      %v1761 = vunpack.c.l.b16 %v1572
      %v1762 = vunpack.c.h.b16 %v1572
      %v1763 = vunpack.c.l.b16 %v1573
      %v1764 = vunpack.c.h.b16 %v1573
      %v1765 = vunpack.c.l.b16 %v1574
      %v1766 = vunpack.c.h.b16 %v1574
      %v1767 = vunpack.c.l.b16 %v1575
      %v1768 = vunpack.c.h.b16 %v1575
      %v1769 = vunpack.c.l.b16 %v1576
      %v1770 = vunpack.c.h.b16 %v1576
      %v1771 = vunpack.c.l.b16 %v1577
      %v1772 = vunpack.c.h.b16 %v1577
      %v1773 = vunpack.c.l.b16 %v1578
      %v1774 = vunpack.c.h.b16 %v1578
      %v1775 = vunpack.c.l.b16 %v1579
      %v1776 = vunpack.c.h.b16 %v1579
      %v1777 = vunpack.c.l.b16 %v1580
      %v1778 = vunpack.c.h.b16 %v1580
      %v1779 = vunpack.c.l.b16 %v1581
      %v1780 = vunpack.c.h.b16 %v1581
      %v1781 = vunpack.c.l.b16 %v1582
      %v1782 = vunpack.c.h.b16 %v1582
      %v1783 = vunpack.c.l.b16 %v1583
      %v1784 = vunpack.c.h.b16 %v1583
      %v1785 = vunpack.c.l.b16 %v1584
      %v1786 = vunpack.c.h.b16 %v1584
      %v1787 = vunpack.c.l.b16 %v1585
      %v1788 = vunpack.c.h.b16 %v1585
      %v1789 = vunpack.c.l.b16 %v1586
      %v1790 = vunpack.c.h.b16 %v1586
      %v1791 = vunpack.c.l.b16 %v1587
      %v1792 = vunpack.c.h.b16 %v1587
      %v1793 = vunpack.c.l.b16 %v1588
      %v1794 = vunpack.c.h.b16 %v1588
      %v1795 = vunpack.c.l.b16 %v1589
      %v1796 = vunpack.c.h.b16 %v1589
      %v1797 = vunpack.c.l.b16 %v1590
      %v1798 = vunpack.c.h.b16 %v1590
      %v1799 = vunpack.c.l.b16 %v1591
      %v1800 = vunpack.c.h.b16 %v1591
      %v1801 = vunpack.c.l.b16 %v1592
      %v1802 = vunpack.c.h.b16 %v1592
      %v1803 = vunpack.c.l.b16 %v1593
      %v1804 = vunpack.c.h.b16 %v1593
      %v1805 = vunpack.c.l.b16 %v1594
      %v1806 = vunpack.c.h.b16 %v1594
      %v1807 = vunpack.c.l.b16 %v1595
      %v1808 = vunpack.c.h.b16 %v1595
      %v1809 = vunpack.c.l.b16 %v1596
      %v1810 = vunpack.c.h.b16 %v1596
      %v1811 = vpack.c.b16 %v1687, %v1683
      %v1812 = vpack.c.b16 %v1688, %v1684
      %v1813 = vpack.c.b16 %v1689, %v1685
      %v1814 = vpack.c.b16 %v1690, %v1686
      %v1815 = vpack.c.b16 %v1695, %v1691
      %v1816 = vpack.c.b16 %v1696, %v1692
      %v1817 = vpack.c.b16 %v1697, %v1693
      %v1818 = vpack.c.b16 %v1698, %v1694
      %v1819 = vpack.c.b16 %v1703, %v1699
      %v1820 = vpack.c.b16 %v1704, %v1700
      %v1821 = vpack.c.b16 %v1705, %v1701
      %v1822 = vpack.c.b16 %v1706, %v1702
      %v1823 = vpack.c.b16 %v1711, %v1707
      %v1824 = vpack.c.b16 %v1712, %v1708
      %v1825 = vpack.c.b16 %v1713, %v1709
      %v1826 = vpack.c.b16 %v1714, %v1710
      %v1827 = vpack.c.b16 %v1719, %v1715
      %v1828 = vpack.c.b16 %v1720, %v1716
      %v1829 = vpack.c.b16 %v1721, %v1717
      %v1830 = vpack.c.b16 %v1722, %v1718
      %v1831 = vpack.c.b16 %v1727, %v1723
      %v1832 = vpack.c.b16 %v1728, %v1724
      %v1833 = vpack.c.b16 %v1729, %v1725
      %v1834 = vpack.c.b16 %v1730, %v1726
      %v1835 = vpack.c.b16 %v1735, %v1731
      %v1836 = vpack.c.b16 %v1736, %v1732
      %v1837 = vpack.c.b16 %v1737, %v1733
      %v1838 = vpack.c.b16 %v1738, %v1734
      %v1839 = vpack.c.b16 %v1743, %v1739
      %v1840 = vpack.c.b16 %v1744, %v1740
      %v1841 = vpack.c.b16 %v1745, %v1741
      %v1842 = vpack.c.b16 %v1746, %v1742
      %v1843 = vpack.c.b16 %v1751, %v1747
      %v1844 = vpack.c.b16 %v1752, %v1748
      %v1845 = vpack.c.b16 %v1753, %v1749
      %v1846 = vpack.c.b16 %v1754, %v1750
      %v1847 = vpack.c.b16 %v1759, %v1755
      %v1848 = vpack.c.b16 %v1760, %v1756
      %v1849 = vpack.c.b16 %v1761, %v1757
      %v1850 = vpack.c.b16 %v1762, %v1758
      %v1851 = vpack.c.b16 %v1767, %v1763
      %v1852 = vpack.c.b16 %v1768, %v1764
      %v1853 = vpack.c.b16 %v1769, %v1765
      %v1854 = vpack.c.b16 %v1770, %v1766
      %v1855 = vpack.c.b16 %v1775, %v1771
      %v1856 = vpack.c.b16 %v1776, %v1772
      %v1857 = vpack.c.b16 %v1777, %v1773
      %v1858 = vpack.c.b16 %v1778, %v1774
      %v1859 = vpack.c.b16 %v1783, %v1779
      %v1860 = vpack.c.b16 %v1784, %v1780
      %v1861 = vpack.c.b16 %v1785, %v1781
      %v1862 = vpack.c.b16 %v1786, %v1782
      %v1863 = vpack.c.b16 %v1791, %v1787
      %v1864 = vpack.c.b16 %v1792, %v1788
      %v1865 = vpack.c.b16 %v1793, %v1789
      %v1866 = vpack.c.b16 %v1794, %v1790
      %v1867 = vpack.c.b16 %v1799, %v1795
      %v1868 = vpack.c.b16 %v1800, %v1796
      %v1869 = vpack.c.b16 %v1801, %v1797
      %v1870 = vpack.c.b16 %v1802, %v1798
      %v1871 = vpack.c.b16 %v1807, %v1803
      %v1872 = vpack.c.b16 %v1808, %v1804
      %v1873 = vpack.c.b16 %v1809, %v1805
      %v1874 = vpack.c.b16 %v1810, %v1806
      %1939 = vmatprep.subr.bf16.mxu0 %v1812
      %1940 = vmatpush1.bf16.msra.mxu0 %v1811
      %1941 = vmatprep.subr.bf16.mxu0 %v1816
      %1942 = vmatpush1.bf16.msra.mxu0 %v1815
      %1943 = vmatprep.subr.bf16.mxu0 %v1820
      %1944 = vmatpush1.bf16.msra.mxu0 %v1819
      %1945 = vmatprep.subr.bf16.mxu0 %v1824
      %1946 = vmatpush1.bf16.msra.mxu0 %v1823
      %1947 = vmatprep.subr.bf16.mxu0 %v1828
      %1948 = vmatpush1.bf16.msra.mxu0 %v1827
      %1949 = vmatprep.subr.bf16.mxu0 %v1832
      %1950 = vmatpush1.bf16.msra.mxu0 %v1831
      %1951 = vmatprep.subr.bf16.mxu0 %v1836
      %1952 = vmatpush1.bf16.msra.mxu0 %v1835
      %1953 = vmatprep.subr.bf16.mxu0 %v1840
      %1954 = vmatpush1.bf16.msra.mxu0 %v1839
      %1955 = vmatprep.subr.bf16.mxu0 %v1844
      %1956 = vmatpush1.bf16.msra.mxu0 %v1843
      %1957 = vmatprep.subr.bf16.mxu0 %v1848
      %1958 = vmatpush1.bf16.msra.mxu0 %v1847
      %1959 = vmatprep.subr.bf16.mxu0 %v1852
      %1960 = vmatpush1.bf16.msra.mxu0 %v1851
      %1961 = vmatprep.subr.bf16.mxu0 %v1856
      %1962 = vmatpush1.bf16.msra.mxu0 %v1855
      %1963 = vmatprep.subr.bf16.mxu0 %v1860
      %1964 = vmatpush1.bf16.msra.mxu0 %v1859
      %1965 = vmatprep.subr.bf16.mxu0 %v1864
      %1966 = vmatpush1.bf16.msra.mxu0 %v1863
      %1967 = vmatprep.subr.bf16.mxu0 %v1868
      %1968 = vmatpush1.bf16.msra.mxu0 %v1867
      %1969 = vmatprep.subr.bf16.mxu0 %v1872
      %1970 = vmatpush1.bf16.msra.mxu0 %v1871
      %1971 = vmatprep.mubr.bf16.mxu0 %v1532
      %1972 = vmatmul.mubr.bf16.gmra.mrb[0].mxu0 %v1531
      %v1973 = vpop.f32.mrb[0].mxu0
      %v1974 = vadd.f32 %v1602, %v1973
      %v1975 = vpop.f32.mrb[0].mxu0
      %v1976 = vadd.f32 %v1606, %v1975
      %v1977 = vpop.f32.mrb[0].mxu0
      %v1978 = vpop.f32.mrb[0].mxu0
      %1979 = vdwg.mxu0
      %1980 = vmatprep.subr.bf16.mxu0 %v1814
      %1981 = vmatpush1.bf16.msra.mxu0 %v1813
      %1982 = vmatprep.subr.bf16.mxu0 %v1818
      %1983 = vmatpush1.bf16.msra.mxu0 %v1817
      %1984 = vmatprep.subr.bf16.mxu0 %v1822
      %1985 = vmatpush1.bf16.msra.mxu0 %v1821
      %1986 = vmatprep.subr.bf16.mxu0 %v1826
      %1987 = vmatpush1.bf16.msra.mxu0 %v1825
      %1988 = vmatprep.subr.bf16.mxu0 %v1830
      %1989 = vmatpush1.bf16.msra.mxu0 %v1829
      %1990 = vmatprep.subr.bf16.mxu0 %v1834
      %1991 = vmatpush1.bf16.msra.mxu0 %v1833
      %1992 = vmatprep.subr.bf16.mxu0 %v1838
      %1993 = vmatpush1.bf16.msra.mxu0 %v1837
      %1994 = vmatprep.subr.bf16.mxu0 %v1842
      %1995 = vmatpush1.bf16.msra.mxu0 %v1841
      %1996 = vmatprep.subr.bf16.mxu0 %v1846
      %1997 = vmatpush1.bf16.msra.mxu0 %v1845
      %1998 = vmatprep.subr.bf16.mxu0 %v1850
      %1999 = vmatpush1.bf16.msra.mxu0 %v1849
      %2000 = vmatprep.subr.bf16.mxu0 %v1854
      %2001 = vmatpush1.bf16.msra.mxu0 %v1853
      %2002 = vmatprep.subr.bf16.mxu0 %v1858
      %2003 = vmatpush1.bf16.msra.mxu0 %v1857
      %2004 = vmatprep.subr.bf16.mxu0 %v1862
      %2005 = vmatpush1.bf16.msra.mxu0 %v1861
      %2006 = vmatprep.subr.bf16.mxu0 %v1866
      %2007 = vmatpush1.bf16.msra.mxu0 %v1865
      %2008 = vmatprep.subr.bf16.mxu0 %v1870
      %2009 = vmatpush1.bf16.msra.mxu0 %v1869
      %2010 = vmatprep.subr.bf16.mxu0 %v1874
      %2011 = vmatpush1.bf16.msra.mxu0 %v1873
      %2012 = vmatprep.mubr.bf16.mxu0 %v1532
      %2013 = vmatmul.mubr.bf16.gmra.mrb[0].mxu0 %v1531
      %v2014 = vpop.f32.mrb[0].mxu0
      %v2015 = vadd.f32 %v1610, %v2014
      %v2016 = vpop.f32.mrb[0].mxu0
      %v2017 = vadd.f32 %v1614, %v2016
      %v2018 = vpop.f32.mrb[0].mxu0
      %v2019 = vpop.f32.mrb[0].mxu0
      %2020 = vdwg.mxu0
      %v2021 = vmax.f32 %v1974, 0.0
      %v2022 = vmax.f32 %v1976, 0.0
      %v2023 = vmax.f32 %v2015, 0.0
      %v2024 = vmax.f32 %v2017, 0.0
      %v2025 = vpack.c.bf16 %v2021, %v2021
      %v2026 = vpack.c.bf16 %v2022, %v2022
      %v2027 = vpack.c.bf16 %v2023, %v2023
      %v2028 = vpack.c.bf16 %v2024, %v2024
      %v2029 = vld [vmem:[%s8] sm:$0xf]
      %v2030 = vld [vmem:[%s8 + $0x4] sm:$0xf]
      %v2031 = vld [vmem:[%s8 + $0x8] sm:$0xf]
      %v2032 = vld [vmem:[%s8 + $0xc] sm:$0xf]
      %v2033 = vld [vmem:[%s8 + $0x10] sm:$0xf]
      %v2034 = vld [vmem:[%s8 + $0x14] sm:$0xf]
      %v2035 = vld [vmem:[%s8 + $0x18] sm:$0xf]
      %v2036 = vld [vmem:[%s8 + $0x1c] sm:$0xf]
      %v2037 = vld [vmem:[%s8 + $0x20] sm:$0xf]
      %v2038 = vld [vmem:[%s8 + $0x24] sm:$0xf]
      %v2039 = vld [vmem:[%s8 + $0x28] sm:$0xf]
      %v2040 = vld [vmem:[%s8 + $0x2c] sm:$0xf]
      %v2041 = vld [vmem:[%s8 + $0x30] sm:$0xf]
      %v2042 = vld [vmem:[%s8 + $0x34] sm:$0xf]
      %v2043 = vld [vmem:[%s8 + $0x38] sm:$0xf]
      %v2044 = vld [vmem:[%s8 + $0x3c] sm:$0xf]
      %v2045 = vld [vmem:[%s8 + $0x40] sm:$0xf]
      %v2046 = vld [vmem:[%s8 + $0x44] sm:$0xf]
      %v2047 = vld [vmem:[%s8 + $0x48] sm:$0xf]
      %v2048 = vld [vmem:[%s8 + $0x4c] sm:$0xf]
      %v2049 = vld [vmem:[%s8 + $0x50] sm:$0xf]
      %v2050 = vld [vmem:[%s8 + $0x54] sm:$0xf]
      %v2051 = vld [vmem:[%s8 + $0x58] sm:$0xf]
      %v2052 = vld [vmem:[%s8 + $0x5c] sm:$0xf]
      %v2053 = vld [vmem:[%s8 + $0x60] sm:$0xf]
      %v2054 = vld [vmem:[%s8 + $0x64] sm:$0xf]
      %v2055 = vld [vmem:[%s8 + $0x68] sm:$0xf]
      %v2056 = vld [vmem:[%s8 + $0x6c] sm:$0xf]
      %v2057 = vld [vmem:[%s8 + $0x70] sm:$0xf]
      %v2058 = vld [vmem:[%s8 + $0x74] sm:$0xf]
      %v2059 = vld [vmem:[%s8 + $0x78] sm:$0xf]
      %v2060 = vld [vmem:[%s8 + $0x7c] sm:$0xf]
      %v2061 = vld [vmem:[%s8 + $0x80] sm:$0xf]
      %v2062 = vld [vmem:[%s8 + $0x84] sm:$0xf]
      %v2063 = vld [vmem:[%s8 + $0x88] sm:$0xf]
      %v2064 = vld [vmem:[%s8 + $0x8c] sm:$0xf]
      %v2065 = vld [vmem:[%s8 + $0x90] sm:$0xf]
      %v2066 = vld [vmem:[%s8 + $0x94] sm:$0xf]
      %v2067 = vld [vmem:[%s8 + $0x98] sm:$0xf]
      %v2068 = vld [vmem:[%s8 + $0x9c] sm:$0xf]
      %v2069 = vld [vmem:[%s8 + $0xa0] sm:$0xf]
      %v2070 = vld [vmem:[%s8 + $0xa4] sm:$0xf]
      %v2071 = vld [vmem:[%s8 + $0xa8] sm:$0xf]
      %v2072 = vld [vmem:[%s8 + $0xac] sm:$0xf]
      %v2073 = vld [vmem:[%s8 + $0xb0] sm:$0xf]
      %v2074 = vld [vmem:[%s8 + $0xb4] sm:$0xf]
      %v2075 = vld [vmem:[%s8 + $0xb8] sm:$0xf]
      %v2076 = vld [vmem:[%s8 + $0xbc] sm:$0xf]
      %v2077 = vld [vmem:[%s8 + $0xc0] sm:$0xf]
      %v2078 = vld [vmem:[%s8 + $0xc4] sm:$0xf]
      %v2079 = vld [vmem:[%s8 + $0xc8] sm:$0xf]
      %v2080 = vld [vmem:[%s8 + $0xcc] sm:$0xf]
      %v2081 = vld [vmem:[%s8 + $0xd0] sm:$0xf]
      %v2082 = vld [vmem:[%s8 + $0xd4] sm:$0xf]
      %v2083 = vld [vmem:[%s8 + $0xd8] sm:$0xf]
      %v2084 = vld [vmem:[%s8 + $0xdc] sm:$0xf]
      %v2085 = vld [vmem:[%s8 + $0xe0] sm:$0xf]
      %v2086 = vld [vmem:[%s8 + $0xe4] sm:$0xf]
      %v2087 = vld [vmem:[%s8 + $0xe8] sm:$0xf]
      %v2088 = vld [vmem:[%s8 + $0xec] sm:$0xf]
      %v2089 = vld [vmem:[%s8 + $0xf0] sm:$0xf]
      %v2090 = vld [vmem:[%s8 + $0xf4] sm:$0xf]
      %v2091 = vld [vmem:[%s8 + $0xf8] sm:$0xf]
      %v2092 = vld [vmem:[%s8 + $0xfc] sm:$0xf]
      %v2093 = vld [vmem:[%s9] sm:$0x1]
      %v2095 = vlaneseq
      %v2096 = vshrl.u32 %v2095, 7
      %v2097 = vsub.s32 0, %v2096
      %v2098 = vrot.slane %v2093, %v2097
      %v2164 = vunpack.c.l.b16 %v2029
      %v2165 = vunpack.c.l.b16 %v2030
      %v2166 = vunpack.c.l.b16 %v2031
      %v2167 = vunpack.c.l.b16 %v2032
      %v2168 = vunpack.c.l.b16 %v2033
      %v2169 = vunpack.c.l.b16 %v2034
      %v2170 = vunpack.c.l.b16 %v2035
      %v2171 = vunpack.c.l.b16 %v2036
      %v2172 = vunpack.c.l.b16 %v2037
      %v2173 = vunpack.c.l.b16 %v2038
      %v2174 = vunpack.c.l.b16 %v2039
      %v2175 = vunpack.c.l.b16 %v2040
      %v2176 = vunpack.c.l.b16 %v2041
      %v2177 = vunpack.c.l.b16 %v2042
      %v2178 = vunpack.c.l.b16 %v2043
      %v2179 = vunpack.c.l.b16 %v2044
      %v2180 = vunpack.c.l.b16 %v2045
      %v2181 = vunpack.c.l.b16 %v2046
      %v2182 = vunpack.c.l.b16 %v2047
      %v2183 = vunpack.c.l.b16 %v2048
      %v2184 = vunpack.c.l.b16 %v2049
      %v2185 = vunpack.c.l.b16 %v2050
      %v2186 = vunpack.c.l.b16 %v2051
      %v2187 = vunpack.c.l.b16 %v2052
      %v2188 = vunpack.c.l.b16 %v2053
      %v2189 = vunpack.c.l.b16 %v2054
      %v2190 = vunpack.c.l.b16 %v2055
      %v2191 = vunpack.c.l.b16 %v2056
      %v2192 = vunpack.c.l.b16 %v2057
      %v2193 = vunpack.c.l.b16 %v2058
      %v2194 = vunpack.c.l.b16 %v2059
      %v2195 = vunpack.c.l.b16 %v2060
      %v2196 = vunpack.c.l.b16 %v2061
      %v2197 = vunpack.c.l.b16 %v2062
      %v2198 = vunpack.c.l.b16 %v2063
      %v2199 = vunpack.c.l.b16 %v2064
      %v2200 = vunpack.c.l.b16 %v2065
      %v2201 = vunpack.c.l.b16 %v2066
      %v2202 = vunpack.c.l.b16 %v2067
      %v2203 = vunpack.c.l.b16 %v2068
      %v2204 = vunpack.c.l.b16 %v2069
      %v2205 = vunpack.c.l.b16 %v2070
      %v2206 = vunpack.c.l.b16 %v2071
      %v2207 = vunpack.c.l.b16 %v2072
      %v2208 = vunpack.c.l.b16 %v2073
      %v2209 = vunpack.c.l.b16 %v2074
      %v2210 = vunpack.c.l.b16 %v2075
      %v2211 = vunpack.c.l.b16 %v2076
      %v2212 = vunpack.c.l.b16 %v2077
      %v2213 = vunpack.c.l.b16 %v2078
      %v2214 = vunpack.c.l.b16 %v2079
      %v2215 = vunpack.c.l.b16 %v2080
      %v2216 = vunpack.c.l.b16 %v2081
      %v2217 = vunpack.c.l.b16 %v2082
      %v2218 = vunpack.c.l.b16 %v2083
      %v2219 = vunpack.c.l.b16 %v2084
      %v2220 = vunpack.c.l.b16 %v2085
      %v2221 = vunpack.c.l.b16 %v2086
      %v2222 = vunpack.c.l.b16 %v2087
      %v2223 = vunpack.c.l.b16 %v2088
      %v2224 = vunpack.c.l.b16 %v2089
      %v2225 = vunpack.c.l.b16 %v2090
      %v2226 = vunpack.c.l.b16 %v2091
      %v2227 = vunpack.c.l.b16 %v2092
      %v2228 = vpack.c.b16 %v2165, %v2164
      %v2229 = vpack.c.b16 %v2167, %v2166
      %v2230 = vpack.c.b16 %v2169, %v2168
      %v2231 = vpack.c.b16 %v2171, %v2170
      %v2232 = vpack.c.b16 %v2173, %v2172
      %v2233 = vpack.c.b16 %v2175, %v2174
      %v2234 = vpack.c.b16 %v2177, %v2176
      %v2235 = vpack.c.b16 %v2179, %v2178
      %v2236 = vpack.c.b16 %v2181, %v2180
      %v2237 = vpack.c.b16 %v2183, %v2182
      %v2238 = vpack.c.b16 %v2185, %v2184
      %v2239 = vpack.c.b16 %v2187, %v2186
      %v2240 = vpack.c.b16 %v2189, %v2188
      %v2241 = vpack.c.b16 %v2191, %v2190
      %v2242 = vpack.c.b16 %v2193, %v2192
      %v2243 = vpack.c.b16 %v2195, %v2194
      %v2244 = vpack.c.b16 %v2197, %v2196
      %v2245 = vpack.c.b16 %v2199, %v2198
      %v2246 = vpack.c.b16 %v2201, %v2200
      %v2247 = vpack.c.b16 %v2203, %v2202
      %v2248 = vpack.c.b16 %v2205, %v2204
      %v2249 = vpack.c.b16 %v2207, %v2206
      %v2250 = vpack.c.b16 %v2209, %v2208
      %v2251 = vpack.c.b16 %v2211, %v2210
      %v2252 = vpack.c.b16 %v2213, %v2212
      %v2253 = vpack.c.b16 %v2215, %v2214
      %v2254 = vpack.c.b16 %v2217, %v2216
      %v2255 = vpack.c.b16 %v2219, %v2218
      %v2256 = vpack.c.b16 %v2221, %v2220
      %v2257 = vpack.c.b16 %v2223, %v2222
      %v2258 = vpack.c.b16 %v2225, %v2224
      %v2259 = vpack.c.b16 %v2227, %v2226
      %2292 = vmatprep.subr.bf16.mxu0 0
      %2293 = vmatpush1.bf16.msra.mxu0 %v2228
      %2294 = vmatprep.subr.bf16.mxu0 0
      %2295 = vmatpush1.bf16.msra.mxu0 %v2229
      %2296 = vmatprep.subr.bf16.mxu0 0
      %2297 = vmatpush1.bf16.msra.mxu0 %v2230
      %2298 = vmatprep.subr.bf16.mxu0 0
      %2299 = vmatpush1.bf16.msra.mxu0 %v2231
      %2300 = vmatprep.subr.bf16.mxu0 0
      %2301 = vmatpush1.bf16.msra.mxu0 %v2232
      %2302 = vmatprep.subr.bf16.mxu0 0
      %2303 = vmatpush1.bf16.msra.mxu0 %v2233
      %2304 = vmatprep.subr.bf16.mxu0 0
      %2305 = vmatpush1.bf16.msra.mxu0 %v2234
      %2306 = vmatprep.subr.bf16.mxu0 0
      %2307 = vmatpush1.bf16.msra.mxu0 %v2235
      %2308 = vmatprep.subr.bf16.mxu0 0
      %2309 = vmatpush1.bf16.msra.mxu0 %v2236
      %2310 = vmatprep.subr.bf16.mxu0 0
      %2311 = vmatpush1.bf16.msra.mxu0 %v2237
      %2312 = vmatprep.subr.bf16.mxu0 0
      %2313 = vmatpush1.bf16.msra.mxu0 %v2238
      %2314 = vmatprep.subr.bf16.mxu0 0
      %2315 = vmatpush1.bf16.msra.mxu0 %v2239
      %2316 = vmatprep.subr.bf16.mxu0 0
      %2317 = vmatpush1.bf16.msra.mxu0 %v2240
      %2318 = vmatprep.subr.bf16.mxu0 0
      %2319 = vmatpush1.bf16.msra.mxu0 %v2241
      %2320 = vmatprep.subr.bf16.mxu0 0
      %2321 = vmatpush1.bf16.msra.mxu0 %v2242
      %2322 = vmatprep.subr.bf16.mxu0 0
      %2323 = vmatpush1.bf16.msra.mxu0 %v2243
      %2324 = vmatprep.mubr.bf16.mxu0 %v2026
      %2325 = vmatmul.mubr.bf16.gmra.mrb[0].mxu0 %v2025
      %v2326 = vpop.f32.mrb[0].mxu0
      %v2327 = vadd.f32 %v2098, %v2326
      %v2328 = vpop.f32.mrb[0].mxu0
      %v2329 = vpop.f32.mrb[0].mxu0
      %v2330 = vpop.f32.mrb[0].mxu0
      %2331 = vdwg.mxu0
      %2332 = vmatprep.subr.bf16.mxu0 0
      %2333 = vmatpush1.bf16.msra.mxu0 %v2244
      %2334 = vmatprep.subr.bf16.mxu0 0
      %2335 = vmatpush1.bf16.msra.mxu0 %v2245
      %2336 = vmatprep.subr.bf16.mxu0 0
      %2337 = vmatpush1.bf16.msra.mxu0 %v2246
      %2338 = vmatprep.subr.bf16.mxu0 0
      %2339 = vmatpush1.bf16.msra.mxu0 %v2247
      %2340 = vmatprep.subr.bf16.mxu0 0
      %2341 = vmatpush1.bf16.msra.mxu0 %v2248
      %2342 = vmatprep.subr.bf16.mxu0 0
      %2343 = vmatpush1.bf16.msra.mxu0 %v2249
      %2344 = vmatprep.subr.bf16.mxu0 0
      %2345 = vmatpush1.bf16.msra.mxu0 %v2250
      %2346 = vmatprep.subr.bf16.mxu0 0
      %2347 = vmatpush1.bf16.msra.mxu0 %v2251
      %2348 = vmatprep.subr.bf16.mxu0 0
      %2349 = vmatpush1.bf16.msra.mxu0 %v2252
      %2350 = vmatprep.subr.bf16.mxu0 0
      %2351 = vmatpush1.bf16.msra.mxu0 %v2253
      %2352 = vmatprep.subr.bf16.mxu0 0
      %2353 = vmatpush1.bf16.msra.mxu0 %v2254
      %2354 = vmatprep.subr.bf16.mxu0 0
      %2355 = vmatpush1.bf16.msra.mxu0 %v2255
      %2356 = vmatprep.subr.bf16.mxu0 0
      %2357 = vmatpush1.bf16.msra.mxu0 %v2256
      %2358 = vmatprep.subr.bf16.mxu0 0
      %2359 = vmatpush1.bf16.msra.mxu0 %v2257
      %2360 = vmatprep.subr.bf16.mxu0 0
      %2361 = vmatpush1.bf16.msra.mxu0 %v2258
      %2362 = vmatprep.subr.bf16.mxu0 0
      %2363 = vmatpush1.bf16.msra.mxu0 %v2259
      %2364 = vmatprep.mubr.bf16.mxu0 %v2028
      %2365 = vmatmul.mubr.bf16.gmra.mrb[0].mxu0 %v2027
      %v2366 = vpop.f32.mrb[0].mxu0
      %v2367 = vadd.f32 %v2327, %v2366
      %v2368 = vpop.f32.mrb[0].mxu0
      %v2369 = vpop.f32.mrb[0].mxu0
      %v2370 = vpop.f32.mrb[0].mxu0
      %2371 = vdwg.mxu0
      %v2372 = vld [vmem:[%s590] sm:$0xff]
      %v2373 = vmul.f32 %v2367, 0.5
      %v2374 = vmul.f32 %v2373, 1.442695
      %v2375 = vpow.pop %v2374
      %2377 = vrot.lane.b32.xlu0 %v2375, 112
      %v2378 = vpop.permute.xlu0 %2377
      %v2380 = vmul.f32 %v2372, %v2378
      %v2381 = vadd.f32 %v2380, %v2367
      %v2382 = vpack.c.bf16 %v2381, %v2381
      %v2383 = vld [vmem:[%s10] sm:$0xff]
      %v2384 = vld [vmem:[%s10 + $0x8] sm:$0xff]
      %v2385 = vld [vmem:[%s10 + $0x10] sm:$0xff]
      %v2386 = vld [vmem:[%s10 + $0x18] sm:$0xff]
      %v2387 = vld [vmem:[%s11] sm:$0xff]
      %v2388 = vld [vmem:[%s11 + $0x8] sm:$0xff]
      %v2389 = vld [vmem:[%s11 + $0x10] sm:$0xff]
      %v2390 = vld [vmem:[%s11 + $0x18] sm:$0xff]
      %v2391 = vld [vmem:[%s11 + $0x20] sm:$0xff]
      %v2392 = vld [vmem:[%s11 + $0x28] sm:$0xff]
      %v2393 = vld [vmem:[%s11 + $0x30] sm:$0xff]
      %v2394 = vld [vmem:[%s11 + $0x38] sm:$0xff]
      %v2395 = vld [vmem:[%s11 + $0x40] sm:$0xff]
      %v2396 = vld [vmem:[%s11 + $0x48] sm:$0xff]
      %v2397 = vld [vmem:[%s11 + $0x50] sm:$0xff]
      %v2398 = vld [vmem:[%s11 + $0x58] sm:$0xff]
      %v2399 = vld [vmem:[%s11 + $0x60] sm:$0xff]
      %v2400 = vld [vmem:[%s11 + $0x68] sm:$0xff]
      %v2401 = vld [vmem:[%s11 + $0x70] sm:$0xff]
      %v2402 = vld [vmem:[%s11 + $0x78] sm:$0xff]
      %v2403 = vld [vmem:[%s11 + $0x80] sm:$0xff]
      %v2404 = vld [vmem:[%s11 + $0x88] sm:$0xff]
      %v2405 = vld [vmem:[%s11 + $0x90] sm:$0xff]
      %v2406 = vld [vmem:[%s11 + $0x98] sm:$0xff]
      %v2407 = vld [vmem:[%s11 + $0xa0] sm:$0xff]
      %v2408 = vld [vmem:[%s11 + $0xa8] sm:$0xff]
      %v2409 = vld [vmem:[%s11 + $0xb0] sm:$0xff]
      %v2410 = vld [vmem:[%s11 + $0xb8] sm:$0xff]
      %v2411 = vld [vmem:[%s11 + $0xc0] sm:$0xff]
      %v2412 = vld [vmem:[%s11 + $0xc8] sm:$0xff]
      %v2413 = vld [vmem:[%s11 + $0xd0] sm:$0xff]
      %v2414 = vld [vmem:[%s11 + $0xd8] sm:$0xff]
      %v2415 = vld [vmem:[%s11 + $0xe0] sm:$0xff]
      %v2416 = vld [vmem:[%s11 + $0xe8] sm:$0xff]
      %v2417 = vld [vmem:[%s11 + $0xf0] sm:$0xff]
      %v2418 = vld [vmem:[%s11 + $0xf8] sm:$0xff]
      %v2451 = vunpack.c.l.b16 %v2387
      %v2452 = vunpack.c.h.b16 %v2387
      %v2453 = vunpack.c.l.b16 %v2388
      %v2454 = vunpack.c.h.b16 %v2388
      %v2455 = vunpack.c.l.b16 %v2389
      %v2456 = vunpack.c.h.b16 %v2389
      %v2457 = vunpack.c.l.b16 %v2390
      %v2458 = vunpack.c.h.b16 %v2390
      %v2459 = vunpack.c.l.b16 %v2391
      %v2460 = vunpack.c.h.b16 %v2391
      %v2461 = vunpack.c.l.b16 %v2392
      %v2462 = vunpack.c.h.b16 %v2392
      %v2463 = vunpack.c.l.b16 %v2393
      %v2464 = vunpack.c.h.b16 %v2393
      %v2465 = vunpack.c.l.b16 %v2394
      %v2466 = vunpack.c.h.b16 %v2394
      %v2467 = vunpack.c.l.b16 %v2395
      %v2468 = vunpack.c.h.b16 %v2395
      %v2469 = vunpack.c.l.b16 %v2396
      %v2470 = vunpack.c.h.b16 %v2396
      %v2471 = vunpack.c.l.b16 %v2397
      %v2472 = vunpack.c.h.b16 %v2397
      %v2473 = vunpack.c.l.b16 %v2398
      %v2474 = vunpack.c.h.b16 %v2398
      %v2475 = vunpack.c.l.b16 %v2399
      %v2476 = vunpack.c.h.b16 %v2399
      %v2477 = vunpack.c.l.b16 %v2400
      %v2478 = vunpack.c.h.b16 %v2400
      %v2479 = vunpack.c.l.b16 %v2401
      %v2480 = vunpack.c.h.b16 %v2401
      %v2481 = vunpack.c.l.b16 %v2402
      %v2482 = vunpack.c.h.b16 %v2402
      %v2483 = vunpack.c.l.b16 %v2403
      %v2484 = vunpack.c.h.b16 %v2403
      %v2485 = vunpack.c.l.b16 %v2404
      %v2486 = vunpack.c.h.b16 %v2404
      %v2487 = vunpack.c.l.b16 %v2405
      %v2488 = vunpack.c.h.b16 %v2405
      %v2489 = vunpack.c.l.b16 %v2406
      %v2490 = vunpack.c.h.b16 %v2406
      %v2491 = vunpack.c.l.b16 %v2407
      %v2492 = vunpack.c.h.b16 %v2407
      %v2493 = vunpack.c.l.b16 %v2408
      %v2494 = vunpack.c.h.b16 %v2408
      %v2495 = vunpack.c.l.b16 %v2409
      %v2496 = vunpack.c.h.b16 %v2409
      %v2497 = vunpack.c.l.b16 %v2410
      %v2498 = vunpack.c.h.b16 %v2410
      %v2499 = vunpack.c.l.b16 %v2411
      %v2500 = vunpack.c.h.b16 %v2411
      %v2501 = vunpack.c.l.b16 %v2412
      %v2502 = vunpack.c.h.b16 %v2412
      %v2503 = vunpack.c.l.b16 %v2413
      %v2504 = vunpack.c.h.b16 %v2413
      %v2505 = vunpack.c.l.b16 %v2414
      %v2506 = vunpack.c.h.b16 %v2414
      %v2507 = vunpack.c.l.b16 %v2415
      %v2508 = vunpack.c.h.b16 %v2415
      %v2509 = vunpack.c.l.b16 %v2416
      %v2510 = vunpack.c.h.b16 %v2416
      %v2511 = vunpack.c.l.b16 %v2417
      %v2512 = vunpack.c.h.b16 %v2417
      %v2513 = vunpack.c.l.b16 %v2418
      %v2514 = vunpack.c.h.b16 %v2418
      %v2515 = vpack.c.b16 %v2455, %v2451
      %v2516 = vpack.c.b16 %v2456, %v2452
      %v2517 = vpack.c.b16 %v2457, %v2453
      %v2518 = vpack.c.b16 %v2458, %v2454
      %v2519 = vpack.c.b16 %v2463, %v2459
      %v2520 = vpack.c.b16 %v2464, %v2460
      %v2521 = vpack.c.b16 %v2465, %v2461
      %v2522 = vpack.c.b16 %v2466, %v2462
      %v2523 = vpack.c.b16 %v2471, %v2467
      %v2524 = vpack.c.b16 %v2472, %v2468
      %v2525 = vpack.c.b16 %v2473, %v2469
      %v2526 = vpack.c.b16 %v2474, %v2470
      %v2527 = vpack.c.b16 %v2479, %v2475
      %v2528 = vpack.c.b16 %v2480, %v2476
      %v2529 = vpack.c.b16 %v2481, %v2477
      %v2530 = vpack.c.b16 %v2482, %v2478
      %v2531 = vpack.c.b16 %v2487, %v2483
      %v2532 = vpack.c.b16 %v2488, %v2484
      %v2533 = vpack.c.b16 %v2489, %v2485
      %v2534 = vpack.c.b16 %v2490, %v2486
      %v2535 = vpack.c.b16 %v2495, %v2491
      %v2536 = vpack.c.b16 %v2496, %v2492
      %v2537 = vpack.c.b16 %v2497, %v2493
      %v2538 = vpack.c.b16 %v2498, %v2494
      %v2539 = vpack.c.b16 %v2503, %v2499
      %v2540 = vpack.c.b16 %v2504, %v2500
      %v2541 = vpack.c.b16 %v2505, %v2501
      %v2542 = vpack.c.b16 %v2506, %v2502
      %v2543 = vpack.c.b16 %v2511, %v2507
      %v2544 = vpack.c.b16 %v2512, %v2508
      %v2545 = vpack.c.b16 %v2513, %v2509
      %v2546 = vpack.c.b16 %v2514, %v2510
      %2579 = vmatprep.subr.bf16.mxu0 %v2516
      %2580 = vmatpush1.bf16.msra.mxu0 %v2515
      %2581 = vmatprep.subr.bf16.mxu0 %v2520
      %2582 = vmatpush1.bf16.msra.mxu0 %v2519
      %2583 = vmatprep.subr.bf16.mxu0 %v2524
      %2584 = vmatpush1.bf16.msra.mxu0 %v2523
      %2585 = vmatprep.subr.bf16.mxu0 %v2528
      %2586 = vmatpush1.bf16.msra.mxu0 %v2527
      %2587 = vmatprep.subr.bf16.mxu0 %v2532
      %2588 = vmatpush1.bf16.msra.mxu0 %v2531
      %2589 = vmatprep.subr.bf16.mxu0 %v2536
      %2590 = vmatpush1.bf16.msra.mxu0 %v2535
      %2591 = vmatprep.subr.bf16.mxu0 %v2540
      %2592 = vmatpush1.bf16.msra.mxu0 %v2539
      %2593 = vmatprep.subr.bf16.mxu0 %v2544
      %2594 = vmatpush1.bf16.msra.mxu0 %v2543
      %2595 = vmatprep.subr.bf16.mxu0 0
      %2596 = vmatpush1.bf16.msra.mxu0 0
      %2597 = vmatprep.subr.bf16.mxu0 0
      %2598 = vmatpush1.bf16.msra.mxu0 0
      %2599 = vmatprep.subr.bf16.mxu0 0
      %2600 = vmatpush1.bf16.msra.mxu0 0
      %2601 = vmatprep.subr.bf16.mxu0 0
      %2602 = vmatpush1.bf16.msra.mxu0 0
      %2603 = vmatprep.subr.bf16.mxu0 0
      %2604 = vmatpush1.bf16.msra.mxu0 0
      %2605 = vmatprep.subr.bf16.mxu0 0
      %2606 = vmatpush1.bf16.msra.mxu0 0
      %2607 = vmatprep.subr.bf16.mxu0 0
      %2608 = vmatpush1.bf16.msra.mxu0 0
      %2609 = vmatprep.subr.bf16.mxu0 0
      %2610 = vmatpush1.bf16.msra.mxu0 0
      %2611 = vmatprep.mubr.bf16.mxu0 0
      %2612 = vmatmul.mubr.bf16.gmra.mrb[0].mxu0 %v605
      %v2613 = vpop.f32.mrb[0].mxu0
      %v2614 = vadd.f32 0.0, %v2613
      %v2615 = vpop.f32.mrb[0].mxu0
      %v2616 = vadd.f32 0.0, %v2615
      %v2617 = vpop.f32.mrb[0].mxu0
      %v2618 = vpop.f32.mrb[0].mxu0
      %2619 = vdwg.mxu0
      %2620 = vmatprep.subr.bf16.mxu0 %v2518
      %2621 = vmatpush1.bf16.msra.mxu0 %v2517
      %2622 = vmatprep.subr.bf16.mxu0 %v2522
      %2623 = vmatpush1.bf16.msra.mxu0 %v2521
      %2624 = vmatprep.subr.bf16.mxu0 %v2526
      %2625 = vmatpush1.bf16.msra.mxu0 %v2525
      %2626 = vmatprep.subr.bf16.mxu0 %v2530
      %2627 = vmatpush1.bf16.msra.mxu0 %v2529
      %2628 = vmatprep.subr.bf16.mxu0 %v2534
      %2629 = vmatpush1.bf16.msra.mxu0 %v2533
      %2630 = vmatprep.subr.bf16.mxu0 %v2538
      %2631 = vmatpush1.bf16.msra.mxu0 %v2537
      %2632 = vmatprep.subr.bf16.mxu0 %v2542
      %2633 = vmatpush1.bf16.msra.mxu0 %v2541
      %2634 = vmatprep.subr.bf16.mxu0 %v2546
      %2635 = vmatpush1.bf16.msra.mxu0 %v2545
      %2636 = vmatprep.subr.bf16.mxu0 0
      %2637 = vmatpush1.bf16.msra.mxu0 0
      %2638 = vmatprep.subr.bf16.mxu0 0
      %2639 = vmatpush1.bf16.msra.mxu0 0
      %2640 = vmatprep.subr.bf16.mxu0 0
      %2641 = vmatpush1.bf16.msra.mxu0 0
      %2642 = vmatprep.subr.bf16.mxu0 0
      %2643 = vmatpush1.bf16.msra.mxu0 0
      %2644 = vmatprep.subr.bf16.mxu0 0
      %2645 = vmatpush1.bf16.msra.mxu0 0
      %2646 = vmatprep.subr.bf16.mxu0 0
      %2647 = vmatpush1.bf16.msra.mxu0 0
      %2648 = vmatprep.subr.bf16.mxu0 0
      %2649 = vmatpush1.bf16.msra.mxu0 0
      %2650 = vmatprep.subr.bf16.mxu0 0
      %2651 = vmatpush1.bf16.msra.mxu0 0
      %2652 = vmatprep.mubr.bf16.mxu0 0
      %2653 = vmatmul.mubr.bf16.gmra.mrb[0].mxu0 %v605
      %v2654 = vpop.f32.mrb[0].mxu0
      %v2655 = vadd.f32 0.0, %v2654
      %v2656 = vpop.f32.mrb[0].mxu0
      %v2657 = vadd.f32 0.0, %v2656
      %v2658 = vpop.f32.mrb[0].mxu0
      %v2659 = vpop.f32.mrb[0].mxu0
      %2660 = vdwg.mxu0
      %v2665 = vunpack.c.l.b16 %v2383
      %v2666 = vunpack.c.h.b16 %v2383
      %v2667 = vunpack.c.l.b16 %v2384
      %v2668 = vunpack.c.h.b16 %v2384
      %v2669 = vunpack.c.l.b16 %v2385
      %v2670 = vunpack.c.h.b16 %v2385
      %v2671 = vunpack.c.l.b16 %v2386
      %v2672 = vunpack.c.h.b16 %v2386
      %v2673 = vpack.c.b16 %v2669, %v2665
      %v2674 = vpack.c.b16 %v2670, %v2666
      %v2675 = vpack.c.b16 %v2671, %v2667
      %v2676 = vpack.c.b16 %v2672, %v2668
      %v2682 = vsel %vm1345, %v2382, 0
      %2684 = vmatprep.subr.bf16.mxu0 %v2674
      %2685 = vmatpush1.bf16.msra.mxu0 %v2673
      %2686 = vmatprep.subr.bf16.mxu0 0
      %2687 = vmatpush1.bf16.msra.mxu0 0
      %2688 = vmatprep.subr.bf16.mxu0 0
      %2689 = vmatpush1.bf16.msra.mxu0 0
      %2690 = vmatprep.subr.bf16.mxu0 0
      %2691 = vmatpush1.bf16.msra.mxu0 0
      %2692 = vmatprep.subr.bf16.mxu0 0
      %2693 = vmatpush1.bf16.msra.mxu0 0
      %2694 = vmatprep.subr.bf16.mxu0 0
      %2695 = vmatpush1.bf16.msra.mxu0 0
      %2696 = vmatprep.subr.bf16.mxu0 0
      %2697 = vmatpush1.bf16.msra.mxu0 0
      %2698 = vmatprep.subr.bf16.mxu0 0
      %2699 = vmatpush1.bf16.msra.mxu0 0
      %2700 = vmatprep.subr.bf16.mxu0 0
      %2701 = vmatpush1.bf16.msra.mxu0 0
      %2702 = vmatprep.subr.bf16.mxu0 0
      %2703 = vmatpush1.bf16.msra.mxu0 0
      %2704 = vmatprep.subr.bf16.mxu0 0
      %2705 = vmatpush1.bf16.msra.mxu0 0
      %2706 = vmatprep.subr.bf16.mxu0 0
      %2707 = vmatpush1.bf16.msra.mxu0 0
      %2708 = vmatprep.subr.bf16.mxu0 0
      %2709 = vmatpush1.bf16.msra.mxu0 0
      %2710 = vmatprep.subr.bf16.mxu0 0
      %2711 = vmatpush1.bf16.msra.mxu0 0
      %2712 = vmatprep.subr.bf16.mxu0 0
      %2713 = vmatpush1.bf16.msra.mxu0 0
      %2714 = vmatprep.subr.bf16.mxu0 0
      %2715 = vmatpush1.bf16.msra.mxu0 0
      %2716 = vmatprep.mubr.bf16.mxu0 0
      %2717 = vmatmul.mubr.bf16.gmra.mrb[0].mxu0 %v2682
      %v2718 = vpop.f32.mrb[0].mxu0
      %v2719 = vadd.f32 %v2614, %v2718
      %v2720 = vpop.f32.mrb[0].mxu0
      %v2721 = vadd.f32 %v2616, %v2720
      %v2722 = vpop.f32.mrb[0].mxu0
      %v2723 = vpop.f32.mrb[0].mxu0
      %2724 = vdwg.mxu0
      %2725 = vmatprep.subr.bf16.mxu0 %v2676
      %2726 = vmatpush1.bf16.msra.mxu0 %v2675
      %2727 = vmatprep.subr.bf16.mxu0 0
      %2728 = vmatpush1.bf16.msra.mxu0 0
      %2729 = vmatprep.subr.bf16.mxu0 0
      %2730 = vmatpush1.bf16.msra.mxu0 0
      %2731 = vmatprep.subr.bf16.mxu0 0
      %2732 = vmatpush1.bf16.msra.mxu0 0
      %2733 = vmatprep.subr.bf16.mxu0 0
      %2734 = vmatpush1.bf16.msra.mxu0 0
      %2735 = vmatprep.subr.bf16.mxu0 0
      %2736 = vmatpush1.bf16.msra.mxu0 0
      %2737 = vmatprep.subr.bf16.mxu0 0
      %2738 = vmatpush1.bf16.msra.mxu0 0
      %2739 = vmatprep.subr.bf16.mxu0 0
      %2740 = vmatpush1.bf16.msra.mxu0 0
      %2741 = vmatprep.subr.bf16.mxu0 0
      %2742 = vmatpush1.bf16.msra.mxu0 0
      %2743 = vmatprep.subr.bf16.mxu0 0
      %2744 = vmatpush1.bf16.msra.mxu0 0
      %2745 = vmatprep.subr.bf16.mxu0 0
      %2746 = vmatpush1.bf16.msra.mxu0 0
      %2747 = vmatprep.subr.bf16.mxu0 0
      %2748 = vmatpush1.bf16.msra.mxu0 0
      %2749 = vmatprep.subr.bf16.mxu0 0
      %2750 = vmatpush1.bf16.msra.mxu0 0
      %2751 = vmatprep.subr.bf16.mxu0 0
      %2752 = vmatpush1.bf16.msra.mxu0 0
      %2753 = vmatprep.subr.bf16.mxu0 0
      %2754 = vmatpush1.bf16.msra.mxu0 0
      %2755 = vmatprep.subr.bf16.mxu0 0
      %2756 = vmatpush1.bf16.msra.mxu0 0
      %2757 = vmatprep.mubr.bf16.mxu0 0
      %2758 = vmatmul.mubr.bf16.gmra.mrb[0].mxu0 %v2682
      %v2759 = vpop.f32.mrb[0].mxu0
      %v2760 = vadd.f32 %v2655, %v2759
      %v2761 = vpop.f32.mrb[0].mxu0
      %v2762 = vadd.f32 %v2657, %v2761
      %v2763 = vpop.f32.mrb[0].mxu0
      %v2764 = vpop.f32.mrb[0].mxu0
      %2765 = vdwg.mxu0
      %v2766 = vld [vmem:[%s12] sm:$0xf]
      %v2768 = vlaneseq
      %v2769 = vshrl.u32 %v2768, 7
      %v2770 = vsub.s32 0, %v2769
      %v2771 = vrot.slane %v2766, %v2770
      %v2772 = vlaneseq
      %v2773 = vshrl.u32 %v2772, 7
      %v2774 = vsub.s32 1, %v2773
      %v2775 = vrot.slane %v2766, %v2774
      %v2776 = vlaneseq
      %v2777 = vshrl.u32 %v2776, 7
      %v2778 = vsub.s32 2, %v2777
      %v2779 = vrot.slane %v2766, %v2778
      %v2780 = vlaneseq
      %v2781 = vshrl.u32 %v2780, 7
      %v2782 = vsub.s32 3, %v2781
      %v2783 = vrot.slane %v2766, %v2782
      %v2788 = vadd.f32 %v2719, %v2771
      %v2789 = vadd.f32 %v2721, %v2775
      %v2790 = vadd.f32 %v2760, %v2779
      %v2791 = vadd.f32 %v2762, %v2783
      %v2792 = vmax.f32 %v2788, 0.0
      %v2793 = vmax.f32 %v2789, 0.0
      %v2794 = vmax.f32 %v2790, 0.0
      %v2795 = vmax.f32 %v2791, 0.0
      %v2796 = vpack.c.bf16 %v2792, %v2792
      %v2797 = vpack.c.bf16 %v2793, %v2793
      %v2798 = vpack.c.bf16 %v2794, %v2794
      %v2799 = vpack.c.bf16 %v2795, %v2795
      %v2800 = vld [vmem:[%s13] sm:$0xff]
      %v2801 = vld [vmem:[%s13 + $0x8] sm:$0xff]
      %v2802 = vld [vmem:[%s13 + $0x10] sm:$0xff]
      %v2803 = vld [vmem:[%s13 + $0x18] sm:$0xf]
      %v2804 = vld [vmem:[%s13 + $0x1c] sm:$0xff]
      %v2805 = vld [vmem:[%s13 + $0x24] sm:$0xff]
      %v2806 = vld [vmem:[%s13 + $0x2c] sm:$0xff]
      %v2807 = vld [vmem:[%s13 + $0x34] sm:$0xf]
      %v2808 = vld [vmem:[%s13 + $0x38] sm:$0xff]
      %v2809 = vld [vmem:[%s13 + $0x40] sm:$0xff]
      %v2810 = vld [vmem:[%s13 + $0x48] sm:$0xff]
      %v2811 = vld [vmem:[%s13 + $0x50] sm:$0xf]
      %v2812 = vld [vmem:[%s13 + $0x54] sm:$0xff]
      %v2813 = vld [vmem:[%s13 + $0x5c] sm:$0xff]
      %v2814 = vld [vmem:[%s13 + $0x64] sm:$0xff]
      %v2815 = vld [vmem:[%s13 + $0x6c] sm:$0xf]
      %v2816 = vld [vmem:[%s13 + $0x70] sm:$0xff]
      %v2817 = vld [vmem:[%s13 + $0x78] sm:$0xff]
      %v2818 = vld [vmem:[%s13 + $0x80] sm:$0xff]
      %v2819 = vld [vmem:[%s13 + $0x88] sm:$0xf]
      %v2820 = vld [vmem:[%s13 + $0x8c] sm:$0xff]
      %v2821 = vld [vmem:[%s13 + $0x94] sm:$0xff]
      %v2822 = vld [vmem:[%s13 + $0x9c] sm:$0xff]
      %v2823 = vld [vmem:[%s13 + $0xa4] sm:$0xf]
      %v2824 = vld [vmem:[%s13 + $0xa8] sm:$0xff]
      %v2825 = vld [vmem:[%s13 + $0xb0] sm:$0xff]
      %v2826 = vld [vmem:[%s13 + $0xb8] sm:$0xff]
      %v2827 = vld [vmem:[%s13 + $0xc0] sm:$0xf]
      %v2828 = vld [vmem:[%s13 + $0xc4] sm:$0xff]
      %v2829 = vld [vmem:[%s13 + $0xcc] sm:$0xff]
      %v2830 = vld [vmem:[%s13 + $0xd4] sm:$0xff]
      %v2831 = vld [vmem:[%s13 + $0xdc] sm:$0xf]
      %v2832 = vld [vmem:[%s13 + $0xe0] sm:$0xff]
      %v2833 = vld [vmem:[%s13 + $0xe8] sm:$0xff]
      %v2834 = vld [vmem:[%s13 + $0xf0] sm:$0xff]
      %v2835 = vld [vmem:[%s13 + $0xf8] sm:$0xf]
      %v2836 = vld [vmem:[%s13 + $0xfc] sm:$0xff]
      %v2837 = vld [vmem:[%s13 + $0x104] sm:$0xff]
      %v2838 = vld [vmem:[%s13 + $0x10c] sm:$0xff]
      %v2839 = vld [vmem:[%s13 + $0x114] sm:$0xf]
      %v2840 = vld [vmem:[%s13 + $0x118] sm:$0xff]
      %v2841 = vld [vmem:[%s13 + $0x120] sm:$0xff]
      %v2842 = vld [vmem:[%s13 + $0x128] sm:$0xff]
      %v2843 = vld [vmem:[%s13 + $0x130] sm:$0xf]
      %v2844 = vld [vmem:[%s13 + $0x134] sm:$0xff]
      %v2845 = vld [vmem:[%s13 + $0x13c] sm:$0xff]
      %v2846 = vld [vmem:[%s13 + $0x144] sm:$0xff]
      %v2847 = vld [vmem:[%s13 + $0x14c] sm:$0xf]
      %v2848 = vld [vmem:[%s13 + $0x150] sm:$0xff]
      %v2849 = vld [vmem:[%s13 + $0x158] sm:$0xff]
      %v2850 = vld [vmem:[%s13 + $0x160] sm:$0xff]
      %v2851 = vld [vmem:[%s13 + $0x168] sm:$0xf]
      %v2852 = vld [vmem:[%s13 + $0x16c] sm:$0xff]
      %v2853 = vld [vmem:[%s13 + $0x174] sm:$0xff]
      %v2854 = vld [vmem:[%s13 + $0x17c] sm:$0xff]
      %v2855 = vld [vmem:[%s13 + $0x184] sm:$0xf]
      %v2856 = vld [vmem:[%s13 + $0x188] sm:$0xff]
      %v2857 = vld [vmem:[%s13 + $0x190] sm:$0xff]
      %v2858 = vld [vmem:[%s13 + $0x198] sm:$0xff]
      %v2859 = vld [vmem:[%s13 + $0x1a0] sm:$0xf]
      %v2860 = vld [vmem:[%s13 + $0x1a4] sm:$0xff]
      %v2861 = vld [vmem:[%s13 + $0x1ac] sm:$0xff]
      %v2862 = vld [vmem:[%s13 + $0x1b4] sm:$0xff]
      %v2863 = vld [vmem:[%s13 + $0x1bc] sm:$0xf]
      %v2864 = vld [vmem:[%s13 + $0x1c0] sm:$0xff]
      %v2865 = vld [vmem:[%s13 + $0x1c8] sm:$0xff]
      %v2866 = vld [vmem:[%s13 + $0x1d0] sm:$0xff]
      %v2867 = vld [vmem:[%s13 + $0x1d8] sm:$0xf]
      %v2868 = vld [vmem:[%s13 + $0x1dc] sm:$0xff]
      %v2869 = vld [vmem:[%s13 + $0x1e4] sm:$0xff]
      %v2870 = vld [vmem:[%s13 + $0x1ec] sm:$0xff]
      %v2871 = vld [vmem:[%s13 + $0x1f4] sm:$0xf]
      %v2872 = vld [vmem:[%s13 + $0x1f8] sm:$0xff]
      %v2873 = vld [vmem:[%s13 + $0x200] sm:$0xff]
      %v2874 = vld [vmem:[%s13 + $0x208] sm:$0xff]
      %v2875 = vld [vmem:[%s13 + $0x210] sm:$0xf]
      %v2876 = vld [vmem:[%s13 + $0x214] sm:$0xff]
      %v2877 = vld [vmem:[%s13 + $0x21c] sm:$0xff]
      %v2878 = vld [vmem:[%s13 + $0x224] sm:$0xff]
      %v2879 = vld [vmem:[%s13 + $0x22c] sm:$0xf]
      %v2880 = vld [vmem:[%s13 + $0x230] sm:$0xff]
      %v2881 = vld [vmem:[%s13 + $0x238] sm:$0xff]
      %v2882 = vld [vmem:[%s13 + $0x240] sm:$0xff]
      %v2883 = vld [vmem:[%s13 + $0x248] sm:$0xf]
      %v2884 = vld [vmem:[%s13 + $0x24c] sm:$0xff]
      %v2885 = vld [vmem:[%s13 + $0x254] sm:$0xff]
      %v2886 = vld [vmem:[%s13 + $0x25c] sm:$0xff]
      %v2887 = vld [vmem:[%s13 + $0x264] sm:$0xf]
      %v2888 = vld [vmem:[%s13 + $0x268] sm:$0xff]
      %v2889 = vld [vmem:[%s13 + $0x270] sm:$0xff]
      %v2890 = vld [vmem:[%s13 + $0x278] sm:$0xff]
      %v2891 = vld [vmem:[%s13 + $0x280] sm:$0xf]
      %v2892 = vld [vmem:[%s13 + $0x284] sm:$0xff]
      %v2893 = vld [vmem:[%s13 + $0x28c] sm:$0xff]
      %v2894 = vld [vmem:[%s13 + $0x294] sm:$0xff]
      %v2895 = vld [vmem:[%s13 + $0x29c] sm:$0xf]
      %v2896 = vld [vmem:[%s13 + $0x2a0] sm:$0xff]
      %v2897 = vld [vmem:[%s13 + $0x2a8] sm:$0xff]
      %v2898 = vld [vmem:[%s13 + $0x2b0] sm:$0xff]
      %v2899 = vld [vmem:[%s13 + $0x2b8] sm:$0xf]
      %v2900 = vld [vmem:[%s13 + $0x2bc] sm:$0xff]
      %v2901 = vld [vmem:[%s13 + $0x2c4] sm:$0xff]
      %v2902 = vld [vmem:[%s13 + $0x2cc] sm:$0xff]
      %v2903 = vld [vmem:[%s13 + $0x2d4] sm:$0xf]
      %v2904 = vld [vmem:[%s13 + $0x2d8] sm:$0xff]
      %v2905 = vld [vmem:[%s13 + $0x2e0] sm:$0xff]
      %v2906 = vld [vmem:[%s13 + $0x2e8] sm:$0xff]
      %v2907 = vld [vmem:[%s13 + $0x2f0] sm:$0xf]
      %v2908 = vld [vmem:[%s13 + $0x2f4] sm:$0xff]
      %v2909 = vld [vmem:[%s13 + $0x2fc] sm:$0xff]
      %v2910 = vld [vmem:[%s13 + $0x304] sm:$0xff]
      %v2911 = vld [vmem:[%s13 + $0x30c] sm:$0xf]
      %v2912 = vld [vmem:[%s13 + $0x310] sm:$0xff]
      %v2913 = vld [vmem:[%s13 + $0x318] sm:$0xff]
      %v2914 = vld [vmem:[%s13 + $0x320] sm:$0xff]
      %v2915 = vld [vmem:[%s13 + $0x328] sm:$0xf]
      %v2916 = vld [vmem:[%s13 + $0x32c] sm:$0xff]
      %v2917 = vld [vmem:[%s13 + $0x334] sm:$0xff]
      %v2918 = vld [vmem:[%s13 + $0x33c] sm:$0xff]
      %v2919 = vld [vmem:[%s13 + $0x344] sm:$0xf]
      %v2920 = vld [vmem:[%s13 + $0x348] sm:$0xff]
      %v2921 = vld [vmem:[%s13 + $0x350] sm:$0xff]
      %v2922 = vld [vmem:[%s13 + $0x358] sm:$0xff]
      %v2923 = vld [vmem:[%s13 + $0x360] sm:$0xf]
      %v2924 = vld [vmem:[%s13 + $0x364] sm:$0xff]
      %v2925 = vld [vmem:[%s13 + $0x36c] sm:$0xff]
      %v2926 = vld [vmem:[%s13 + $0x374] sm:$0xff]
      %v2927 = vld [vmem:[%s13 + $0x37c] sm:$0xf]
      %v2928 = vld [vmem:[%s13 + $0x380] sm:$0xff]
      %v2929 = vld [vmem:[%s13 + $0x388] sm:$0xff]
      %v2930 = vld [vmem:[%s13 + $0x390] sm:$0xff]
      %v2931 = vld [vmem:[%s13 + $0x398] sm:$0xf]
      %v2932 = vld [vmem:[%s13 + $0x39c] sm:$0xff]
      %v2933 = vld [vmem:[%s13 + $0x3a4] sm:$0xff]
      %v2934 = vld [vmem:[%s13 + $0x3ac] sm:$0xff]
      %v2935 = vld [vmem:[%s13 + $0x3b4] sm:$0xf]
      %v2936 = vld [vmem:[%s13 + $0x3b8] sm:$0xff]
      %v2937 = vld [vmem:[%s13 + $0x3c0] sm:$0xff]
      %v2938 = vld [vmem:[%s13 + $0x3c8] sm:$0xff]
      %v2939 = vld [vmem:[%s13 + $0x3d0] sm:$0xf]
      %v2940 = vld [vmem:[%s13 + $0x3d4] sm:$0xff]
      %v2941 = vld [vmem:[%s13 + $0x3dc] sm:$0xff]
      %v2942 = vld [vmem:[%s13 + $0x3e4] sm:$0xff]
      %v2943 = vld [vmem:[%s13 + $0x3ec] sm:$0xf]
      %v2944 = vld [vmem:[%s13 + $0x3f0] sm:$0xff]
      %v2945 = vld [vmem:[%s13 + $0x3f8] sm:$0xff]
      %v2946 = vld [vmem:[%s13 + $0x400] sm:$0xff]
      %v2947 = vld [vmem:[%s13 + $0x408] sm:$0xf]
      %v2948 = vld [vmem:[%s13 + $0x40c] sm:$0xff]
      %v2949 = vld [vmem:[%s13 + $0x414] sm:$0xff]
      %v2950 = vld [vmem:[%s13 + $0x41c] sm:$0xff]
      %v2951 = vld [vmem:[%s13 + $0x424] sm:$0xf]
      %v2952 = vld [vmem:[%s13 + $0x428] sm:$0xff]
      %v2953 = vld [vmem:[%s13 + $0x430] sm:$0xff]
      %v2954 = vld [vmem:[%s13 + $0x438] sm:$0xff]
      %v2955 = vld [vmem:[%s13 + $0x440] sm:$0xf]
      %v2956 = vld [vmem:[%s13 + $0x444] sm:$0xff]
      %v2957 = vld [vmem:[%s13 + $0x44c] sm:$0xff]
      %v2958 = vld [vmem:[%s13 + $0x454] sm:$0xff]
      %v2959 = vld [vmem:[%s13 + $0x45c] sm:$0xf]
      %v2960 = vld [vmem:[%s13 + $0x460] sm:$0xff]
      %v2961 = vld [vmem:[%s13 + $0x468] sm:$0xff]
      %v2962 = vld [vmem:[%s13 + $0x470] sm:$0xff]
      %v2963 = vld [vmem:[%s13 + $0x478] sm:$0xf]
      %v2964 = vld [vmem:[%s13 + $0x47c] sm:$0xff]
      %v2965 = vld [vmem:[%s13 + $0x484] sm:$0xff]
      %v2966 = vld [vmem:[%s13 + $0x48c] sm:$0xff]
      %v2967 = vld [vmem:[%s13 + $0x494] sm:$0xf]
      %v2968 = vld [vmem:[%s13 + $0x498] sm:$0xff]
      %v2969 = vld [vmem:[%s13 + $0x4a0] sm:$0xff]
      %v2970 = vld [vmem:[%s13 + $0x4a8] sm:$0xff]
      %v2971 = vld [vmem:[%s13 + $0x4b0] sm:$0xf]
      %v2972 = vld [vmem:[%s13 + $0x4b4] sm:$0xff]
      %v2973 = vld [vmem:[%s13 + $0x4bc] sm:$0xff]
      %v2974 = vld [vmem:[%s13 + $0x4c4] sm:$0xff]
      %v2975 = vld [vmem:[%s13 + $0x4cc] sm:$0xf]
      %v2976 = vld [vmem:[%s13 + $0x4d0] sm:$0xff]
      %v2977 = vld [vmem:[%s13 + $0x4d8] sm:$0xff]
      %v2978 = vld [vmem:[%s13 + $0x4e0] sm:$0xff]
      %v2979 = vld [vmem:[%s13 + $0x4e8] sm:$0xf]
      %v2980 = vld [vmem:[%s13 + $0x4ec] sm:$0xff]
      %v2981 = vld [vmem:[%s13 + $0x4f4] sm:$0xff]
      %v2982 = vld [vmem:[%s13 + $0x4fc] sm:$0xff]
      %v2983 = vld [vmem:[%s13 + $0x504] sm:$0xf]
      %v2984 = vld [vmem:[%s13 + $0x508] sm:$0xff]
      %v2985 = vld [vmem:[%s13 + $0x510] sm:$0xff]
      %v2986 = vld [vmem:[%s13 + $0x518] sm:$0xff]
      %v2987 = vld [vmem:[%s13 + $0x520] sm:$0xf]
      %v2988 = vld [vmem:[%s13 + $0x524] sm:$0xff]
      %v2989 = vld [vmem:[%s13 + $0x52c] sm:$0xff]
      %v2990 = vld [vmem:[%s13 + $0x534] sm:$0xff]
      %v2991 = vld [vmem:[%s13 + $0x53c] sm:$0xf]
      %v2992 = vld [vmem:[%s13 + $0x540] sm:$0xff]
      %v2993 = vld [vmem:[%s13 + $0x548] sm:$0xff]
      %v2994 = vld [vmem:[%s13 + $0x550] sm:$0xff]
      %v2995 = vld [vmem:[%s13 + $0x558] sm:$0xf]
      %v2996 = vld [vmem:[%s13 + $0x55c] sm:$0xff]
      %v2997 = vld [vmem:[%s13 + $0x564] sm:$0xff]
      %v2998 = vld [vmem:[%s13 + $0x56c] sm:$0xff]
      %v2999 = vld [vmem:[%s13 + $0x574] sm:$0xf]
      %v3000 = vld [vmem:[%s13 + $0x578] sm:$0xff]
      %v3001 = vld [vmem:[%s13 + $0x580] sm:$0xff]
      %v3002 = vld [vmem:[%s13 + $0x588] sm:$0xff]
      %v3003 = vld [vmem:[%s13 + $0x590] sm:$0xf]
      %v3004 = vld [vmem:[%s13 + $0x594] sm:$0xff]
      %v3005 = vld [vmem:[%s13 + $0x59c] sm:$0xff]
      %v3006 = vld [vmem:[%s13 + $0x5a4] sm:$0xff]
      %v3007 = vld [vmem:[%s13 + $0x5ac] sm:$0xf]
      %v3008 = vld [vmem:[%s13 + $0x5b0] sm:$0xff]
      %v3009 = vld [vmem:[%s13 + $0x5b8] sm:$0xff]
      %v3010 = vld [vmem:[%s13 + $0x5c0] sm:$0xff]
      %v3011 = vld [vmem:[%s13 + $0x5c8] sm:$0xf]
      %v3012 = vld [vmem:[%s13 + $0x5cc] sm:$0xff]
      %v3013 = vld [vmem:[%s13 + $0x5d4] sm:$0xff]
      %v3014 = vld [vmem:[%s13 + $0x5dc] sm:$0xff]
      %v3015 = vld [vmem:[%s13 + $0x5e4] sm:$0xf]
      %v3016 = vld [vmem:[%s13 + $0x5e8] sm:$0xff]
      %v3017 = vld [vmem:[%s13 + $0x5f0] sm:$0xff]
      %v3018 = vld [vmem:[%s13 + $0x5f8] sm:$0xff]
      %v3019 = vld [vmem:[%s13 + $0x600] sm:$0xf]
      %v3020 = vld [vmem:[%s13 + $0x604] sm:$0xff]
      %v3021 = vld [vmem:[%s13 + $0x60c] sm:$0xff]
      %v3022 = vld [vmem:[%s13 + $0x614] sm:$0xff]
      %v3023 = vld [vmem:[%s13 + $0x61c] sm:$0xf]
      %v3024 = vld [vmem:[%s13 + $0x620] sm:$0xff]
      %v3025 = vld [vmem:[%s13 + $0x628] sm:$0xff]
      %v3026 = vld [vmem:[%s13 + $0x630] sm:$0xff]
      %v3027 = vld [vmem:[%s13 + $0x638] sm:$0xf]
      %v3028 = vld [vmem:[%s13 + $0x63c] sm:$0xff]
      %v3029 = vld [vmem:[%s13 + $0x644] sm:$0xff]
      %v3030 = vld [vmem:[%s13 + $0x64c] sm:$0xff]
      %v3031 = vld [vmem:[%s13 + $0x654] sm:$0xf]
      %v3032 = vld [vmem:[%s13 + $0x658] sm:$0xff]
      %v3033 = vld [vmem:[%s13 + $0x660] sm:$0xff]
      %v3034 = vld [vmem:[%s13 + $0x668] sm:$0xff]
      %v3035 = vld [vmem:[%s13 + $0x670] sm:$0xf]
      %v3036 = vld [vmem:[%s13 + $0x674] sm:$0xff]
      %v3037 = vld [vmem:[%s13 + $0x67c] sm:$0xff]
      %v3038 = vld [vmem:[%s13 + $0x684] sm:$0xff]
      %v3039 = vld [vmem:[%s13 + $0x68c] sm:$0xf]
      %v3040 = vld [vmem:[%s13 + $0x690] sm:$0xff]
      %v3041 = vld [vmem:[%s13 + $0x698] sm:$0xff]
      %v3042 = vld [vmem:[%s13 + $0x6a0] sm:$0xff]
      %v3043 = vld [vmem:[%s13 + $0x6a8] sm:$0xf]
      %v3044 = vld [vmem:[%s13 + $0x6ac] sm:$0xff]
      %v3045 = vld [vmem:[%s13 + $0x6b4] sm:$0xff]
      %v3046 = vld [vmem:[%s13 + $0x6bc] sm:$0xff]
      %v3047 = vld [vmem:[%s13 + $0x6c4] sm:$0xf]
      %v3048 = vld [vmem:[%s13 + $0x6c8] sm:$0xff]
      %v3049 = vld [vmem:[%s13 + $0x6d0] sm:$0xff]
      %v3050 = vld [vmem:[%s13 + $0x6d8] sm:$0xff]
      %v3051 = vld [vmem:[%s13 + $0x6e0] sm:$0xf]
      %v3052 = vld [vmem:[%s13 + $0x6e4] sm:$0xff]
      %v3053 = vld [vmem:[%s13 + $0x6ec] sm:$0xff]
      %v3054 = vld [vmem:[%s13 + $0x6f4] sm:$0xff]
      %v3055 = vld [vmem:[%s13 + $0x6fc] sm:$0xf]
      %v3056 = vld [vmem:[%s14] sm:$0x7f]
      %v3058 = vlaneseq
      %v3059 = vshrl.u32 %v3058, 7
      %v3060 = vsub.s32 0, %v3059
      %v3061 = vrot.slane %v3056, %v3060
      %v3062 = vlaneseq
      %v3063 = vshrl.u32 %v3062, 7
      %v3064 = vsub.s32 1, %v3063
      %v3065 = vrot.slane %v3056, %v3064
      %v3066 = vlaneseq
      %v3067 = vshrl.u32 %v3066, 7
      %v3068 = vsub.s32 2, %v3067
      %v3069 = vrot.slane %v3056, %v3068
      %v3070 = vlaneseq
      %v3071 = vshrl.u32 %v3070, 7
      %v3072 = vsub.s32 3, %v3071
      %v3073 = vrot.slane %v3056, %v3072
      %v3074 = vlaneseq
      %v3075 = vshrl.u32 %v3074, 7
      %v3076 = vsub.s32 4, %v3075
      %v3077 = vrot.slane %v3056, %v3076
      %v3078 = vlaneseq
      %v3079 = vshrl.u32 %v3078, 7
      %v3080 = vsub.s32 5, %v3079
      %v3081 = vrot.slane %v3056, %v3080
      %v3082 = vlaneseq
      %v3083 = vshrl.u32 %v3082, 7
      %v3084 = vsub.s32 6, %v3083
      %v3085 = vrot.slane %v3056, %v3084
      %v3349 = vunpack.c.l.b16 %v2800
      %v3350 = vunpack.c.h.b16 %v2800
      %v3351 = vunpack.c.l.b16 %v2801
      %v3352 = vunpack.c.h.b16 %v2801
      %v3353 = vunpack.c.l.b16 %v2802
      %v3354 = vunpack.c.h.b16 %v2802
      %v3355 = vunpack.c.l.b16 %v2803
      %v3356 = vunpack.c.l.b16 %v2804
      %v3357 = vunpack.c.h.b16 %v2804
      %v3358 = vunpack.c.l.b16 %v2805
      %v3359 = vunpack.c.h.b16 %v2805
      %v3360 = vunpack.c.l.b16 %v2806
      %v3361 = vunpack.c.h.b16 %v2806
      %v3362 = vunpack.c.l.b16 %v2807
      %v3363 = vunpack.c.l.b16 %v2808
      %v3364 = vunpack.c.h.b16 %v2808
      %v3365 = vunpack.c.l.b16 %v2809
      %v3366 = vunpack.c.h.b16 %v2809
      %v3367 = vunpack.c.l.b16 %v2810
      %v3368 = vunpack.c.h.b16 %v2810
      %v3369 = vunpack.c.l.b16 %v2811
      %v3370 = vunpack.c.l.b16 %v2812
      %v3371 = vunpack.c.h.b16 %v2812
      %v3372 = vunpack.c.l.b16 %v2813
      %v3373 = vunpack.c.h.b16 %v2813
      %v3374 = vunpack.c.l.b16 %v2814
      %v3375 = vunpack.c.h.b16 %v2814
      %v3376 = vunpack.c.l.b16 %v2815
      %v3377 = vunpack.c.l.b16 %v2816
      %v3378 = vunpack.c.h.b16 %v2816
      %v3379 = vunpack.c.l.b16 %v2817
      %v3380 = vunpack.c.h.b16 %v2817
      %v3381 = vunpack.c.l.b16 %v2818
      %v3382 = vunpack.c.h.b16 %v2818
      %v3383 = vunpack.c.l.b16 %v2819
      %v3384 = vunpack.c.l.b16 %v2820
      %v3385 = vunpack.c.h.b16 %v2820
      %v3386 = vunpack.c.l.b16 %v2821
      %v3387 = vunpack.c.h.b16 %v2821
      %v3388 = vunpack.c.l.b16 %v2822
      %v3389 = vunpack.c.h.b16 %v2822
      %v3390 = vunpack.c.l.b16 %v2823
      %v3391 = vunpack.c.l.b16 %v2824
      %v3392 = vunpack.c.h.b16 %v2824
      %v3393 = vunpack.c.l.b16 %v2825
      %v3394 = vunpack.c.h.b16 %v2825
      %v3395 = vunpack.c.l.b16 %v2826
      %v3396 = vunpack.c.h.b16 %v2826
      %v3397 = vunpack.c.l.b16 %v2827
      %v3398 = vunpack.c.l.b16 %v2828
      %v3399 = vunpack.c.h.b16 %v2828
      %v3400 = vunpack.c.l.b16 %v2829
      %v3401 = vunpack.c.h.b16 %v2829
      %v3402 = vunpack.c.l.b16 %v2830
      %v3403 = vunpack.c.h.b16 %v2830
      %v3404 = vunpack.c.l.b16 %v2831
      %v3405 = vunpack.c.l.b16 %v2832
      %v3406 = vunpack.c.h.b16 %v2832
      %v3407 = vunpack.c.l.b16 %v2833
      %v3408 = vunpack.c.h.b16 %v2833
      %v3409 = vunpack.c.l.b16 %v2834
      %v3410 = vunpack.c.h.b16 %v2834
      %v3411 = vunpack.c.l.b16 %v2835
      %v3412 = vunpack.c.l.b16 %v2836
      %v3413 = vunpack.c.h.b16 %v2836
      %v3414 = vunpack.c.l.b16 %v2837
      %v3415 = vunpack.c.h.b16 %v2837
      %v3416 = vunpack.c.l.b16 %v2838
      %v3417 = vunpack.c.h.b16 %v2838
      %v3418 = vunpack.c.l.b16 %v2839
      %v3419 = vunpack.c.l.b16 %v2840
      %v3420 = vunpack.c.h.b16 %v2840
      %v3421 = vunpack.c.l.b16 %v2841
      %v3422 = vunpack.c.h.b16 %v2841
      %v3423 = vunpack.c.l.b16 %v2842
      %v3424 = vunpack.c.h.b16 %v2842
      %v3425 = vunpack.c.l.b16 %v2843
      %v3426 = vunpack.c.l.b16 %v2844
      %v3427 = vunpack.c.h.b16 %v2844
      %v3428 = vunpack.c.l.b16 %v2845
      %v3429 = vunpack.c.h.b16 %v2845
      %v3430 = vunpack.c.l.b16 %v2846
      %v3431 = vunpack.c.h.b16 %v2846
      %v3432 = vunpack.c.l.b16 %v2847
      %v3433 = vunpack.c.l.b16 %v2848
      %v3434 = vunpack.c.h.b16 %v2848
      %v3435 = vunpack.c.l.b16 %v2849
      %v3436 = vunpack.c.h.b16 %v2849
      %v3437 = vunpack.c.l.b16 %v2850
      %v3438 = vunpack.c.h.b16 %v2850
      %v3439 = vunpack.c.l.b16 %v2851
      %v3440 = vunpack.c.l.b16 %v2852
      %v3441 = vunpack.c.h.b16 %v2852
      %v3442 = vunpack.c.l.b16 %v2853
      %v3443 = vunpack.c.h.b16 %v2853
      %v3444 = vunpack.c.l.b16 %v2854
      %v3445 = vunpack.c.h.b16 %v2854
      %v3446 = vunpack.c.l.b16 %v2855
      %v3447 = vunpack.c.l.b16 %v2856
      %v3448 = vunpack.c.h.b16 %v2856
      %v3449 = vunpack.c.l.b16 %v2857
      %v3450 = vunpack.c.h.b16 %v2857
      %v3451 = vunpack.c.l.b16 %v2858
      %v3452 = vunpack.c.h.b16 %v2858
      %v3453 = vunpack.c.l.b16 %v2859
      %v3454 = vunpack.c.l.b16 %v2860
      %v3455 = vunpack.c.h.b16 %v2860
      %v3456 = vunpack.c.l.b16 %v2861
      %v3457 = vunpack.c.h.b16 %v2861
      %v3458 = vunpack.c.l.b16 %v2862
      %v3459 = vunpack.c.h.b16 %v2862
      %v3460 = vunpack.c.l.b16 %v2863
      %v3461 = vunpack.c.l.b16 %v2864
      %v3462 = vunpack.c.h.b16 %v2864
      %v3463 = vunpack.c.l.b16 %v2865
      %v3464 = vunpack.c.h.b16 %v2865
      %v3465 = vunpack.c.l.b16 %v2866
      %v3466 = vunpack.c.h.b16 %v2866
      %v3467 = vunpack.c.l.b16 %v2867
      %v3468 = vunpack.c.l.b16 %v2868
      %v3469 = vunpack.c.h.b16 %v2868
      %v3470 = vunpack.c.l.b16 %v2869
      %v3471 = vunpack.c.h.b16 %v2869
      %v3472 = vunpack.c.l.b16 %v2870
      %v3473 = vunpack.c.h.b16 %v2870
      %v3474 = vunpack.c.l.b16 %v2871
      %v3475 = vunpack.c.l.b16 %v2872
      %v3476 = vunpack.c.h.b16 %v2872
      %v3477 = vunpack.c.l.b16 %v2873
      %v3478 = vunpack.c.h.b16 %v2873
      %v3479 = vunpack.c.l.b16 %v2874
      %v3480 = vunpack.c.h.b16 %v2874
      %v3481 = vunpack.c.l.b16 %v2875
      %v3482 = vunpack.c.l.b16 %v2876
      %v3483 = vunpack.c.h.b16 %v2876
      %v3484 = vunpack.c.l.b16 %v2877
      %v3485 = vunpack.c.h.b16 %v2877
      %v3486 = vunpack.c.l.b16 %v2878
      %v3487 = vunpack.c.h.b16 %v2878
      %v3488 = vunpack.c.l.b16 %v2879
      %v3489 = vunpack.c.l.b16 %v2880
      %v3490 = vunpack.c.h.b16 %v2880
      %v3491 = vunpack.c.l.b16 %v2881
      %v3492 = vunpack.c.h.b16 %v2881
      %v3493 = vunpack.c.l.b16 %v2882
      %v3494 = vunpack.c.h.b16 %v2882
      %v3495 = vunpack.c.l.b16 %v2883
      %v3496 = vunpack.c.l.b16 %v2884
      %v3497 = vunpack.c.h.b16 %v2884
      %v3498 = vunpack.c.l.b16 %v2885
      %v3499 = vunpack.c.h.b16 %v2885
      %v3500 = vunpack.c.l.b16 %v2886
      %v3501 = vunpack.c.h.b16 %v2886
      %v3502 = vunpack.c.l.b16 %v2887
      %v3503 = vunpack.c.l.b16 %v2888
      %v3504 = vunpack.c.h.b16 %v2888
      %v3505 = vunpack.c.l.b16 %v2889
      %v3506 = vunpack.c.h.b16 %v2889
      %v3507 = vunpack.c.l.b16 %v2890
      %v3508 = vunpack.c.h.b16 %v2890
      %v3509 = vunpack.c.l.b16 %v2891
      %v3510 = vunpack.c.l.b16 %v2892
      %v3511 = vunpack.c.h.b16 %v2892
      %v3512 = vunpack.c.l.b16 %v2893
      %v3513 = vunpack.c.h.b16 %v2893
      %v3514 = vunpack.c.l.b16 %v2894
      %v3515 = vunpack.c.h.b16 %v2894
      %v3516 = vunpack.c.l.b16 %v2895
      %v3517 = vunpack.c.l.b16 %v2896
      %v3518 = vunpack.c.h.b16 %v2896
      %v3519 = vunpack.c.l.b16 %v2897
      %v3520 = vunpack.c.h.b16 %v2897
      %v3521 = vunpack.c.l.b16 %v2898
      %v3522 = vunpack.c.h.b16 %v2898
      %v3523 = vunpack.c.l.b16 %v2899
      %v3524 = vunpack.c.l.b16 %v2900
      %v3525 = vunpack.c.h.b16 %v2900
      %v3526 = vunpack.c.l.b16 %v2901
      %v3527 = vunpack.c.h.b16 %v2901
      %v3528 = vunpack.c.l.b16 %v2902
      %v3529 = vunpack.c.h.b16 %v2902
      %v3530 = vunpack.c.l.b16 %v2903
      %v3531 = vunpack.c.l.b16 %v2904
      %v3532 = vunpack.c.h.b16 %v2904
      %v3533 = vunpack.c.l.b16 %v2905
      %v3534 = vunpack.c.h.b16 %v2905
      %v3535 = vunpack.c.l.b16 %v2906
      %v3536 = vunpack.c.h.b16 %v2906
      %v3537 = vunpack.c.l.b16 %v2907
      %v3538 = vunpack.c.l.b16 %v2908
      %v3539 = vunpack.c.h.b16 %v2908
      %v3540 = vunpack.c.l.b16 %v2909
      %v3541 = vunpack.c.h.b16 %v2909
      %v3542 = vunpack.c.l.b16 %v2910
      %v3543 = vunpack.c.h.b16 %v2910
      %v3544 = vunpack.c.l.b16 %v2911
      %v3545 = vunpack.c.l.b16 %v2912
      %v3546 = vunpack.c.h.b16 %v2912
      %v3547 = vunpack.c.l.b16 %v2913
      %v3548 = vunpack.c.h.b16 %v2913
      %v3549 = vunpack.c.l.b16 %v2914
      %v3550 = vunpack.c.h.b16 %v2914
      %v3551 = vunpack.c.l.b16 %v2915
      %v3552 = vunpack.c.l.b16 %v2916
      %v3553 = vunpack.c.h.b16 %v2916
      %v3554 = vunpack.c.l.b16 %v2917
      %v3555 = vunpack.c.h.b16 %v2917
      %v3556 = vunpack.c.l.b16 %v2918
      %v3557 = vunpack.c.h.b16 %v2918
      %v3558 = vunpack.c.l.b16 %v2919
      %v3559 = vunpack.c.l.b16 %v2920
      %v3560 = vunpack.c.h.b16 %v2920
      %v3561 = vunpack.c.l.b16 %v2921
      %v3562 = vunpack.c.h.b16 %v2921
      %v3563 = vunpack.c.l.b16 %v2922
      %v3564 = vunpack.c.h.b16 %v2922
      %v3565 = vunpack.c.l.b16 %v2923
      %v3566 = vunpack.c.l.b16 %v2924
      %v3567 = vunpack.c.h.b16 %v2924
      %v3568 = vunpack.c.l.b16 %v2925
      %v3569 = vunpack.c.h.b16 %v2925
      %v3570 = vunpack.c.l.b16 %v2926
      %v3571 = vunpack.c.h.b16 %v2926
      %v3572 = vunpack.c.l.b16 %v2927
      %v3573 = vunpack.c.l.b16 %v2928
      %v3574 = vunpack.c.h.b16 %v2928
      %v3575 = vunpack.c.l.b16 %v2929
      %v3576 = vunpack.c.h.b16 %v2929
      %v3577 = vunpack.c.l.b16 %v2930
      %v3578 = vunpack.c.h.b16 %v2930
      %v3579 = vunpack.c.l.b16 %v2931
      %v3580 = vunpack.c.l.b16 %v2932
      %v3581 = vunpack.c.h.b16 %v2932
      %v3582 = vunpack.c.l.b16 %v2933
      %v3583 = vunpack.c.h.b16 %v2933
      %v3584 = vunpack.c.l.b16 %v2934
      %v3585 = vunpack.c.h.b16 %v2934
      %v3586 = vunpack.c.l.b16 %v2935
      %v3587 = vunpack.c.l.b16 %v2936
      %v3588 = vunpack.c.h.b16 %v2936
      %v3589 = vunpack.c.l.b16 %v2937
      %v3590 = vunpack.c.h.b16 %v2937
      %v3591 = vunpack.c.l.b16 %v2938
      %v3592 = vunpack.c.h.b16 %v2938
      %v3593 = vunpack.c.l.b16 %v2939
      %v3594 = vunpack.c.l.b16 %v2940
      %v3595 = vunpack.c.h.b16 %v2940
      %v3596 = vunpack.c.l.b16 %v2941
      %v3597 = vunpack.c.h.b16 %v2941
      %v3598 = vunpack.c.l.b16 %v2942
      %v3599 = vunpack.c.h.b16 %v2942
      %v3600 = vunpack.c.l.b16 %v2943
      %v3601 = vunpack.c.l.b16 %v2944
      %v3602 = vunpack.c.h.b16 %v2944
      %v3603 = vunpack.c.l.b16 %v2945
      %v3604 = vunpack.c.h.b16 %v2945
      %v3605 = vunpack.c.l.b16 %v2946
      %v3606 = vunpack.c.h.b16 %v2946
      %v3607 = vunpack.c.l.b16 %v2947
      %v3608 = vunpack.c.l.b16 %v2948
      %v3609 = vunpack.c.h.b16 %v2948
      %v3610 = vunpack.c.l.b16 %v2949
      %v3611 = vunpack.c.h.b16 %v2949
      %v3612 = vunpack.c.l.b16 %v2950
      %v3613 = vunpack.c.h.b16 %v2950
      %v3614 = vunpack.c.l.b16 %v2951
      %v3615 = vunpack.c.l.b16 %v2952
      %v3616 = vunpack.c.h.b16 %v2952
      %v3617 = vunpack.c.l.b16 %v2953
      %v3618 = vunpack.c.h.b16 %v2953
      %v3619 = vunpack.c.l.b16 %v2954
      %v3620 = vunpack.c.h.b16 %v2954
      %v3621 = vunpack.c.l.b16 %v2955
      %v3622 = vunpack.c.l.b16 %v2956
      %v3623 = vunpack.c.h.b16 %v2956
      %v3624 = vunpack.c.l.b16 %v2957
      %v3625 = vunpack.c.h.b16 %v2957
      %v3626 = vunpack.c.l.b16 %v2958
      %v3627 = vunpack.c.h.b16 %v2958
      %v3628 = vunpack.c.l.b16 %v2959
      %v3629 = vunpack.c.l.b16 %v2960
      %v3630 = vunpack.c.h.b16 %v2960
      %v3631 = vunpack.c.l.b16 %v2961
      %v3632 = vunpack.c.h.b16 %v2961
      %v3633 = vunpack.c.l.b16 %v2962
      %v3634 = vunpack.c.h.b16 %v2962
      %v3635 = vunpack.c.l.b16 %v2963
      %v3636 = vunpack.c.l.b16 %v2964
      %v3637 = vunpack.c.h.b16 %v2964
      %v3638 = vunpack.c.l.b16 %v2965
      %v3639 = vunpack.c.h.b16 %v2965
      %v3640 = vunpack.c.l.b16 %v2966
      %v3641 = vunpack.c.h.b16 %v2966
      %v3642 = vunpack.c.l.b16 %v2967
      %v3643 = vunpack.c.l.b16 %v2968
      %v3644 = vunpack.c.h.b16 %v2968
      %v3645 = vunpack.c.l.b16 %v2969
      %v3646 = vunpack.c.h.b16 %v2969
      %v3647 = vunpack.c.l.b16 %v2970
      %v3648 = vunpack.c.h.b16 %v2970
      %v3649 = vunpack.c.l.b16 %v2971
      %v3650 = vunpack.c.l.b16 %v2972
      %v3651 = vunpack.c.h.b16 %v2972
      %v3652 = vunpack.c.l.b16 %v2973
      %v3653 = vunpack.c.h.b16 %v2973
      %v3654 = vunpack.c.l.b16 %v2974
      %v3655 = vunpack.c.h.b16 %v2974
      %v3656 = vunpack.c.l.b16 %v2975
      %v3657 = vunpack.c.l.b16 %v2976
      %v3658 = vunpack.c.h.b16 %v2976
      %v3659 = vunpack.c.l.b16 %v2977
      %v3660 = vunpack.c.h.b16 %v2977
      %v3661 = vunpack.c.l.b16 %v2978
      %v3662 = vunpack.c.h.b16 %v2978
      %v3663 = vunpack.c.l.b16 %v2979
      %v3664 = vunpack.c.l.b16 %v2980
      %v3665 = vunpack.c.h.b16 %v2980
      %v3666 = vunpack.c.l.b16 %v2981
      %v3667 = vunpack.c.h.b16 %v2981
      %v3668 = vunpack.c.l.b16 %v2982
      %v3669 = vunpack.c.h.b16 %v2982
      %v3670 = vunpack.c.l.b16 %v2983
      %v3671 = vunpack.c.l.b16 %v2984
      %v3672 = vunpack.c.h.b16 %v2984
      %v3673 = vunpack.c.l.b16 %v2985
      %v3674 = vunpack.c.h.b16 %v2985
      %v3675 = vunpack.c.l.b16 %v2986
      %v3676 = vunpack.c.h.b16 %v2986
      %v3677 = vunpack.c.l.b16 %v2987
      %v3678 = vunpack.c.l.b16 %v2988
      %v3679 = vunpack.c.h.b16 %v2988
      %v3680 = vunpack.c.l.b16 %v2989
      %v3681 = vunpack.c.h.b16 %v2989
      %v3682 = vunpack.c.l.b16 %v2990
      %v3683 = vunpack.c.h.b16 %v2990
      %v3684 = vunpack.c.l.b16 %v2991
      %v3685 = vunpack.c.l.b16 %v2992
      %v3686 = vunpack.c.h.b16 %v2992
      %v3687 = vunpack.c.l.b16 %v2993
      %v3688 = vunpack.c.h.b16 %v2993
      %v3689 = vunpack.c.l.b16 %v2994
      %v3690 = vunpack.c.h.b16 %v2994
      %v3691 = vunpack.c.l.b16 %v2995
      %v3692 = vunpack.c.l.b16 %v2996
      %v3693 = vunpack.c.h.b16 %v2996
      %v3694 = vunpack.c.l.b16 %v2997
      %v3695 = vunpack.c.h.b16 %v2997
      %v3696 = vunpack.c.l.b16 %v2998
      %v3697 = vunpack.c.h.b16 %v2998
      %v3698 = vunpack.c.l.b16 %v2999
      %v3699 = vunpack.c.l.b16 %v3000
      %v3700 = vunpack.c.h.b16 %v3000
      %v3701 = vunpack.c.l.b16 %v3001
      %v3702 = vunpack.c.h.b16 %v3001
      %v3703 = vunpack.c.l.b16 %v3002
      %v3704 = vunpack.c.h.b16 %v3002
      %v3705 = vunpack.c.l.b16 %v3003
      %v3706 = vunpack.c.l.b16 %v3004
      %v3707 = vunpack.c.h.b16 %v3004
      %v3708 = vunpack.c.l.b16 %v3005
      %v3709 = vunpack.c.h.b16 %v3005
      %v3710 = vunpack.c.l.b16 %v3006
      %v3711 = vunpack.c.h.b16 %v3006
      %v3712 = vunpack.c.l.b16 %v3007
      %v3713 = vunpack.c.l.b16 %v3008
      %v3714 = vunpack.c.h.b16 %v3008
      %v3715 = vunpack.c.l.b16 %v3009
      %v3716 = vunpack.c.h.b16 %v3009
      %v3717 = vunpack.c.l.b16 %v3010
      %v3718 = vunpack.c.h.b16 %v3010
      %v3719 = vunpack.c.l.b16 %v3011
      %v3720 = vunpack.c.l.b16 %v3012
      %v3721 = vunpack.c.h.b16 %v3012
      %v3722 = vunpack.c.l.b16 %v3013
      %v3723 = vunpack.c.h.b16 %v3013
      %v3724 = vunpack.c.l.b16 %v3014
      %v3725 = vunpack.c.h.b16 %v3014
      %v3726 = vunpack.c.l.b16 %v3015
      %v3727 = vunpack.c.l.b16 %v3016
      %v3728 = vunpack.c.h.b16 %v3016
      %v3729 = vunpack.c.l.b16 %v3017
      %v3730 = vunpack.c.h.b16 %v3017
      %v3731 = vunpack.c.l.b16 %v3018
      %v3732 = vunpack.c.h.b16 %v3018
      %v3733 = vunpack.c.l.b16 %v3019
      %v3734 = vunpack.c.l.b16 %v3020
      %v3735 = vunpack.c.h.b16 %v3020
      %v3736 = vunpack.c.l.b16 %v3021
      %v3737 = vunpack.c.h.b16 %v3021
      %v3738 = vunpack.c.l.b16 %v3022
      %v3739 = vunpack.c.h.b16 %v3022
      %v3740 = vunpack.c.l.b16 %v3023
      %v3741 = vunpack.c.l.b16 %v3024
      %v3742 = vunpack.c.h.b16 %v3024
      %v3743 = vunpack.c.l.b16 %v3025
      %v3744 = vunpack.c.h.b16 %v3025
      %v3745 = vunpack.c.l.b16 %v3026
      %v3746 = vunpack.c.h.b16 %v3026
      %v3747 = vunpack.c.l.b16 %v3027
      %v3748 = vunpack.c.l.b16 %v3028
      %v3749 = vunpack.c.h.b16 %v3028
      %v3750 = vunpack.c.l.b16 %v3029
      %v3751 = vunpack.c.h.b16 %v3029
      %v3752 = vunpack.c.l.b16 %v3030
      %v3753 = vunpack.c.h.b16 %v3030
      %v3754 = vunpack.c.l.b16 %v3031
      %v3755 = vunpack.c.l.b16 %v3032
      %v3756 = vunpack.c.h.b16 %v3032
      %v3757 = vunpack.c.l.b16 %v3033
      %v3758 = vunpack.c.h.b16 %v3033
      %v3759 = vunpack.c.l.b16 %v3034
      %v3760 = vunpack.c.h.b16 %v3034
      %v3761 = vunpack.c.l.b16 %v3035
      %v3762 = vunpack.c.l.b16 %v3036
      %v3763 = vunpack.c.h.b16 %v3036
      %v3764 = vunpack.c.l.b16 %v3037
      %v3765 = vunpack.c.h.b16 %v3037
      %v3766 = vunpack.c.l.b16 %v3038
      %v3767 = vunpack.c.h.b16 %v3038
      %v3768 = vunpack.c.l.b16 %v3039
      %v3769 = vunpack.c.l.b16 %v3040
      %v3770 = vunpack.c.h.b16 %v3040
      %v3771 = vunpack.c.l.b16 %v3041
      %v3772 = vunpack.c.h.b16 %v3041
      %v3773 = vunpack.c.l.b16 %v3042
      %v3774 = vunpack.c.h.b16 %v3042
      %v3775 = vunpack.c.l.b16 %v3043
      %v3776 = vunpack.c.l.b16 %v3044
      %v3777 = vunpack.c.h.b16 %v3044
      %v3778 = vunpack.c.l.b16 %v3045
      %v3779 = vunpack.c.h.b16 %v3045
      %v3780 = vunpack.c.l.b16 %v3046
      %v3781 = vunpack.c.h.b16 %v3046
      %v3782 = vunpack.c.l.b16 %v3047
      %v3783 = vunpack.c.l.b16 %v3048
      %v3784 = vunpack.c.h.b16 %v3048
      %v3785 = vunpack.c.l.b16 %v3049
      %v3786 = vunpack.c.h.b16 %v3049
      %v3787 = vunpack.c.l.b16 %v3050
      %v3788 = vunpack.c.h.b16 %v3050
      %v3789 = vunpack.c.l.b16 %v3051
      %v3790 = vunpack.c.l.b16 %v3052
      %v3791 = vunpack.c.h.b16 %v3052
      %v3792 = vunpack.c.l.b16 %v3053
      %v3793 = vunpack.c.h.b16 %v3053
      %v3794 = vunpack.c.l.b16 %v3054
      %v3795 = vunpack.c.h.b16 %v3054
      %v3796 = vunpack.c.l.b16 %v3055
      %v3797 = vpack.c.b16 %v3356, %v3349
      %v3798 = vpack.c.b16 %v3357, %v3350
      %v3799 = vpack.c.b16 %v3358, %v3351
      %v3800 = vpack.c.b16 %v3359, %v3352
      %v3801 = vpack.c.b16 %v3360, %v3353
      %v3802 = vpack.c.b16 %v3361, %v3354
      %v3803 = vpack.c.b16 %v3362, %v3355
      %v3804 = vpack.c.b16 %v3370, %v3363
      %v3805 = vpack.c.b16 %v3371, %v3364
      %v3806 = vpack.c.b16 %v3372, %v3365
      %v3807 = vpack.c.b16 %v3373, %v3366
      %v3808 = vpack.c.b16 %v3374, %v3367
      %v3809 = vpack.c.b16 %v3375, %v3368
      %v3810 = vpack.c.b16 %v3376, %v3369
      %v3811 = vpack.c.b16 %v3384, %v3377
      %v3812 = vpack.c.b16 %v3385, %v3378
      %v3813 = vpack.c.b16 %v3386, %v3379
      %v3814 = vpack.c.b16 %v3387, %v3380
      %v3815 = vpack.c.b16 %v3388, %v3381
      %v3816 = vpack.c.b16 %v3389, %v3382
      %v3817 = vpack.c.b16 %v3390, %v3383
      %v3818 = vpack.c.b16 %v3398, %v3391
      %v3819 = vpack.c.b16 %v3399, %v3392
      %v3820 = vpack.c.b16 %v3400, %v3393
      %v3821 = vpack.c.b16 %v3401, %v3394
      %v3822 = vpack.c.b16 %v3402, %v3395
      %v3823 = vpack.c.b16 %v3403, %v3396
      %v3824 = vpack.c.b16 %v3404, %v3397
      %v3825 = vpack.c.b16 %v3412, %v3405
      %v3826 = vpack.c.b16 %v3413, %v3406
      %v3827 = vpack.c.b16 %v3414, %v3407
      %v3828 = vpack.c.b16 %v3415, %v3408
      %v3829 = vpack.c.b16 %v3416, %v3409
      %v3830 = vpack.c.b16 %v3417, %v3410
      %v3831 = vpack.c.b16 %v3418, %v3411
      %v3832 = vpack.c.b16 %v3426, %v3419
      %v3833 = vpack.c.b16 %v3427, %v3420
      %v3834 = vpack.c.b16 %v3428, %v3421
      %v3835 = vpack.c.b16 %v3429, %v3422
      %v3836 = vpack.c.b16 %v3430, %v3423
      %v3837 = vpack.c.b16 %v3431, %v3424
      %v3838 = vpack.c.b16 %v3432, %v3425
      %v3839 = vpack.c.b16 %v3440, %v3433
      %v3840 = vpack.c.b16 %v3441, %v3434
      %v3841 = vpack.c.b16 %v3442, %v3435
      %v3842 = vpack.c.b16 %v3443, %v3436
      %v3843 = vpack.c.b16 %v3444, %v3437
      %v3844 = vpack.c.b16 %v3445, %v3438
      %v3845 = vpack.c.b16 %v3446, %v3439
      %v3846 = vpack.c.b16 %v3454, %v3447
      %v3847 = vpack.c.b16 %v3455, %v3448
      %v3848 = vpack.c.b16 %v3456, %v3449
      %v3849 = vpack.c.b16 %v3457, %v3450
      %v3850 = vpack.c.b16 %v3458, %v3451
      %v3851 = vpack.c.b16 %v3459, %v3452
      %v3852 = vpack.c.b16 %v3460, %v3453
      %v3853 = vpack.c.b16 %v3468, %v3461
      %v3854 = vpack.c.b16 %v3469, %v3462
      %v3855 = vpack.c.b16 %v3470, %v3463
      %v3856 = vpack.c.b16 %v3471, %v3464
      %v3857 = vpack.c.b16 %v3472, %v3465
      %v3858 = vpack.c.b16 %v3473, %v3466
      %v3859 = vpack.c.b16 %v3474, %v3467
      %v3860 = vpack.c.b16 %v3482, %v3475
      %v3861 = vpack.c.b16 %v3483, %v3476
      %v3862 = vpack.c.b16 %v3484, %v3477
      %v3863 = vpack.c.b16 %v3485, %v3478
      %v3864 = vpack.c.b16 %v3486, %v3479
      %v3865 = vpack.c.b16 %v3487, %v3480
      %v3866 = vpack.c.b16 %v3488, %v3481
      %v3867 = vpack.c.b16 %v3496, %v3489
      %v3868 = vpack.c.b16 %v3497, %v3490
      %v3869 = vpack.c.b16 %v3498, %v3491
      %v3870 = vpack.c.b16 %v3499, %v3492
      %v3871 = vpack.c.b16 %v3500, %v3493
      %v3872 = vpack.c.b16 %v3501, %v3494
      %v3873 = vpack.c.b16 %v3502, %v3495
      %v3874 = vpack.c.b16 %v3510, %v3503
      %v3875 = vpack.c.b16 %v3511, %v3504
      %v3876 = vpack.c.b16 %v3512, %v3505
      %v3877 = vpack.c.b16 %v3513, %v3506
      %v3878 = vpack.c.b16 %v3514, %v3507
      %v3879 = vpack.c.b16 %v3515, %v3508
      %v3880 = vpack.c.b16 %v3516, %v3509
      %v3881 = vpack.c.b16 %v3524, %v3517
      %v3882 = vpack.c.b16 %v3525, %v3518
      %v3883 = vpack.c.b16 %v3526, %v3519
      %v3884 = vpack.c.b16 %v3527, %v3520
      %v3885 = vpack.c.b16 %v3528, %v3521
      %v3886 = vpack.c.b16 %v3529, %v3522
      %v3887 = vpack.c.b16 %v3530, %v3523
      %v3888 = vpack.c.b16 %v3538, %v3531
      %v3889 = vpack.c.b16 %v3539, %v3532
      %v3890 = vpack.c.b16 %v3540, %v3533
      %v3891 = vpack.c.b16 %v3541, %v3534
      %v3892 = vpack.c.b16 %v3542, %v3535
      %v3893 = vpack.c.b16 %v3543, %v3536
      %v3894 = vpack.c.b16 %v3544, %v3537
      %v3895 = vpack.c.b16 %v3552, %v3545
      %v3896 = vpack.c.b16 %v3553, %v3546
      %v3897 = vpack.c.b16 %v3554, %v3547
      %v3898 = vpack.c.b16 %v3555, %v3548
      %v3899 = vpack.c.b16 %v3556, %v3549
      %v3900 = vpack.c.b16 %v3557, %v3550
      %v3901 = vpack.c.b16 %v3558, %v3551
      %v3902 = vpack.c.b16 %v3566, %v3559
      %v3903 = vpack.c.b16 %v3567, %v3560
      %v3904 = vpack.c.b16 %v3568, %v3561
      %v3905 = vpack.c.b16 %v3569, %v3562
      %v3906 = vpack.c.b16 %v3570, %v3563
      %v3907 = vpack.c.b16 %v3571, %v3564
      %v3908 = vpack.c.b16 %v3572, %v3565
      %v3909 = vpack.c.b16 %v3580, %v3573
      %v3910 = vpack.c.b16 %v3581, %v3574
      %v3911 = vpack.c.b16 %v3582, %v3575
      %v3912 = vpack.c.b16 %v3583, %v3576
      %v3913 = vpack.c.b16 %v3584, %v3577
      %v3914 = vpack.c.b16 %v3585, %v3578
      %v3915 = vpack.c.b16 %v3586, %v3579
      %v3916 = vpack.c.b16 %v3594, %v3587
      %v3917 = vpack.c.b16 %v3595, %v3588
      %v3918 = vpack.c.b16 %v3596, %v3589
      %v3919 = vpack.c.b16 %v3597, %v3590
      %v3920 = vpack.c.b16 %v3598, %v3591
      %v3921 = vpack.c.b16 %v3599, %v3592
      %v3922 = vpack.c.b16 %v3600, %v3593
      %v3923 = vpack.c.b16 %v3608, %v3601
      %v3924 = vpack.c.b16 %v3609, %v3602
      %v3925 = vpack.c.b16 %v3610, %v3603
      %v3926 = vpack.c.b16 %v3611, %v3604
      %v3927 = vpack.c.b16 %v3612, %v3605
      %v3928 = vpack.c.b16 %v3613, %v3606
      %v3929 = vpack.c.b16 %v3614, %v3607
      %v3930 = vpack.c.b16 %v3622, %v3615
      %v3931 = vpack.c.b16 %v3623, %v3616
      %v3932 = vpack.c.b16 %v3624, %v3617
      %v3933 = vpack.c.b16 %v3625, %v3618
      %v3934 = vpack.c.b16 %v3626, %v3619
      %v3935 = vpack.c.b16 %v3627, %v3620
      %v3936 = vpack.c.b16 %v3628, %v3621
      %v3937 = vpack.c.b16 %v3636, %v3629
      %v3938 = vpack.c.b16 %v3637, %v3630
      %v3939 = vpack.c.b16 %v3638, %v3631
      %v3940 = vpack.c.b16 %v3639, %v3632
      %v3941 = vpack.c.b16 %v3640, %v3633
      %v3942 = vpack.c.b16 %v3641, %v3634
      %v3943 = vpack.c.b16 %v3642, %v3635
      %v3944 = vpack.c.b16 %v3650, %v3643
      %v3945 = vpack.c.b16 %v3651, %v3644
      %v3946 = vpack.c.b16 %v3652, %v3645
      %v3947 = vpack.c.b16 %v3653, %v3646
      %v3948 = vpack.c.b16 %v3654, %v3647
      %v3949 = vpack.c.b16 %v3655, %v3648
      %v3950 = vpack.c.b16 %v3656, %v3649
      %v3951 = vpack.c.b16 %v3664, %v3657
      %v3952 = vpack.c.b16 %v3665, %v3658
      %v3953 = vpack.c.b16 %v3666, %v3659
      %v3954 = vpack.c.b16 %v3667, %v3660
      %v3955 = vpack.c.b16 %v3668, %v3661
      %v3956 = vpack.c.b16 %v3669, %v3662
      %v3957 = vpack.c.b16 %v3670, %v3663
      %v3958 = vpack.c.b16 %v3678, %v3671
      %v3959 = vpack.c.b16 %v3679, %v3672
      %v3960 = vpack.c.b16 %v3680, %v3673
      %v3961 = vpack.c.b16 %v3681, %v3674
      %v3962 = vpack.c.b16 %v3682, %v3675
      %v3963 = vpack.c.b16 %v3683, %v3676
      %v3964 = vpack.c.b16 %v3684, %v3677
      %v3965 = vpack.c.b16 %v3692, %v3685
      %v3966 = vpack.c.b16 %v3693, %v3686
      %v3967 = vpack.c.b16 %v3694, %v3687
      %v3968 = vpack.c.b16 %v3695, %v3688
      %v3969 = vpack.c.b16 %v3696, %v3689
      %v3970 = vpack.c.b16 %v3697, %v3690
      %v3971 = vpack.c.b16 %v3698, %v3691
      %v3972 = vpack.c.b16 %v3706, %v3699
      %v3973 = vpack.c.b16 %v3707, %v3700
      %v3974 = vpack.c.b16 %v3708, %v3701
      %v3975 = vpack.c.b16 %v3709, %v3702
      %v3976 = vpack.c.b16 %v3710, %v3703
      %v3977 = vpack.c.b16 %v3711, %v3704
      %v3978 = vpack.c.b16 %v3712, %v3705
      %v3979 = vpack.c.b16 %v3720, %v3713
      %v3980 = vpack.c.b16 %v3721, %v3714
      %v3981 = vpack.c.b16 %v3722, %v3715
      %v3982 = vpack.c.b16 %v3723, %v3716
      %v3983 = vpack.c.b16 %v3724, %v3717
      %v3984 = vpack.c.b16 %v3725, %v3718
      %v3985 = vpack.c.b16 %v3726, %v3719
      %v3986 = vpack.c.b16 %v3734, %v3727
      %v3987 = vpack.c.b16 %v3735, %v3728
      %v3988 = vpack.c.b16 %v3736, %v3729
      %v3989 = vpack.c.b16 %v3737, %v3730
      %v3990 = vpack.c.b16 %v3738, %v3731
      %v3991 = vpack.c.b16 %v3739, %v3732
      %v3992 = vpack.c.b16 %v3740, %v3733
      %v3993 = vpack.c.b16 %v3748, %v3741
      %v3994 = vpack.c.b16 %v3749, %v3742
      %v3995 = vpack.c.b16 %v3750, %v3743
      %v3996 = vpack.c.b16 %v3751, %v3744
      %v3997 = vpack.c.b16 %v3752, %v3745
      %v3998 = vpack.c.b16 %v3753, %v3746
      %v3999 = vpack.c.b16 %v3754, %v3747
      %v4000 = vpack.c.b16 %v3762, %v3755
      %v4001 = vpack.c.b16 %v3763, %v3756
      %v4002 = vpack.c.b16 %v3764, %v3757
      %v4003 = vpack.c.b16 %v3765, %v3758
      %v4004 = vpack.c.b16 %v3766, %v3759
      %v4005 = vpack.c.b16 %v3767, %v3760
      %v4006 = vpack.c.b16 %v3768, %v3761
      %v4007 = vpack.c.b16 %v3776, %v3769
      %v4008 = vpack.c.b16 %v3777, %v3770
      %v4009 = vpack.c.b16 %v3778, %v3771
      %v4010 = vpack.c.b16 %v3779, %v3772
      %v4011 = vpack.c.b16 %v3780, %v3773
      %v4012 = vpack.c.b16 %v3781, %v3774
      %v4013 = vpack.c.b16 %v3782, %v3775
      %v4014 = vpack.c.b16 %v3790, %v3783
      %v4015 = vpack.c.b16 %v3791, %v3784
      %v4016 = vpack.c.b16 %v3792, %v3785
      %v4017 = vpack.c.b16 %v3793, %v3786
      %v4018 = vpack.c.b16 %v3794, %v3787
      %v4019 = vpack.c.b16 %v3795, %v3788
      %v4020 = vpack.c.b16 %v3796, %v3789
      %4245 = vmatprep.subr.bf16.mxu0 %v3798
      %4246 = vmatpush1.bf16.msra.mxu0 %v3797
      %4247 = vmatprep.subr.bf16.mxu0 %v3805
      %4248 = vmatpush1.bf16.msra.mxu0 %v3804
      %4249 = vmatprep.subr.bf16.mxu0 %v3812
      %4250 = vmatpush1.bf16.msra.mxu0 %v3811
      %4251 = vmatprep.subr.bf16.mxu0 %v3819
      %4252 = vmatpush1.bf16.msra.mxu0 %v3818
      %4253 = vmatprep.subr.bf16.mxu0 %v3826
      %4254 = vmatpush1.bf16.msra.mxu0 %v3825
      %4255 = vmatprep.subr.bf16.mxu0 %v3833
      %4256 = vmatpush1.bf16.msra.mxu0 %v3832
      %4257 = vmatprep.subr.bf16.mxu0 %v3840
      %4258 = vmatpush1.bf16.msra.mxu0 %v3839
      %4259 = vmatprep.subr.bf16.mxu0 %v3847
      %4260 = vmatpush1.bf16.msra.mxu0 %v3846
      %4261 = vmatprep.subr.bf16.mxu0 %v3854
      %4262 = vmatpush1.bf16.msra.mxu0 %v3853
      %4263 = vmatprep.subr.bf16.mxu0 %v3861
      %4264 = vmatpush1.bf16.msra.mxu0 %v3860
      %4265 = vmatprep.subr.bf16.mxu0 %v3868
      %4266 = vmatpush1.bf16.msra.mxu0 %v3867
      %4267 = vmatprep.subr.bf16.mxu0 %v3875
      %4268 = vmatpush1.bf16.msra.mxu0 %v3874
      %4269 = vmatprep.subr.bf16.mxu0 %v3882
      %4270 = vmatpush1.bf16.msra.mxu0 %v3881
      %4271 = vmatprep.subr.bf16.mxu0 %v3889
      %4272 = vmatpush1.bf16.msra.mxu0 %v3888
      %4273 = vmatprep.subr.bf16.mxu0 %v3896
      %4274 = vmatpush1.bf16.msra.mxu0 %v3895
      %4275 = vmatprep.subr.bf16.mxu0 %v3903
      %4276 = vmatpush1.bf16.msra.mxu0 %v3902
      %4277 = vmatprep.mubr.bf16.mxu0 %v2797
      %4278 = vmatmul.mubr.bf16.gmra.mrb[0].mxu0 %v2796
      %v4279 = vpop.f32.mrb[0].mxu0
      %v4280 = vadd.f32 %v3061, %v4279
      %v4281 = vpop.f32.mrb[0].mxu0
      %v4282 = vadd.f32 %v3065, %v4281
      %v4283 = vpop.f32.mrb[0].mxu0
      %v4284 = vpop.f32.mrb[0].mxu0
      %4285 = vdwg.mxu0
      %4286 = vmatprep.subr.bf16.mxu0 %v3910
      %4287 = vmatpush1.bf16.msra.mxu0 %v3909
      %4288 = vmatprep.subr.bf16.mxu0 %v3917
      %4289 = vmatpush1.bf16.msra.mxu0 %v3916
      %4290 = vmatprep.subr.bf16.mxu0 %v3924
      %4291 = vmatpush1.bf16.msra.mxu0 %v3923
      %4292 = vmatprep.subr.bf16.mxu0 %v3931
      %4293 = vmatpush1.bf16.msra.mxu0 %v3930
      %4294 = vmatprep.subr.bf16.mxu0 %v3938
      %4295 = vmatpush1.bf16.msra.mxu0 %v3937
      %4296 = vmatprep.subr.bf16.mxu0 %v3945
      %4297 = vmatpush1.bf16.msra.mxu0 %v3944
      %4298 = vmatprep.subr.bf16.mxu0 %v3952
      %4299 = vmatpush1.bf16.msra.mxu0 %v3951
      %4300 = vmatprep.subr.bf16.mxu0 %v3959
      %4301 = vmatpush1.bf16.msra.mxu0 %v3958
      %4302 = vmatprep.subr.bf16.mxu0 %v3966
      %4303 = vmatpush1.bf16.msra.mxu0 %v3965
      %4304 = vmatprep.subr.bf16.mxu0 %v3973
      %4305 = vmatpush1.bf16.msra.mxu0 %v3972
      %4306 = vmatprep.subr.bf16.mxu0 %v3980
      %4307 = vmatpush1.bf16.msra.mxu0 %v3979
      %4308 = vmatprep.subr.bf16.mxu0 %v3987
      %4309 = vmatpush1.bf16.msra.mxu0 %v3986
      %4310 = vmatprep.subr.bf16.mxu0 %v3994
      %4311 = vmatpush1.bf16.msra.mxu0 %v3993
      %4312 = vmatprep.subr.bf16.mxu0 %v4001
      %4313 = vmatpush1.bf16.msra.mxu0 %v4000
      %4314 = vmatprep.subr.bf16.mxu0 %v4008
      %4315 = vmatpush1.bf16.msra.mxu0 %v4007
      %4316 = vmatprep.subr.bf16.mxu0 %v4015
      %4317 = vmatpush1.bf16.msra.mxu0 %v4014
      %4318 = vmatprep.mubr.bf16.mxu0 %v2799
      %4319 = vmatmul.mubr.bf16.gmra.mrb[0].mxu0 %v2798
      %v4320 = vpop.f32.mrb[0].mxu0
      %v4321 = vadd.f32 %v4280, %v4320
      %v4322 = vpop.f32.mrb[0].mxu0
      %v4323 = vadd.f32 %v4282, %v4322
      %v4324 = vpop.f32.mrb[0].mxu0
      %v4325 = vpop.f32.mrb[0].mxu0
      %4326 = vdwg.mxu0
      %4327 = vmatprep.subr.bf16.mxu0 %v3800
      %4328 = vmatpush1.bf16.msra.mxu0 %v3799
      %4329 = vmatprep.subr.bf16.mxu0 %v3807
      %4330 = vmatpush1.bf16.msra.mxu0 %v3806
      %4331 = vmatprep.subr.bf16.mxu0 %v3814
      %4332 = vmatpush1.bf16.msra.mxu0 %v3813
      %4333 = vmatprep.subr.bf16.mxu0 %v3821
      %4334 = vmatpush1.bf16.msra.mxu0 %v3820
      %4335 = vmatprep.subr.bf16.mxu0 %v3828
      %4336 = vmatpush1.bf16.msra.mxu0 %v3827
      %4337 = vmatprep.subr.bf16.mxu0 %v3835
      %4338 = vmatpush1.bf16.msra.mxu0 %v3834
      %4339 = vmatprep.subr.bf16.mxu0 %v3842
      %4340 = vmatpush1.bf16.msra.mxu0 %v3841
      %4341 = vmatprep.subr.bf16.mxu0 %v3849
      %4342 = vmatpush1.bf16.msra.mxu0 %v3848
      %4343 = vmatprep.subr.bf16.mxu0 %v3856
      %4344 = vmatpush1.bf16.msra.mxu0 %v3855
      %4345 = vmatprep.subr.bf16.mxu0 %v3863
      %4346 = vmatpush1.bf16.msra.mxu0 %v3862
      %4347 = vmatprep.subr.bf16.mxu0 %v3870
      %4348 = vmatpush1.bf16.msra.mxu0 %v3869
      %4349 = vmatprep.subr.bf16.mxu0 %v3877
      %4350 = vmatpush1.bf16.msra.mxu0 %v3876
      %4351 = vmatprep.subr.bf16.mxu0 %v3884
      %4352 = vmatpush1.bf16.msra.mxu0 %v3883
      %4353 = vmatprep.subr.bf16.mxu0 %v3891
      %4354 = vmatpush1.bf16.msra.mxu0 %v3890
      %4355 = vmatprep.subr.bf16.mxu0 %v3898
      %4356 = vmatpush1.bf16.msra.mxu0 %v3897
      %4357 = vmatprep.subr.bf16.mxu0 %v3905
      %4358 = vmatpush1.bf16.msra.mxu0 %v3904
      %4359 = vmatprep.mubr.bf16.mxu0 %v2797
      %4360 = vmatmul.mubr.bf16.gmra.mrb[0].mxu0 %v2796
      %v4361 = vpop.f32.mrb[0].mxu0
      %v4362 = vadd.f32 %v3069, %v4361
      %v4363 = vpop.f32.mrb[0].mxu0
      %v4364 = vadd.f32 %v3073, %v4363
      %v4365 = vpop.f32.mrb[0].mxu0
      %v4366 = vpop.f32.mrb[0].mxu0
      %4367 = vdwg.mxu0
      %4368 = vmatprep.subr.bf16.mxu0 %v3912
      %4369 = vmatpush1.bf16.msra.mxu0 %v3911
      %4370 = vmatprep.subr.bf16.mxu0 %v3919
      %4371 = vmatpush1.bf16.msra.mxu0 %v3918
      %4372 = vmatprep.subr.bf16.mxu0 %v3926
      %4373 = vmatpush1.bf16.msra.mxu0 %v3925
      %4374 = vmatprep.subr.bf16.mxu0 %v3933
      %4375 = vmatpush1.bf16.msra.mxu0 %v3932
      %4376 = vmatprep.subr.bf16.mxu0 %v3940
      %4377 = vmatpush1.bf16.msra.mxu0 %v3939
      %4378 = vmatprep.subr.bf16.mxu0 %v3947
      %4379 = vmatpush1.bf16.msra.mxu0 %v3946
      %4380 = vmatprep.subr.bf16.mxu0 %v3954
      %4381 = vmatpush1.bf16.msra.mxu0 %v3953
      %4382 = vmatprep.subr.bf16.mxu0 %v3961
      %4383 = vmatpush1.bf16.msra.mxu0 %v3960
      %4384 = vmatprep.subr.bf16.mxu0 %v3968
      %4385 = vmatpush1.bf16.msra.mxu0 %v3967
      %4386 = vmatprep.subr.bf16.mxu0 %v3975
      %4387 = vmatpush1.bf16.msra.mxu0 %v3974
      %4388 = vmatprep.subr.bf16.mxu0 %v3982
      %4389 = vmatpush1.bf16.msra.mxu0 %v3981
      %4390 = vmatprep.subr.bf16.mxu0 %v3989
      %4391 = vmatpush1.bf16.msra.mxu0 %v3988
      %4392 = vmatprep.subr.bf16.mxu0 %v3996
      %4393 = vmatpush1.bf16.msra.mxu0 %v3995
      %4394 = vmatprep.subr.bf16.mxu0 %v4003
      %4395 = vmatpush1.bf16.msra.mxu0 %v4002
      %4396 = vmatprep.subr.bf16.mxu0 %v4010
      %4397 = vmatpush1.bf16.msra.mxu0 %v4009
      %4398 = vmatprep.subr.bf16.mxu0 %v4017
      %4399 = vmatpush1.bf16.msra.mxu0 %v4016
      %4400 = vmatprep.mubr.bf16.mxu0 %v2799
      %4401 = vmatmul.mubr.bf16.gmra.mrb[0].mxu0 %v2798
      %v4402 = vpop.f32.mrb[0].mxu0
      %v4403 = vadd.f32 %v4362, %v4402
      %v4404 = vpop.f32.mrb[0].mxu0
      %v4405 = vadd.f32 %v4364, %v4404
      %v4406 = vpop.f32.mrb[0].mxu0
      %v4407 = vpop.f32.mrb[0].mxu0
      %4408 = vdwg.mxu0
      %4409 = vmatprep.subr.bf16.mxu0 %v3802
      %4410 = vmatpush1.bf16.msra.mxu0 %v3801
      %4411 = vmatprep.subr.bf16.mxu0 %v3809
      %4412 = vmatpush1.bf16.msra.mxu0 %v3808
      %4413 = vmatprep.subr.bf16.mxu0 %v3816
      %4414 = vmatpush1.bf16.msra.mxu0 %v3815
      %4415 = vmatprep.subr.bf16.mxu0 %v3823
      %4416 = vmatpush1.bf16.msra.mxu0 %v3822
      %4417 = vmatprep.subr.bf16.mxu0 %v3830
      %4418 = vmatpush1.bf16.msra.mxu0 %v3829
      %4419 = vmatprep.subr.bf16.mxu0 %v3837
      %4420 = vmatpush1.bf16.msra.mxu0 %v3836
      %4421 = vmatprep.subr.bf16.mxu0 %v3844
      %4422 = vmatpush1.bf16.msra.mxu0 %v3843
      %4423 = vmatprep.subr.bf16.mxu0 %v3851
      %4424 = vmatpush1.bf16.msra.mxu0 %v3850
      %4425 = vmatprep.subr.bf16.mxu0 %v3858
      %4426 = vmatpush1.bf16.msra.mxu0 %v3857
      %4427 = vmatprep.subr.bf16.mxu0 %v3865
      %4428 = vmatpush1.bf16.msra.mxu0 %v3864
      %4429 = vmatprep.subr.bf16.mxu0 %v3872
      %4430 = vmatpush1.bf16.msra.mxu0 %v3871
      %4431 = vmatprep.subr.bf16.mxu0 %v3879
      %4432 = vmatpush1.bf16.msra.mxu0 %v3878
      %4433 = vmatprep.subr.bf16.mxu0 %v3886
      %4434 = vmatpush1.bf16.msra.mxu0 %v3885
      %4435 = vmatprep.subr.bf16.mxu0 %v3893
      %4436 = vmatpush1.bf16.msra.mxu0 %v3892
      %4437 = vmatprep.subr.bf16.mxu0 %v3900
      %4438 = vmatpush1.bf16.msra.mxu0 %v3899
      %4439 = vmatprep.subr.bf16.mxu0 %v3907
      %4440 = vmatpush1.bf16.msra.mxu0 %v3906
      %4441 = vmatprep.mubr.bf16.mxu0 %v2797
      %4442 = vmatmul.mubr.bf16.gmra.mrb[0].mxu0 %v2796
      %v4443 = vpop.f32.mrb[0].mxu0
      %v4444 = vadd.f32 %v3077, %v4443
      %v4445 = vpop.f32.mrb[0].mxu0
      %v4446 = vadd.f32 %v3081, %v4445
      %v4447 = vpop.f32.mrb[0].mxu0
      %v4448 = vpop.f32.mrb[0].mxu0
      %4449 = vdwg.mxu0
      %4450 = vmatprep.subr.bf16.mxu0 %v3914
      %4451 = vmatpush1.bf16.msra.mxu0 %v3913
      %4452 = vmatprep.subr.bf16.mxu0 %v3921
      %4453 = vmatpush1.bf16.msra.mxu0 %v3920
      %4454 = vmatprep.subr.bf16.mxu0 %v3928
      %4455 = vmatpush1.bf16.msra.mxu0 %v3927
      %4456 = vmatprep.subr.bf16.mxu0 %v3935
      %4457 = vmatpush1.bf16.msra.mxu0 %v3934
      %4458 = vmatprep.subr.bf16.mxu0 %v3942
      %4459 = vmatpush1.bf16.msra.mxu0 %v3941
      %4460 = vmatprep.subr.bf16.mxu0 %v3949
      %4461 = vmatpush1.bf16.msra.mxu0 %v3948
      %4462 = vmatprep.subr.bf16.mxu0 %v3956
      %4463 = vmatpush1.bf16.msra.mxu0 %v3955
      %4464 = vmatprep.subr.bf16.mxu0 %v3963
      %4465 = vmatpush1.bf16.msra.mxu0 %v3962
      %4466 = vmatprep.subr.bf16.mxu0 %v3970
      %4467 = vmatpush1.bf16.msra.mxu0 %v3969
      %4468 = vmatprep.subr.bf16.mxu0 %v3977
      %4469 = vmatpush1.bf16.msra.mxu0 %v3976
      %4470 = vmatprep.subr.bf16.mxu0 %v3984
      %4471 = vmatpush1.bf16.msra.mxu0 %v3983
      %4472 = vmatprep.subr.bf16.mxu0 %v3991
      %4473 = vmatpush1.bf16.msra.mxu0 %v3990
      %4474 = vmatprep.subr.bf16.mxu0 %v3998
      %4475 = vmatpush1.bf16.msra.mxu0 %v3997
      %4476 = vmatprep.subr.bf16.mxu0 %v4005
      %4477 = vmatpush1.bf16.msra.mxu0 %v4004
      %4478 = vmatprep.subr.bf16.mxu0 %v4012
      %4479 = vmatpush1.bf16.msra.mxu0 %v4011
      %4480 = vmatprep.subr.bf16.mxu0 %v4019
      %4481 = vmatpush1.bf16.msra.mxu0 %v4018
      %4482 = vmatprep.mubr.bf16.mxu0 %v2799
      %4483 = vmatmul.mubr.bf16.gmra.mrb[0].mxu0 %v2798
      %v4484 = vpop.f32.mrb[0].mxu0
      %v4485 = vadd.f32 %v4444, %v4484
      %v4486 = vpop.f32.mrb[0].mxu0
      %v4487 = vadd.f32 %v4446, %v4486
      %v4488 = vpop.f32.mrb[0].mxu0
      %v4489 = vpop.f32.mrb[0].mxu0
      %4490 = vdwg.mxu0
      %4491 = vmatprep.subr.bf16.mxu0 0
      %4492 = vmatpush1.bf16.msra.mxu0 %v3803
      %4493 = vmatprep.subr.bf16.mxu0 0
      %4494 = vmatpush1.bf16.msra.mxu0 %v3810
      %4495 = vmatprep.subr.bf16.mxu0 0
      %4496 = vmatpush1.bf16.msra.mxu0 %v3817
      %4497 = vmatprep.subr.bf16.mxu0 0
      %4498 = vmatpush1.bf16.msra.mxu0 %v3824
      %4499 = vmatprep.subr.bf16.mxu0 0
      %4500 = vmatpush1.bf16.msra.mxu0 %v3831
      %4501 = vmatprep.subr.bf16.mxu0 0
      %4502 = vmatpush1.bf16.msra.mxu0 %v3838
      %4503 = vmatprep.subr.bf16.mxu0 0
      %4504 = vmatpush1.bf16.msra.mxu0 %v3845
      %4505 = vmatprep.subr.bf16.mxu0 0
      %4506 = vmatpush1.bf16.msra.mxu0 %v3852
      %4507 = vmatprep.subr.bf16.mxu0 0
      %4508 = vmatpush1.bf16.msra.mxu0 %v3859
      %4509 = vmatprep.subr.bf16.mxu0 0
      %4510 = vmatpush1.bf16.msra.mxu0 %v3866
      %4511 = vmatprep.subr.bf16.mxu0 0
      %4512 = vmatpush1.bf16.msra.mxu0 %v3873
      %4513 = vmatprep.subr.bf16.mxu0 0
      %4514 = vmatpush1.bf16.msra.mxu0 %v3880
      %4515 = vmatprep.subr.bf16.mxu0 0
      %4516 = vmatpush1.bf16.msra.mxu0 %v3887
      %4517 = vmatprep.subr.bf16.mxu0 0
      %4518 = vmatpush1.bf16.msra.mxu0 %v3894
      %4519 = vmatprep.subr.bf16.mxu0 0
      %4520 = vmatpush1.bf16.msra.mxu0 %v3901
      %4521 = vmatprep.subr.bf16.mxu0 0
      %4522 = vmatpush1.bf16.msra.mxu0 %v3908
      %4523 = vmatprep.mubr.bf16.mxu0 %v2797
      %4524 = vmatmul.mubr.bf16.gmra.mrb[0].mxu0 %v2796
      %v4525 = vpop.f32.mrb[0].mxu0
      %v4526 = vadd.f32 %v3085, %v4525
      %v4527 = vpop.f32.mrb[0].mxu0
      %v4528 = vpop.f32.mrb[0].mxu0
      %v4529 = vpop.f32.mrb[0].mxu0
      %4530 = vdwg.mxu0
      %4531 = vmatprep.subr.bf16.mxu0 0
      %4532 = vmatpush1.bf16.msra.mxu0 %v3915
      %4533 = vmatprep.subr.bf16.mxu0 0
      %4534 = vmatpush1.bf16.msra.mxu0 %v3922
      %4535 = vmatprep.subr.bf16.mxu0 0
      %4536 = vmatpush1.bf16.msra.mxu0 %v3929
      %4537 = vmatprep.subr.bf16.mxu0 0
      %4538 = vmatpush1.bf16.msra.mxu0 %v3936
      %4539 = vmatprep.subr.bf16.mxu0 0
      %4540 = vmatpush1.bf16.msra.mxu0 %v3943
      %4541 = vmatprep.subr.bf16.mxu0 0
      %4542 = vmatpush1.bf16.msra.mxu0 %v3950
      %4543 = vmatprep.subr.bf16.mxu0 0
      %4544 = vmatpush1.bf16.msra.mxu0 %v3957
      %4545 = vmatprep.subr.bf16.mxu0 0
      %4546 = vmatpush1.bf16.msra.mxu0 %v3964
      %4547 = vmatprep.subr.bf16.mxu0 0
      %4548 = vmatpush1.bf16.msra.mxu0 %v3971
      %4549 = vmatprep.subr.bf16.mxu0 0
      %4550 = vmatpush1.bf16.msra.mxu0 %v3978
      %4551 = vmatprep.subr.bf16.mxu0 0
      %4552 = vmatpush1.bf16.msra.mxu0 %v3985
      %4553 = vmatprep.subr.bf16.mxu0 0
      %4554 = vmatpush1.bf16.msra.mxu0 %v3992
      %4555 = vmatprep.subr.bf16.mxu0 0
      %4556 = vmatpush1.bf16.msra.mxu0 %v3999
      %4557 = vmatprep.subr.bf16.mxu0 0
      %4558 = vmatpush1.bf16.msra.mxu0 %v4006
      %4559 = vmatprep.subr.bf16.mxu0 0
      %4560 = vmatpush1.bf16.msra.mxu0 %v4013
      %4561 = vmatprep.subr.bf16.mxu0 0
      %4562 = vmatpush1.bf16.msra.mxu0 %v4020
      %4563 = vmatprep.mubr.bf16.mxu0 %v2799
      %4564 = vmatmul.mubr.bf16.gmra.mrb[0].mxu0 %v2798
      %v4565 = vpop.f32.mrb[0].mxu0
      %v4566 = vadd.f32 %v4526, %v4565
      %v4567 = vpop.f32.mrb[0].mxu0
      %v4568 = vpop.f32.mrb[0].mxu0
      %v4569 = vpop.f32.mrb[0].mxu0
      %4570 = vdwg.mxu0
      %v4571 = vmul.f32 %v4321, 0.5
      %v4572 = vmul.f32 %v4323, 0.5
      %v4573 = vmul.f32 %v4403, 0.5
      %v4574 = vmul.f32 %v4405, 0.5
      %v4575 = vmul.f32 %v4485, 0.5
      %v4576 = vmul.f32 %v4487, 0.5
      %v4577 = vmul.f32 %v4566, 0.5
      %v4578 = vtanh.pop %v4571
      %v4579 = vtanh.pop %v4572
      %v4580 = vtanh.pop %v4573
      %v4581 = vtanh.pop %v4574
      %v4582 = vtanh.pop %v4575
      %v4583 = vtanh.pop %v4576
      %v4584 = vtanh.pop %v4577
      %v4585 = vmul.f32 %v4578, 0.5
      %v4586 = vmul.f32 %v4579, 0.5
      %v4587 = vmul.f32 %v4580, 0.5
      %v4588 = vmul.f32 %v4581, 0.5
      %v4589 = vmul.f32 %v4582, 0.5
      %v4590 = vmul.f32 %v4583, 0.5
      %v4591 = vmul.f32 %v4584, 0.5
      %v4592 = vadd.f32 %v4585, 0.5
      %v4593 = vadd.f32 %v4586, 0.5
      %v4594 = vadd.f32 %v4587, 0.5
      %v4595 = vadd.f32 %v4588, 0.5
      %v4596 = vadd.f32 %v4589, 0.5
      %v4597 = vadd.f32 %v4590, 0.5
      %v4598 = vadd.f32 %v4591, 0.5
      %v4599 = vpack.c.bf16 %v4592, %v4592
      %v4600 = vpack.c.bf16 %v4593, %v4593
      %v4601 = vpack.c.bf16 %v4594, %v4594
      %v4602 = vpack.c.bf16 %v4595, %v4595
      %v4603 = vpack.c.bf16 %v4596, %v4596
      %v4604 = vpack.c.bf16 %v4597, %v4597
      %v4605 = vpack.c.bf16 %v4598, %v4598
      %v4613 = vunpack.c.l.b16 %v4599
      %v4614 = vunpack.c.l.b16 %v4600
      %v4615 = vunpack.c.l.b16 %v4601
      %v4616 = vunpack.c.l.b16 %v4602
      %v4617 = vunpack.c.l.b16 %v4603
      %v4618 = vunpack.c.l.b16 %v4604
      %v4619 = vunpack.c.l.b16 %v4605
      %v4620 = vpack.c.b16 %v4614, %v4613
      %v4621 = vpack.c.b16 %v4616, %v4615
      %v4622 = vpack.c.b16 %v4618, %v4617
      %v4623 = vpack.c.b16 %v4619, %v4619
      %4628 = vst [vmem:[%s595] sm:$0xff] %v4620
      %4629 = vst [vmem:[%s595 + $0x8] sm:$0xff] %v4621
      %4630 = vst [vmem:[%s595 + $0x10] sm:$0xff] %v4622
      %vm4631 = vcmask 125952
      %4632 = vst.msk [vmem:[%s595 + $0x18] sm:$0xf] %vm4631, %v4623
      %4633 = vst.msk [vmem:[%s599] sm:$0xff] %vm1345, %v2367
      %4635 = vrot.lane.b32.xlu0 %v2367, 112
      %v4636 = vpop.permute.xlu0 %4635
      %4638 = vst.msk [vmem:[%s603] sm:$0xff] %vm1345, %v4636
      %p4639 = scmp.lt.s32.totalorder %s29, 1
      %s4640 = scalar_select %p4639, %s29, 1
      %s4641 = smul.addr %s4640, 7
      %s4642 = smul.addr %s4641, 4
      %s4643 = scalar_lea.vmem %s15, %s4642
      %p4644 = scmp.lt.s32.totalorder %s29, 1
      %s4645 = scalar_select %p4644, %s29, 1
      %s4646 = smul.addr %s4645, 8
      %s4647 = scalar_lea.vmem %s16, %s4646
      %p4648 = scmp.lt.s32.totalorder %s29, 1
      %s4649 = scalar_select %p4648, %s29, 1
      %s4650 = smul.addr %s4649, 8
      %s4651 = scalar_lea.vmem %s17, %s4650
      // Predicated region
      $region81: #{cvae_forward.1} parent=79 // pred_check
        %p4652 = pneg %p377
      $region82: #{cvae_forward.1} parent=79 // pred_check_branch
        %4654 = sbr.rel (%p4652) target = $region84
      $region83: #{cvae_forward.1} parent=79 // pred_region
        _
      $region84: #{cvae_forward.1} parent=79 // pred_fallthru
        _
      // Predicated region
      $region85: #{cvae_forward.1} parent=79 // pred_check
        %p4655 = pneg %p403
      $region86: #{cvae_forward.1} parent=79 // pred_check_branch
        %4657 = sbr.rel (%p4655) target = $region88
      $region87: #{cvae_forward.1} parent=79 // pred_region
        _
      $region88: #{cvae_forward.1} parent=79 // pred_fallthru
        _
      // Predicated region
      $region89: #{cvae_forward.1} parent=79 // pred_check
        %p4658 = pneg %p429
      $region90: #{cvae_forward.1} parent=79 // pred_check_branch
        %4660 = sbr.rel (%p4658) target = $region92
      $region91: #{cvae_forward.1} parent=79 // pred_region
        _
      $region92: #{cvae_forward.1} parent=79 // pred_fallthru
        _
    $region80: #{cvae_forward.1} parent=5 // pred_fallthru
      _
    %p4661 = scmp.le.s32.totalorder 2, %s24
    // Predicated region
    $region93: #{cvae_forward.1} parent=5 // pred_check
      %p4662 = pneg %p4661
    $region94: #{cvae_forward.1} parent=5 // pred_check_branch
      %4664 = sbr.rel (%p4662) target = $region96
    $region95: #{cvae_forward.1} parent=5 // pred_region
      %s4665 = ssub.s32 %s24, 2
      // Predicated region
      $region97: #{cvae_forward.1} parent=95 // pred_check
        %p4666 = pneg %p383
      $region98: #{cvae_forward.1} parent=95 // pred_check_branch
        %4668 = sbr.rel (%p4666) target = $region100
      $region99: #{cvae_forward.1} parent=95 // pred_region
        %p4669 = scmp.lt.s32.totalorder %s30, 1
        %s4670 = scalar_select %p4669, %s30, 1
        %s4671 = smul.addr %s4670, 7
        %s4672 = smul.addr %s4671, 4
        %s4673 = scalar_lea.vmem %s15, %s4672
      $region100: #{cvae_forward.1} parent=95 // pred_fallthru
        _
      // Predicated region
      $region101: #{cvae_forward.1} parent=95 // pred_check
        %p4674 = pneg %p409
      $region102: #{cvae_forward.1} parent=95 // pred_check_branch
        %4676 = sbr.rel (%p4674) target = $region104
      $region103: #{cvae_forward.1} parent=95 // pred_region
        %p4677 = scmp.lt.s32.totalorder %s30, 1
        %s4678 = scalar_select %p4677, %s30, 1
        %s4679 = smul.addr %s4678, 8
        %s4680 = scalar_lea.vmem %s16, %s4679
      $region104: #{cvae_forward.1} parent=95 // pred_fallthru
        _
      // Predicated region
      $region105: #{cvae_forward.1} parent=95 // pred_check
        %p4681 = pneg %p435
      $region106: #{cvae_forward.1} parent=95 // pred_check_branch
        %4683 = sbr.rel (%p4681) target = $region108
      $region107: #{cvae_forward.1} parent=95 // pred_region
        %p4684 = scmp.lt.s32.totalorder %s30, 1
        %s4685 = scalar_select %p4684, %s30, 1
        %s4686 = smul.addr %s4685, 8
        %s4687 = scalar_lea.vmem %s17, %s4686
      $region108: #{cvae_forward.1} parent=95 // pred_fallthru
        _
    $region96: #{cvae_forward.1} parent=5 // pred_fallthru
      _
  $region6: #{cvae_forward.1} parent=0 // loop_footer
    %s28 = sadd.s32 1, %s24
  $region7: #{cvae_forward.1} parent=0 // loop_footer_branch
    %23 = sbr.rel target = $region3
  $region8: #{cvae_forward.1} parent=0 // loop_exit
    _

</llo_original>
